<compile_context>
chip_gen: v7x
topology: tpu7x:2x2x1
jax: 0.10.0
libtpu: 0.0.40
codegen_flags: <defaults>
</compile_context>

<pallas_src>
import numpy as np
import jax
import jax.numpy as jnp
from jax.experimental import pallas as pl
from jax.experimental.pallas import tpu as pltpu

# ------------------------- LeNet-5 static dimensions ----------------------- #
K = 5                      # conv kernel size
H0 = 28                    # input spatial size
W_PAD = 32                 # input width zero-padded to a sublane-aligned 32
C1, C2 = 6, 16             # conv output channels
C1P = 8                    # conv1 channels padded to a sublane multiple of 8
H1 = H0 - K + 1            # 24: conv1 output size
P1 = H1 // 2               # 12: pool1 output size
H2 = P1 - K + 1            # 8 : conv2 output size
P2 = H2 // 2               # 4 : pool2 output size
FC_IN = C2 * P2 * P2       # 256
FC1, FC2, FC3 = 120, 84, 10
OUT_ROWS = 16              # logits rows padded 10 -> 16 (sublane aligned)
TILE_B = 128               # images per grid step (batch lives in the lane dim)
                           # NOTE(v7x): batches >= 256 give >= 2 grid steps so
                           # "parallel" can spread tiles across both TensorCores.

R1 = P1 * C1P              # 96  rows of the fused conv1+pool1 matmul output
K1 = (K + 1) * W_PAD       # 192 contraction depth (6 input rows x 32 cols)
R2 = P2 * C2               # 64  rows of the fused conv2+pool2 matmul output
K2 = (K + 1) * P1 * C1P    # 576 contraction depth (6 act1 rows x 96)


# ------------------------------ fused kernel ------------------------------- #
def lenet_kernel(x_ref, w1_ref, b1_ref, w2_ref, b2_ref, wc_ref, bc_ref,
                 out_ref, a1_ref):
    """Fused LeNet-5 forward for one batch tile (batch in lanes).

    x_ref  : (28, 32, B)  bf16  input images (width zero-padded 28->32)
    w1_ref : (96, 192)    bf16  conv1 weights with 2x2 avg-pool (and /4) folded in
    b1_ref : (96, 1)      f32   conv1 bias tiled over the 12 pooled columns
    w2_ref : (64, 576)    bf16  conv2 weights with 2x2 avg-pool (and /4) folded in
    b2_ref : (256, 1)     f32   conv2 bias tiled over the 16 pooled positions
    wc_ref : (16, 256)    bf16  fc3 @ fc2 @ fc1 collapsed weights (rows padded)
    bc_ref : (16, 1)      f32   collapsed fc bias (rows padded)
    out_ref: (16, B)      f32   logits; rows 10..15 are padding
    a1_ref : (12, 96, B)  bf16  VMEM scratch holding the pool1/sigmoid output
    """
    b = x_ref.shape[-1]
    w1 = w1_ref[...]
    b1 = b1_ref[...]

    # conv1 + avg-pool1 + sigmoid: one (96,192) x (192,B) MXU matmul per pooled row.
    for ph in range(P1):
        x6 = x_ref[2 * ph:2 * ph + K + 1].reshape((K + 1) * W_PAD, b)     # (192, B)
        r = jnp.dot(w1, x6, preferred_element_type=jnp.float32)           # (96, B)
        a1_ref[ph] = jax.nn.sigmoid(r + b1).astype(jnp.bfloat16)

    # conv2 + avg-pool2 + sigmoid: one (64,576) x (576,B) MXU matmul per pooled row.
    w2 = w2_ref[...]
    parts = []
    for ph2 in range(P2):
        a6 = a1_ref[2 * ph2:2 * ph2 + K + 1].reshape((K + 1) * P1 * C1P, b)  # (576, B)
        parts.append(jnp.dot(w2, a6, preferred_element_type=jnp.float32))    # (64, B)
    act2 = jax.nn.sigmoid(jnp.concatenate(parts, axis=0) + b2_ref[...])      # (256, B)

    # fc1 -> fc2 -> fc3 collapsed into one (16,256) x (256,B) matmul + fused bias.
    logits = jnp.dot(wc_ref[...], act2.astype(jnp.bfloat16),
                     preferred_element_type=jnp.float32) + bc_ref[...]       # (16, B)
    out_ref[...] = logits


# --------------------------- operand preparation --------------------------- #
def _box2(w):
    """Fold a 2x2/0.25 average pool into a KxK conv kernel -> (K+1)x(K+1)."""
    out = jnp.zeros(w.shape[:-2] + (K + 1, K + 1), jnp.float32)
    for dh in range(2):
        for dw in range(2):
            out = out.at[..., dh:dh + K, dw:dw + K].add(w)
    return 0.25 * out


def _band_select(n_out, n_in):
    """sel[q, w, t] = 1 iff w == 2*q + t  (t in 0..K) -- stride-2 band placement."""
    sel = np.zeros((n_out, n_in, K + 1), np.float32)
    for q in range(n_out):
        for t in range(K + 1):
            sel[q, 2 * q + t, t] = 1.0
    return jnp.asarray(sel)


def _flatten_perm():
    # kernel flatten index (ph*4 + pw)*16 + c  <->  torch flatten index c*16 + ph*4 + pw
    perm = np.zeros(FC_IN, np.int32)
    for c in range(C2):
        for ph in range(P2):
            for pw in range(P2):
                perm[(ph * P2 + pw) * C2 + c] = c * P2 * P2 + ph * P2 + pw
    return jnp.asarray(perm)


def _prep_operands(params):
    f32, bf16 = jnp.float32, jnp.bfloat16

    # conv1 + pool1 as a banded (96, 192) matrix over 6 input rows x 32 columns.
    w1 = params["conv1_w"].reshape(C1, K, K).astype(f32)
    eff1 = jnp.zeros((C1P, K + 1, K + 1), f32).at[:C1].set(_box2(w1))         # (8, 6, 6)
    w1pp = jnp.einsum("qwt,out->qouw", _band_select(P1, W_PAD), eff1)         # (12, 8, 6, 32)
    w1pp = w1pp.reshape(R1, K1).astype(bf16)                                  # (96, 192)
    b1t = jnp.tile(jnp.zeros((C1P,), f32).at[:C1].set(params["conv1_b"].astype(f32)), P1)
    b1t = b1t.reshape(R1, 1)                                                  # (96, 1)

    # conv2 + pool2 as a banded (64, 576) matrix over 6 act1 rows x (12*8) cols.
    w2 = params["conv2_w"].astype(f32)                                        # (16, 6, 5, 5)
    eff2 = jnp.zeros((C2, C1P, K + 1, K + 1), f32).at[:, :C1].set(_box2(w2))  # (16, 8, 6, 6)
    w2pp = jnp.einsum("qwt,dcut->qduwc", _band_select(P2, P1), eff2)          # (4, 16, 6, 12, 8)
    w2pp = w2pp.reshape(R2, K2).astype(bf16)                                  # (64, 576)
    b2t = jnp.tile(params["conv2_b"].astype(f32), P2 * P2).reshape(FC_IN, 1)  # (256, 1)

    # fc1 -> fc2 -> fc3 collapsed (no nonlinearity between the FC layers).
    wf1 = params["fc1_w"].astype(f32)
    wf2 = params["fc2_w"].astype(f32)
    wf3 = params["fc3_w"].astype(f32)
    wc = wf3 @ (wf2 @ wf1)                                                    # (10, 256)
    bc = wf3 @ (wf2 @ params["fc1_b"].astype(f32) + params["fc2_b"].astype(f32)) \
        + params["fc3_b"].astype(f32)
    wc = wc[:, _flatten_perm()]                                               # kernel flatten order
    wc_pad = jnp.zeros((OUT_ROWS, FC_IN), f32).at[:FC3].set(wc).astype(bf16)  # (16, 256)
    bc_pad = jnp.zeros((OUT_ROWS, 1), f32).at[:FC3, 0].set(bc)                # (16, 1)
    return w1pp, b1t, w2pp, b2t, wc_pad, bc_pad


# --------------------------------- wrapper --------------------------------- #
def _round_up(n, m):
    return ((n + m - 1) // m) * m


@jax.jit
def lenet_forward(x, params):
    n = x.shape[0]
    tile_b = min(TILE_B, _round_up(n, 8))
    n_pad = _round_up(n, tile_b)

    # Batch -> lanes: (N, 1, 28, 28) -> (28, 32, N_pad) bf16 (one HBM-side transpose).
    x2 = x.reshape(n, H0, H0).astype(jnp.float32)
    x2 = jnp.pad(x2, ((0, n_pad - n), (0, 0), (0, W_PAD - H0)))
    x2 = jnp.transpose(x2, (1, 2, 0)).astype(jnp.bfloat16)                    # (28, 32, N_pad)

    ops = _prep_operands(params)

    def resident(a):          # whole array, same block every step -> stays in VMEM
        nd = a.ndim
        return pl.BlockSpec(a.shape, lambda i, _nd=nd: (0,) * _nd)

    flops_per_img = 2 * (P1 * R1 * K1 + P2 * R2 * K2 + OUT_ROWS * FC_IN)
    cost = pl.CostEstimate(
        flops=flops_per_img * n_pad,
        transcendentals=(P1 * R1 + FC_IN) * n_pad,
        bytes_accessed=(2 * n_pad * H0 * W_PAD + 4 * n_pad * OUT_ROWS
                        + sum(int(np.prod(o.shape)) * o.dtype.itemsize for o in ops)),
    )

    out = pl.pallas_call(
        lenet_kernel,
        out_shape=jax.ShapeDtypeStruct((OUT_ROWS, n_pad), jnp.float32),
        grid=(n_pad // tile_b,),
        in_specs=[
            pl.BlockSpec((H0, W_PAD, tile_b), lambda i: (0, 0, i)),           # image tile
            resident(ops[0]), resident(ops[1]),                               # conv1 w / b
            resident(ops[2]), resident(ops[3]),                               # conv2 w / b
            resident(ops[4]), resident(ops[5]),                               # fc w / b
        ],
        out_specs=pl.BlockSpec((OUT_ROWS, tile_b), lambda i: (0, i)),
        scratch_shapes=[pltpu.VMEM((P1, R1, tile_b), jnp.bfloat16)],
        compiler_params=pltpu.CompilerParams(
            dimension_semantics=("parallel",),
            vmem_limit_bytes=32 * 1024 * 1024),
        cost_estimate=cost,
    )(x2, *ops)

    return out[:FC3, :n].T                                                    # (N, 10) f32


# --------------------------- params / reference ---------------------------- #
def init_params(key):
    def uinit(k, shape, fan_in):
        bound = 1.0 / np.sqrt(fan_in)
        return jax.random.uniform(k, shape, jnp.float32, -bound, bound)

    ks = jax.random.split(key, 10)
    return {
        "conv1_w": uinit(ks[0], (6, 1, 5, 5), 25),
        "conv1_b": uinit(ks[1], (6,), 25),
        "conv2_w": uinit(ks[2], (16, 6, 5, 5), 150),
        "conv2_b": uinit(ks[3], (16,), 150),
        "fc1_w": uinit(ks[4], (120, 256), 256),
        "fc1_b": uinit(ks[5], (120,), 256),
        "fc2_w": uinit(ks[6], (84, 120), 120),
        "fc2_b": uinit(ks[7], (84,), 120),
        "fc3_w": uinit(ks[8], (10, 84), 84),
        "fc3_b": uinit(ks[9], (10,), 84),
    }


def ref_forward(x, params):
    def conv_block(h, w, b):
        y = jax.lax.conv_general_dilated(
            h, w, (1, 1), "VALID",
            dimension_numbers=("NCHW", "OIHW", "NCHW")) + b.reshape(1, -1, 1, 1)
        y = jax.lax.reduce_window(y, 0.0, jax.lax.add,
                                  (1, 1, 2, 2), (1, 1, 2, 2), "VALID") / 4.0
        return jax.nn.sigmoid(y)

    h = conv_block(x, params["conv1_w"], params["conv1_b"])
    h = conv_block(h, params["conv2_w"], params["conv2_b"])
    h = h.reshape(h.shape[0], -1)
    h = h @ params["fc1_w"].T + params["fc1_b"]
    h = h @ params["fc2_w"].T + params["fc2_b"]
    return h @ params["fc3_w"].T + params["fc3_b"]


if __name__ == "__main__":
    key = jax.random.PRNGKey(0)
    pkey, xkey = jax.random.split(key)
    params = init_params(pkey)
    # LeNet-5 needs 28x28 single-channel inputs (so the flatten is 16*4*4).
    x = jax.random.normal(xkey, (2, 1, 28, 28), dtype=jnp.float32)

    out = jax.block_until_ready(lenet_forward(x, params))
    assert out.shape == (2, 10) and out.dtype == jnp.float32

    ref = ref_forward(x, params)
    np.testing.assert_allclose(np.asarray(out), np.asarray(ref), rtol=2e-2, atol=2e-2)
    print("KERNEL_OK")
</pallas_src>

<mosaic_0001>
module attributes {stable_mosaic.version = 11 : i64} {
  func.func @lenet_kernel(%arg0: i32, %arg1: memref<28x32x8xbf16, #tpu.memory_space<vmem>>, %arg2: memref<96x192xbf16, #tpu.memory_space<vmem>>, %arg3: memref<96x1xf32, #tpu.memory_space<vmem>>, %arg4: memref<64x576xbf16, #tpu.memory_space<vmem>>, %arg5: memref<256x1xf32, #tpu.memory_space<vmem>>, %arg6: memref<16x256xbf16, #tpu.memory_space<vmem>>, %arg7: memref<16x1xf32, #tpu.memory_space<vmem>>, %arg8: memref<16x8xf32, #tpu.memory_space<vmem>>, %arg9: memref<12x96x8xbf16, #tpu.memory_space<vmem>>) attributes {dimension_semantics = [#tpu.dimension_semantics<parallel>], iteration_bounds = array<i64: 1>, scalar_prefetch = 0 : i64, scratch_operands = 1 : i64, tpu.core_type = #tpu.core_type<tc>, window_params = [{transform_indices = @transform_0, window_bounds = array<i64: 28, 32, 8>}, {pipeline_mode = #tpu.pipeline_mode<synchronous>, transform_indices = @transform_1, window_bounds = array<i64: 96, 192>}, {pipeline_mode = #tpu.pipeline_mode<synchronous>, transform_indices = @transform_2, window_bounds = array<i64: 96, 1>}, {pipeline_mode = #tpu.pipeline_mode<synchronous>, transform_indices = @transform_3, window_bounds = array<i64: 64, 576>}, {pipeline_mode = #tpu.pipeline_mode<synchronous>, transform_indices = @transform_4, window_bounds = array<i64: 256, 1>}, {pipeline_mode = #tpu.pipeline_mode<synchronous>, transform_indices = @transform_5, window_bounds = array<i64: 16, 256>}, {pipeline_mode = #tpu.pipeline_mode<synchronous>, transform_indices = @transform_6, window_bounds = array<i64: 16, 1>}, {transform_indices = @transform_7, window_bounds = array<i64: 16, 8>}]} {
    %c0 = arith.constant 0 : index
    %c0_0 = arith.constant 0 : index
    %0 = vector.load %arg2[%c0, %c0_0] : memref<96x192xbf16, #tpu.memory_space<vmem>>, vector<96x192xbf16>
    %c0_1 = arith.constant 0 : index
    %c0_2 = arith.constant 0 : index
    %1 = vector.load %arg3[%c0_1, %c0_2] : memref<96x1xf32, #tpu.memory_space<vmem>>, vector<96x1xf32>
    %c0_3 = arith.constant 0 : index
    %c0_4 = arith.constant 0 : index
    %c0_5 = arith.constant 0 : index
    %2 = vector.load %arg1[%c0_3, %c0_4, %c0_5] : memref<28x32x8xbf16, #tpu.memory_space<vmem>>, vector<6x32x8xbf16>
    %3 = vector.shape_cast %2 : vector<6x32x8xbf16> to vector<192x8xbf16>
    %cst = arith.constant dense<0.000000e+00> : vector<96x8xf32>
    %4 = tpu.matmul %0, %3, %cst {dimension_numbers = #tpu.dot_dimension_numbers<[1], [0], [0], [1], [0, 0, 1, 1], [], []>} : vector<96x192xbf16>, vector<192x8xbf16>, vector<96x8xf32> -> vector<96x8xf32>
    %5 = vector.broadcast %1 : vector<96x1xf32> to vector<96x8xf32>
    %6 = arith.addf %4, %5 : vector<96x8xf32>
    %7 = arith.negf %6 : vector<96x8xf32>
    %8 = math.exp %7 : vector<96x8xf32>
    %cst_6 = arith.constant 1.000000e+00 : f32
    %9 = vector.broadcast %cst_6 : f32 to vector<96x8xf32>
    %10 = arith.addf %9, %8 : vector<96x8xf32>
    %11 = arith.divf %9, %10 : vector<96x8xf32>
    %12 = arith.truncf %11 : vector<96x8xf32> to vector<96x8xbf16>
    %c0_7 = arith.constant 0 : index
    %c0_8 = arith.constant 0 : index
    %c0_9 = arith.constant 0 : index
    %13 = vector.load %arg9[%c0_7, %c0_8, %c0_9] : memref<12x96x8xbf16, #tpu.memory_space<vmem>>, vector<1x96x8xbf16>
    %14 = vector.shape_cast %13 : vector<1x96x8xbf16> to vector<96x8xbf16>
    %15 = vector.shape_cast %12 : vector<96x8xbf16> to vector<1x96x8xbf16>
    tpu.vector_store %arg9[%c0_7, %c0_8, %c0_9], %15 {strides = array<i32>} : memref<12x96x8xbf16, #tpu.memory_space<vmem>>, vector<1x96x8xbf16>,
    %c2 = arith.constant 2 : index
    %c0_10 = arith.constant 0 : index
    %c0_11 = arith.constant 0 : index
    %16 = vector.load %arg1[%c2, %c0_10, %c0_11] : memref<28x32x8xbf16, #tpu.memory_space<vmem>>, vector<6x32x8xbf16>
    %17 = vector.shape_cast %16 : vector<6x32x8xbf16> to vector<192x8xbf16>
    %cst_12 = arith.constant dense<0.000000e+00> : vector<96x8xf32>
    %18 = tpu.matmul %0, %17, %cst_12 {dimension_numbers = #tpu.dot_dimension_numbers<[1], [0], [0], [1], [0, 0, 1, 1], [], []>} : vector<96x192xbf16>, vector<192x8xbf16>, vector<96x8xf32> -> vector<96x8xf32>
    %19 = vector.broadcast %1 : vector<96x1xf32> to vector<96x8xf32>
    %20 = arith.addf %18, %19 : vector<96x8xf32>
    %21 = arith.negf %20 : vector<96x8xf32>
    %22 = math.exp %21 : vector<96x8xf32>
    %cst_13 = arith.constant 1.000000e+00 : f32
    %23 = vector.broadcast %cst_13 : f32 to vector<96x8xf32>
    %24 = arith.addf %23, %22 : vector<96x8xf32>
    %25 = arith.divf %23, %24 : vector<96x8xf32>
    %26 = arith.truncf %25 : vector<96x8xf32> to vector<96x8xbf16>
    %c1 = arith.constant 1 : index
    %c0_14 = arith.constant 0 : index
    %c0_15 = arith.constant 0 : index
    %27 = vector.load %arg9[%c1, %c0_14, %c0_15] : memref<12x96x8xbf16, #tpu.memory_space<vmem>>, vector<1x96x8xbf16>
    %28 = vector.shape_cast %27 : vector<1x96x8xbf16> to vector<96x8xbf16>
    %29 = vector.shape_cast %26 : vector<96x8xbf16> to vector<1x96x8xbf16>
    tpu.vector_store %arg9[%c1, %c0_14, %c0_15], %29 {strides = array<i32>} : memref<12x96x8xbf16, #tpu.memory_space<vmem>>, vector<1x96x8xbf16>,
    %c4 = arith.constant 4 : index
    %c0_16 = arith.constant 0 : index
    %c0_17 = arith.constant 0 : index
    %30 = vector.load %arg1[%c4, %c0_16, %c0_17] : memref<28x32x8xbf16, #tpu.memory_space<vmem>>, vector<6x32x8xbf16>
    %31 = vector.shape_cast %30 : vector<6x32x8xbf16> to vector<192x8xbf16>
    %cst_18 = arith.constant dense<0.000000e+00> : vector<96x8xf32>
    %32 = tpu.matmul %0, %31, %cst_18 {dimension_numbers = #tpu.dot_dimension_numbers<[1], [0], [0], [1], [0, 0, 1, 1], [], []>} : vector<96x192xbf16>, vector<192x8xbf16>, vector<96x8xf32> -> vector<96x8xf32>
    %33 = vector.broadcast %1 : vector<96x1xf32> to vector<96x8xf32>
    %34 = arith.addf %32, %33 : vector<96x8xf32>
    %35 = arith.negf %34 : vector<96x8xf32>
    %36 = math.exp %35 : vector<96x8xf32>
    %cst_19 = arith.constant 1.000000e+00 : f32
    %37 = vector.broadcast %cst_19 : f32 to vector<96x8xf32>
    %38 = arith.addf %37, %36 : vector<96x8xf32>
    %39 = arith.divf %37, %38 : vector<96x8xf32>
    %40 = arith.truncf %39 : vector<96x8xf32> to vector<96x8xbf16>
    %c2_20 = arith.constant 2 : index
    %c0_21 = arith.constant 0 : index
    %c0_22 = arith.constant 0 : index
    %41 = vector.load %arg9[%c2_20, %c0_21, %c0_22] : memref<12x96x8xbf16, #tpu.memory_space<vmem>>, vector<1x96x8xbf16>
    %42 = vector.shape_cast %41 : vector<1x96x8xbf16> to vector<96x8xbf16>
    %43 = vector.shape_cast %40 : vector<96x8xbf16> to vector<1x96x8xbf16>
    tpu.vector_store %arg9[%c2_20, %c0_21, %c0_22], %43 {strides = array<i32>} : memref<12x96x8xbf16, #tpu.memory_space<vmem>>, vector<1x96x8xbf16>,
    %c6 = arith.constant 6 : index
    %c0_23 = arith.constant 0 : index
    %c0_24 = arith.constant 0 : index
    %44 = vector.load %arg1[%c6, %c0_23, %c0_24] : memref<28x32x8xbf16, #tpu.memory_space<vmem>>, vector<6x32x8xbf16>
    %45 = vector.shape_cast %44 : vector<6x32x8xbf16> to vector<192x8xbf16>
    %cst_25 = arith.constant dense<0.000000e+00> : vector<96x8xf32>
    %46 = tpu.matmul %0, %45, %cst_25 {dimension_numbers = #tpu.dot_dimension_numbers<[1], [0], [0], [1], [0, 0, 1, 1], [], []>} : vector<96x192xbf16>, vector<192x8xbf16>, vector<96x8xf32> -> vector<96x8xf32>
    %47 = vector.broadcast %1 : vector<96x1xf32> to vector<96x8xf32>
    %48 = arith.addf %46, %47 : vector<96x8xf32>
    %49 = arith.negf %48 : vector<96x8xf32>
    %50 = math.exp %49 : vector<96x8xf32>
    %cst_26 = arith.constant 1.000000e+00 : f32
    %51 = vector.broadcast %cst_26 : f32 to vector<96x8xf32>
    %52 = arith.addf %51, %50 : vector<96x8xf32>
    %53 = arith.divf %51, %52 : vector<96x8xf32>
    %54 = arith.truncf %53 : vector<96x8xf32> to vector<96x8xbf16>
    %c3 = arith.constant 3 : index
    %c0_27 = arith.constant 0 : index
    %c0_28 = arith.constant 0 : index
    %55 = vector.load %arg9[%c3, %c0_27, %c0_28] : memref<12x96x8xbf16, #tpu.memory_space<vmem>>, vector<1x96x8xbf16>
    %56 = vector.shape_cast %55 : vector<1x96x8xbf16> to vector<96x8xbf16>
    %57 = vector.shape_cast %54 : vector<96x8xbf16> to vector<1x96x8xbf16>
    tpu.vector_store %arg9[%c3, %c0_27, %c0_28], %57 {strides = array<i32>} : memref<12x96x8xbf16, #tpu.memory_space<vmem>>, vector<1x96x8xbf16>,
    %c8 = arith.constant 8 : index
    %c0_29 = arith.constant 0 : index
    %c0_30 = arith.constant 0 : index
    %58 = vector.load %arg1[%c8, %c0_29, %c0_30] : memref<28x32x8xbf16, #tpu.memory_space<vmem>>, vector<6x32x8xbf16>
    %59 = vector.shape_cast %58 : vector<6x32x8xbf16> to vector<192x8xbf16>
    %cst_31 = arith.constant dense<0.000000e+00> : vector<96x8xf32>
    %60 = tpu.matmul %0, %59, %cst_31 {dimension_numbers = #tpu.dot_dimension_numbers<[1], [0], [0], [1], [0, 0, 1, 1], [], []>} : vector<96x192xbf16>, vector<192x8xbf16>, vector<96x8xf32> -> vector<96x8xf32>
    %61 = vector.broadcast %1 : vector<96x1xf32> to vector<96x8xf32>
    %62 = arith.addf %60, %61 : vector<96x8xf32>
    %63 = arith.negf %62 : vector<96x8xf32>
    %64 = math.exp %63 : vector<96x8xf32>
    %cst_32 = arith.constant 1.000000e+00 : f32
    %65 = vector.broadcast %cst_32 : f32 to vector<96x8xf32>
    %66 = arith.addf %65, %64 : vector<96x8xf32>
    %67 = arith.divf %65, %66 : vector<96x8xf32>
    %68 = arith.truncf %67 : vector<96x8xf32> to vector<96x8xbf16>
    %c4_33 = arith.constant 4 : index
    %c0_34 = arith.constant 0 : index
    %c0_35 = arith.constant 0 : index
    %69 = vector.load %arg9[%c4_33, %c0_34, %c0_35] : memref<12x96x8xbf16, #tpu.memory_space<vmem>>, vector<1x96x8xbf16>
    %70 = vector.shape_cast %69 : vector<1x96x8xbf16> to vector<96x8xbf16>
    %71 = vector.shape_cast %68 : vector<96x8xbf16> to vector<1x96x8xbf16>
    tpu.vector_store %arg9[%c4_33, %c0_34, %c0_35], %71 {strides = array<i32>} : memref<12x96x8xbf16, #tpu.memory_space<vmem>>, vector<1x96x8xbf16>,
    %c10 = arith.constant 10 : index
    %c0_36 = arith.constant 0 : index
    %c0_37 = arith.constant 0 : index
    %72 = vector.load %arg1[%c10, %c0_36, %c0_37] : memref<28x32x8xbf16, #tpu.memory_space<vmem>>, vector<6x32x8xbf16>
    %73 = vector.shape_cast %72 : vector<6x32x8xbf16> to vector<192x8xbf16>
    %cst_38 = arith.constant dense<0.000000e+00> : vector<96x8xf32>
    %74 = tpu.matmul %0, %73, %cst_38 {dimension_numbers = #tpu.dot_dimension_numbers<[1], [0], [0], [1], [0, 0, 1, 1], [], []>} : vector<96x192xbf16>, vector<192x8xbf16>, vector<96x8xf32> -> vector<96x8xf32>
    %75 = vector.broadcast %1 : vector<96x1xf32> to vector<96x8xf32>
    %76 = arith.addf %74, %75 : vector<96x8xf32>
    %77 = arith.negf %76 : vector<96x8xf32>
    %78 = math.exp %77 : vector<96x8xf32>
    %cst_39 = arith.constant 1.000000e+00 : f32
    %79 = vector.broadcast %cst_39 : f32 to vector<96x8xf32>
    %80 = arith.addf %79, %78 : vector<96x8xf32>
    %81 = arith.divf %79, %80 : vector<96x8xf32>
    %82 = arith.truncf %81 : vector<96x8xf32> to vector<96x8xbf16>
    %c5 = arith.constant 5 : index
    %c0_40 = arith.constant 0 : index
    %c0_41 = arith.constant 0 : index
    %83 = vector.load %arg9[%c5, %c0_40, %c0_41] : memref<12x96x8xbf16, #tpu.memory_space<vmem>>, vector<1x96x8xbf16>
    %84 = vector.shape_cast %83 : vector<1x96x8xbf16> to vector<96x8xbf16>
    %85 = vector.shape_cast %82 : vector<96x8xbf16> to vector<1x96x8xbf16>
    tpu.vector_store %arg9[%c5, %c0_40, %c0_41], %85 {strides = array<i32>} : memref<12x96x8xbf16, #tpu.memory_space<vmem>>, vector<1x96x8xbf16>,
    %c12 = arith.constant 12 : index
    %c0_42 = arith.constant 0 : index
    %c0_43 = arith.constant 0 : index
    %86 = vector.load %arg1[%c12, %c0_42, %c0_43] : memref<28x32x8xbf16, #tpu.memory_space<vmem>>, vector<6x32x8xbf16>
    %87 = vector.shape_cast %86 : vector<6x32x8xbf16> to vector<192x8xbf16>
    %cst_44 = arith.constant dense<0.000000e+00> : vector<96x8xf32>
    %88 = tpu.matmul %0, %87, %cst_44 {dimension_numbers = #tpu.dot_dimension_numbers<[1], [0], [0], [1], [0, 0, 1, 1], [], []>} : vector<96x192xbf16>, vector<192x8xbf16>, vector<96x8xf32> -> vector<96x8xf32>
    %89 = vector.broadcast %1 : vector<96x1xf32> to vector<96x8xf32>
    %90 = arith.addf %88, %89 : vector<96x8xf32>
    %91 = arith.negf %90 : vector<96x8xf32>
    %92 = math.exp %91 : vector<96x8xf32>
    %cst_45 = arith.constant 1.000000e+00 : f32
    %93 = vector.broadcast %cst_45 : f32 to vector<96x8xf32>
    %94 = arith.addf %93, %92 : vector<96x8xf32>
    %95 = arith.divf %93, %94 : vector<96x8xf32>
    %96 = arith.truncf %95 : vector<96x8xf32> to vector<96x8xbf16>
    %c6_46 = arith.constant 6 : index
    %c0_47 = arith.constant 0 : index
    %c0_48 = arith.constant 0 : index
    %97 = vector.load %arg9[%c6_46, %c0_47, %c0_48] : memref<12x96x8xbf16, #tpu.memory_space<vmem>>, vector<1x96x8xbf16>
    %98 = vector.shape_cast %97 : vector<1x96x8xbf16> to vector<96x8xbf16>
    %99 = vector.shape_cast %96 : vector<96x8xbf16> to vector<1x96x8xbf16>
    tpu.vector_store %arg9[%c6_46, %c0_47, %c0_48], %99 {strides = array<i32>} : memref<12x96x8xbf16, #tpu.memory_space<vmem>>, vector<1x96x8xbf16>,
    %c14 = arith.constant 14 : index
    %c0_49 = arith.constant 0 : index
    %c0_50 = arith.constant 0 : index
    %100 = vector.load %arg1[%c14, %c0_49, %c0_50] : memref<28x32x8xbf16, #tpu.memory_space<vmem>>, vector<6x32x8xbf16>
    %101 = vector.shape_cast %100 : vector<6x32x8xbf16> to vector<192x8xbf16>
    %cst_51 = arith.constant dense<0.000000e+00> : vector<96x8xf32>
    %102 = tpu.matmul %0, %101, %cst_51 {dimension_numbers = #tpu.dot_dimension_numbers<[1], [0], [0], [1], [0, 0, 1, 1], [], []>} : vector<96x192xbf16>, vector<192x8xbf16>, vector<96x8xf32> -> vector<96x8xf32>
    %103 = vector.broadcast %1 : vector<96x1xf32> to vector<96x8xf32>
    %104 = arith.addf %102, %103 : vector<96x8xf32>
    %105 = arith.negf %104 : vector<96x8xf32>
    %106 = math.exp %105 : vector<96x8xf32>
    %cst_52 = arith.constant 1.000000e+00 : f32
    %107 = vector.broadcast %cst_52 : f32 to vector<96x8xf32>
    %108 = arith.addf %107, %106 : vector<96x8xf32>
    %109 = arith.divf %107, %108 : vector<96x8xf32>
    %110 = arith.truncf %109 : vector<96x8xf32> to vector<96x8xbf16>
    %c7 = arith.constant 7 : index
    %c0_53 = arith.constant 0 : index
    %c0_54 = arith.constant 0 : index
    %111 = vector.load %arg9[%c7, %c0_53, %c0_54] : memref<12x96x8xbf16, #tpu.memory_space<vmem>>, vector<1x96x8xbf16>
    %112 = vector.shape_cast %111 : vector<1x96x8xbf16> to vector<96x8xbf16>
    %113 = vector.shape_cast %110 : vector<96x8xbf16> to vector<1x96x8xbf16>
    tpu.vector_store %arg9[%c7, %c0_53, %c0_54], %113 {strides = array<i32>} : memref<12x96x8xbf16, #tpu.memory_space<vmem>>, vector<1x96x8xbf16>,
    %c16 = arith.constant 16 : index
    %c0_55 = arith.constant 0 : index
    %c0_56 = arith.constant 0 : index
    %114 = vector.load %arg1[%c16, %c0_55, %c0_56] : memref<28x32x8xbf16, #tpu.memory_space<vmem>>, vector<6x32x8xbf16>
    %115 = vector.shape_cast %114 : vector<6x32x8xbf16> to vector<192x8xbf16>
    %cst_57 = arith.constant dense<0.000000e+00> : vector<96x8xf32>
    %116 = tpu.matmul %0, %115, %cst_57 {dimension_numbers = #tpu.dot_dimension_numbers<[1], [0], [0], [1], [0, 0, 1, 1], [], []>} : vector<96x192xbf16>, vector<192x8xbf16>, vector<96x8xf32> -> vector<96x8xf32>
    %117 = vector.broadcast %1 : vector<96x1xf32> to vector<96x8xf32>
    %118 = arith.addf %116, %117 : vector<96x8xf32>
    %119 = arith.negf %118 : vector<96x8xf32>
    %120 = math.exp %119 : vector<96x8xf32>
    %cst_58 = arith.constant 1.000000e+00 : f32
    %121 = vector.broadcast %cst_58 : f32 to vector<96x8xf32>
    %122 = arith.addf %121, %120 : vector<96x8xf32>
    %123 = arith.divf %121, %122 : vector<96x8xf32>
    %124 = arith.truncf %123 : vector<96x8xf32> to vector<96x8xbf16>
    %c8_59 = arith.constant 8 : index
    %c0_60 = arith.constant 0 : index
    %c0_61 = arith.constant 0 : index
    %125 = vector.load %arg9[%c8_59, %c0_60, %c0_61] : memref<12x96x8xbf16, #tpu.memory_space<vmem>>, vector<1x96x8xbf16>
    %126 = vector.shape_cast %125 : vector<1x96x8xbf16> to vector<96x8xbf16>
    %127 = vector.shape_cast %124 : vector<96x8xbf16> to vector<1x96x8xbf16>
    tpu.vector_store %arg9[%c8_59, %c0_60, %c0_61], %127 {strides = array<i32>} : memref<12x96x8xbf16, #tpu.memory_space<vmem>>, vector<1x96x8xbf16>,
    %c18 = arith.constant 18 : index
    %c0_62 = arith.constant 0 : index
    %c0_63 = arith.constant 0 : index
    %128 = vector.load %arg1[%c18, %c0_62, %c0_63] : memref<28x32x8xbf16, #tpu.memory_space<vmem>>, vector<6x32x8xbf16>
    %129 = vector.shape_cast %128 : vector<6x32x8xbf16> to vector<192x8xbf16>
    %cst_64 = arith.constant dense<0.000000e+00> : vector<96x8xf32>
    %130 = tpu.matmul %0, %129, %cst_64 {dimension_numbers = #tpu.dot_dimension_numbers<[1], [0], [0], [1], [0, 0, 1, 1], [], []>} : vector<96x192xbf16>, vector<192x8xbf16>, vector<96x8xf32> -> vector<96x8xf32>
    %131 = vector.broadcast %1 : vector<96x1xf32> to vector<96x8xf32>
    %132 = arith.addf %130, %131 : vector<96x8xf32>
    %133 = arith.negf %132 : vector<96x8xf32>
    %134 = math.exp %133 : vector<96x8xf32>
    %cst_65 = arith.constant 1.000000e+00 : f32
    %135 = vector.broadcast %cst_65 : f32 to vector<96x8xf32>
    %136 = arith.addf %135, %134 : vector<96x8xf32>
    %137 = arith.divf %135, %136 : vector<96x8xf32>
    %138 = arith.truncf %137 : vector<96x8xf32> to vector<96x8xbf16>
    %c9 = arith.constant 9 : index
    %c0_66 = arith.constant 0 : index
    %c0_67 = arith.constant 0 : index
    %139 = vector.load %arg9[%c9, %c0_66, %c0_67] : memref<12x96x8xbf16, #tpu.memory_space<vmem>>, vector<1x96x8xbf16>
    %140 = vector.shape_cast %139 : vector<1x96x8xbf16> to vector<96x8xbf16>
    %141 = vector.shape_cast %138 : vector<96x8xbf16> to vector<1x96x8xbf16>
    tpu.vector_store %arg9[%c9, %c0_66, %c0_67], %141 {strides = array<i32>} : memref<12x96x8xbf16, #tpu.memory_space<vmem>>, vector<1x96x8xbf16>,
    %c20 = arith.constant 20 : index
    %c0_68 = arith.constant 0 : index
    %c0_69 = arith.constant 0 : index
    %142 = vector.load %arg1[%c20, %c0_68, %c0_69] : memref<28x32x8xbf16, #tpu.memory_space<vmem>>, vector<6x32x8xbf16>
    %143 = vector.shape_cast %142 : vector<6x32x8xbf16> to vector<192x8xbf16>
    %cst_70 = arith.constant dense<0.000000e+00> : vector<96x8xf32>
    %144 = tpu.matmul %0, %143, %cst_70 {dimension_numbers = #tpu.dot_dimension_numbers<[1], [0], [0], [1], [0, 0, 1, 1], [], []>} : vector<96x192xbf16>, vector<192x8xbf16>, vector<96x8xf32> -> vector<96x8xf32>
    %145 = vector.broadcast %1 : vector<96x1xf32> to vector<96x8xf32>
    %146 = arith.addf %144, %145 : vector<96x8xf32>
    %147 = arith.negf %146 : vector<96x8xf32>
    %148 = math.exp %147 : vector<96x8xf32>
    %cst_71 = arith.constant 1.000000e+00 : f32
    %149 = vector.broadcast %cst_71 : f32 to vector<96x8xf32>
    %150 = arith.addf %149, %148 : vector<96x8xf32>
    %151 = arith.divf %149, %150 : vector<96x8xf32>
    %152 = arith.truncf %151 : vector<96x8xf32> to vector<96x8xbf16>
    %c10_72 = arith.constant 10 : index
    %c0_73 = arith.constant 0 : index
    %c0_74 = arith.constant 0 : index
    %153 = vector.load %arg9[%c10_72, %c0_73, %c0_74] : memref<12x96x8xbf16, #tpu.memory_space<vmem>>, vector<1x96x8xbf16>
    %154 = vector.shape_cast %153 : vector<1x96x8xbf16> to vector<96x8xbf16>
    %155 = vector.shape_cast %152 : vector<96x8xbf16> to vector<1x96x8xbf16>
    tpu.vector_store %arg9[%c10_72, %c0_73, %c0_74], %155 {strides = array<i32>} : memref<12x96x8xbf16, #tpu.memory_space<vmem>>, vector<1x96x8xbf16>,
    %c22 = arith.constant 22 : index
    %c0_75 = arith.constant 0 : index
    %c0_76 = arith.constant 0 : index
    %156 = vector.load %arg1[%c22, %c0_75, %c0_76] : memref<28x32x8xbf16, #tpu.memory_space<vmem>>, vector<6x32x8xbf16>
    %157 = vector.shape_cast %156 : vector<6x32x8xbf16> to vector<192x8xbf16>
    %cst_77 = arith.constant dense<0.000000e+00> : vector<96x8xf32>
    %158 = tpu.matmul %0, %157, %cst_77 {dimension_numbers = #tpu.dot_dimension_numbers<[1], [0], [0], [1], [0, 0, 1, 1], [], []>} : vector<96x192xbf16>, vector<192x8xbf16>, vector<96x8xf32> -> vector<96x8xf32>
    %159 = vector.broadcast %1 : vector<96x1xf32> to vector<96x8xf32>
    %160 = arith.addf %158, %159 : vector<96x8xf32>
    %161 = arith.negf %160 : vector<96x8xf32>
    %162 = math.exp %161 : vector<96x8xf32>
    %cst_78 = arith.constant 1.000000e+00 : f32
    %163 = vector.broadcast %cst_78 : f32 to vector<96x8xf32>
    %164 = arith.addf %163, %162 : vector<96x8xf32>
    %165 = arith.divf %163, %164 : vector<96x8xf32>
    %166 = arith.truncf %165 : vector<96x8xf32> to vector<96x8xbf16>
    %c11 = arith.constant 11 : index
    %c0_79 = arith.constant 0 : index
    %c0_80 = arith.constant 0 : index
    %167 = vector.load %arg9[%c11, %c0_79, %c0_80] : memref<12x96x8xbf16, #tpu.memory_space<vmem>>, vector<1x96x8xbf16>
    %168 = vector.shape_cast %167 : vector<1x96x8xbf16> to vector<96x8xbf16>
    %169 = vector.shape_cast %166 : vector<96x8xbf16> to vector<1x96x8xbf16>
    tpu.vector_store %arg9[%c11, %c0_79, %c0_80], %169 {strides = array<i32>} : memref<12x96x8xbf16, #tpu.memory_space<vmem>>, vector<1x96x8xbf16>,
    %c0_81 = arith.constant 0 : index
    %c0_82 = arith.constant 0 : index
    %170 = vector.load %arg4[%c0_81, %c0_82] : memref<64x576xbf16, #tpu.memory_space<vmem>>, vector<64x576xbf16>
    %c0_83 = arith.constant 0 : index
    %c0_84 = arith.constant 0 : index
    %c0_85 = arith.constant 0 : index
    %171 = vector.load %arg9[%c0_83, %c0_84, %c0_85] : memref<12x96x8xbf16, #tpu.memory_space<vmem>>, vector<6x96x8xbf16>
    %172 = vector.shape_cast %171 : vector<6x96x8xbf16> to vector<576x8xbf16>
    %cst_86 = arith.constant dense<0.000000e+00> : vector<64x8xf32>
    %173 = tpu.matmul %170, %172, %cst_86 {dimension_numbers = #tpu.dot_dimension_numbers<[1], [0], [0], [1], [0, 0, 1, 1], [], []>} : vector<64x576xbf16>, vector<576x8xbf16>, vector<64x8xf32> -> vector<64x8xf32>
    %c2_87 = arith.constant 2 : index
    %c0_88 = arith.constant 0 : index
    %c0_89 = arith.constant 0 : index
    %174 = vector.load %arg9[%c2_87, %c0_88, %c0_89] : memref<12x96x8xbf16, #tpu.memory_space<vmem>>, vector<6x96x8xbf16>
    %175 = vector.shape_cast %174 : vector<6x96x8xbf16> to vector<576x8xbf16>
    %cst_90 = arith.constant dense<0.000000e+00> : vector<64x8xf32>
    %176 = tpu.matmul %170, %175, %cst_90 {dimension_numbers = #tpu.dot_dimension_numbers<[1], [0], [0], [1], [0, 0, 1, 1], [], []>} : vector<64x576xbf16>, vector<576x8xbf16>, vector<64x8xf32> -> vector<64x8xf32>
    %c4_91 = arith.constant 4 : index
    %c0_92 = arith.constant 0 : index
    %c0_93 = arith.constant 0 : index
    %177 = vector.load %arg9[%c4_91, %c0_92, %c0_93] : memref<12x96x8xbf16, #tpu.memory_space<vmem>>, vector<6x96x8xbf16>
    %178 = vector.shape_cast %177 : vector<6x96x8xbf16> to vector<576x8xbf16>
    %cst_94 = arith.constant dense<0.000000e+00> : vector<64x8xf32>
    %179 = tpu.matmul %170, %178, %cst_94 {dimension_numbers = #tpu.dot_dimension_numbers<[1], [0], [0], [1], [0, 0, 1, 1], [], []>} : vector<64x576xbf16>, vector<576x8xbf16>, vector<64x8xf32> -> vector<64x8xf32>
    %c6_95 = arith.constant 6 : index
    %c0_96 = arith.constant 0 : index
    %c0_97 = arith.constant 0 : index
    %180 = vector.load %arg9[%c6_95, %c0_96, %c0_97] : memref<12x96x8xbf16, #tpu.memory_space<vmem>>, vector<6x96x8xbf16>
    %181 = vector.shape_cast %180 : vector<6x96x8xbf16> to vector<576x8xbf16>
    %cst_98 = arith.constant dense<0.000000e+00> : vector<64x8xf32>
    %182 = tpu.matmul %170, %181, %cst_98 {dimension_numbers = #tpu.dot_dimension_numbers<[1], [0], [0], [1], [0, 0, 1, 1], [], []>} : vector<64x576xbf16>, vector<576x8xbf16>, vector<64x8xf32> -> vector<64x8xf32>
    %183 = tpu.concatenate %173, %176, %179, %182 in 0 : vector<64x8xf32>, vector<64x8xf32>, vector<64x8xf32>, vector<64x8xf32> -> vector<256x8xf32>
    %c0_99 = arith.constant 0 : index
    %c0_100 = arith.constant 0 : index
    %184 = vector.load %arg5[%c0_99, %c0_100] : memref<256x1xf32, #tpu.memory_space<vmem>>, vector<256x1xf32>
    %185 = vector.broadcast %184 : vector<256x1xf32> to vector<256x8xf32>
    %186 = arith.addf %183, %185 : vector<256x8xf32>
    %187 = arith.negf %186 : vector<256x8xf32>
    %188 = math.exp %187 : vector<256x8xf32>
    %cst_101 = arith.constant 1.000000e+00 : f32
    %189 = vector.broadcast %cst_101 : f32 to vector<256x8xf32>
    %190 = arith.addf %189, %188 : vector<256x8xf32>
    %191 = arith.divf %189, %190 : vector<256x8xf32>
    %c0_102 = arith.constant 0 : index
    %c0_103 = arith.constant 0 : index
    %192 = vector.load %arg6[%c0_102, %c0_103] : memref<16x256xbf16, #tpu.memory_space<vmem>>, vector<16x256xbf16>
    %193 = arith.truncf %191 : vector<256x8xf32> to vector<256x8xbf16>
    %cst_104 = arith.constant dense<0.000000e+00> : vector<16x8xf32>
    %194 = tpu.matmul %192, %193, %cst_104 {dimension_numbers = #tpu.dot_dimension_numbers<[1], [0], [0], [1], [0, 0, 1, 1], [], []>} : vector<16x256xbf16>, vector<256x8xbf16>, vector<16x8xf32> -> vector<16x8xf32>
    %c0_105 = arith.constant 0 : index
    %c0_106 = arith.constant 0 : index
    %195 = vector.load %arg7[%c0_105, %c0_106] : memref<16x1xf32, #tpu.memory_space<vmem>>, vector<16x1xf32>
    %196 = vector.broadcast %195 : vector<16x1xf32> to vector<16x8xf32>
    %197 = arith.addf %194, %196 : vector<16x8xf32>
    %c0_107 = arith.constant 0 : index
    %c0_108 = arith.constant 0 : index
    %198 = vector.load %arg8[%c0_107, %c0_108] : memref<16x8xf32, #tpu.memory_space<vmem>>, vector<16x8xf32>
    tpu.vector_store %arg8[%c0_107, %c0_108], %197 {strides = array<i32>} : memref<16x8xf32, #tpu.memory_space<vmem>>, vector<16x8xf32>,
    return
  }
  func.func @transform_0(%arg0: i32) -> (i32, i32, i32) {
    %c0_i32 = arith.constant 0 : i32
    %c0_i32_0 = arith.constant 0 : i32
    %c0_i32_1 = arith.constant 0 : i32
    return %c0_i32, %c0_i32_0, %arg0 : i32, i32, i32
  }
  func.func @transform_1(%arg0: i32) -> (i32, i32) {
    %c0_i32 = arith.constant 0 : i32
    %c0_i32_0 = arith.constant 0 : i32
    %c0_i32_1 = arith.constant 0 : i32
    return %c0_i32, %c0_i32_0 : i32, i32
  }
  func.func @transform_2(%arg0: i32) -> (i32, i32) {
    %c0_i32 = arith.constant 0 : i32
    %c0_i32_0 = arith.constant 0 : i32
    %c0_i32_1 = arith.constant 0 : i32
    return %c0_i32, %c0_i32_0 : i32, i32
  }
  func.func @transform_3(%arg0: i32) -> (i32, i32) {
    %c0_i32 = arith.constant 0 : i32
    %c0_i32_0 = arith.constant 0 : i32
    %c0_i32_1 = arith.constant 0 : i32
    return %c0_i32, %c0_i32_0 : i32, i32
  }
  func.func @transform_4(%arg0: i32) -> (i32, i32) {
    %c0_i32 = arith.constant 0 : i32
    %c0_i32_0 = arith.constant 0 : i32
    %c0_i32_1 = arith.constant 0 : i32
    return %c0_i32, %c0_i32_0 : i32, i32
  }
  func.func @transform_5(%arg0: i32) -> (i32, i32) {
    %c0_i32 = arith.constant 0 : i32
    %c0_i32_0 = arith.constant 0 : i32
    %c0_i32_1 = arith.constant 0 : i32
    return %c0_i32, %c0_i32_0 : i32, i32
  }
  func.func @transform_6(%arg0: i32) -> (i32, i32) {
    %c0_i32 = arith.constant 0 : i32
    %c0_i32_0 = arith.constant 0 : i32
    %c0_i32_1 = arith.constant 0 : i32
    return %c0_i32, %c0_i32_0 : i32, i32
  }
  func.func @transform_7(%arg0: i32) -> (i32, i32) {
    %c0_i32 = arith.constant 0 : i32
    %c0_i32_0 = arith.constant 0 : i32
    return %c0_i32, %arg0 : i32, i32
  }
}

</mosaic_0001>

<llo_original>
// kernel: tile.18
$region0: #{tile.18}
  #allocation0 [shape = 's32[1]{0}', space=sflag, size = 0x4, scoped, tag = 'scoped memory for tile.18']
  %s0 = inlined_call_operand.vmem [shape: f32[16], index: 0, kind: input, shape index: {}]
  %s1 = inlined_call_operand.vmem [shape: f32[16,16], index: 1, kind: output, shape index: {}]
  // Predicated region
  $region2: #{tile.18} parent=0 // pred_check
    _
  $region3: #{tile.18} parent=0 // pred_check_branch
    %3 = sbr.rel (0) target = $region5
  $region4: #{tile.18} parent=0 // pred_region
    _
  $region5: #{tile.18} parent=0 // pred_fallthru
    _
  %v4 = vld [vmem:[%s0] ss:$0 sm:$0xff]
  %5 = vst [vmem:[%s1] sm:$0xff] %v4
  %s6 = scalar_lea.vmem %s1, 8
  %7 = vst [vmem:[%s6] sm:$0xff] %v4

// kernel: tile.1
$region0: #{tile.1}
  %s0 = inlined_call_operand.vmem [shape: f32[16,16], index: 0, kind: input, shape index: {}]
  %s1 = inlined_call_operand.vmem [shape: f32[256,1], index: 1, kind: output, shape index: {}]
  %v2 = vld [vmem:[%s0] sm:$0xff]
  %vm3 = vcmask 7168
  %4 = vst.msk [vmem:[%s1] ss:$16 sm:$0x3] %vm3, %v2
  %5 = vst.msk [vmem:[%s1] ss:$16 sm:$0xc] %vm3, %v2
  %6 = vst.msk [vmem:[%s1] ss:$16 sm:$0x30] %vm3, %v2
  %7 = vst.msk [vmem:[%s1] ss:$16 sm:$0xc0] %vm3, %v2
  %s8 = scalar_lea.vmem %s0, 8
  %v9 = vld [vmem:[%s8] sm:$0xff]
  %vm10 = vcmask 7168
  %s11 = scalar_lea.vmem %s1, 128
  %12 = vst.msk [vmem:[%s11] ss:$16 sm:$0x3] %vm10, %v9
  %s13 = scalar_lea.vmem %s1, 128
  %14 = vst.msk [vmem:[%s13] ss:$16 sm:$0xc] %vm10, %v9
  %s15 = scalar_lea.vmem %s1, 128
  %16 = vst.msk [vmem:[%s15] ss:$16 sm:$0x30] %vm10, %v9
  %s17 = scalar_lea.vmem %s1, 128
  %18 = vst.msk [vmem:[%s17] ss:$16 sm:$0xc0] %vm10, %v9
  %v19 = vld [vmem:[%s0] sm:$0xff]
  %20 = vrot.lane.b32.xlu0 %v19, 127
  %v21 = vpop.permute.xlu0 %20
  %vm22 = vcmask 7168
  %s23 = scalar_lea.vmem %s1, 1
  %24 = vst.msk [vmem:[%s23] ss:$16 sm:$0x3] %vm22, %v21
  %s25 = scalar_lea.vmem %s1, 1
  %26 = vst.msk [vmem:[%s25] ss:$16 sm:$0xc] %vm22, %v21
  %s27 = scalar_lea.vmem %s1, 1
  %28 = vst.msk [vmem:[%s27] ss:$16 sm:$0x30] %vm22, %v21
  %s29 = scalar_lea.vmem %s1, 1
  %30 = vst.msk [vmem:[%s29] ss:$16 sm:$0xc0] %vm22, %v21
  %s31 = scalar_lea.vmem %s0, 8
  %v32 = vld [vmem:[%s31] sm:$0xff]
  %33 = vrot.lane.b32.xlu0 %v32, 127
  %v34 = vpop.permute.xlu0 %33
  %vm35 = vcmask 7168
  %s36 = scalar_lea.vmem %s1, 129
  %37 = vst.msk [vmem:[%s36] ss:$16 sm:$0x3] %vm35, %v34
  %s38 = scalar_lea.vmem %s1, 129
  %39 = vst.msk [vmem:[%s38] ss:$16 sm:$0xc] %vm35, %v34
  %s40 = scalar_lea.vmem %s1, 129
  %41 = vst.msk [vmem:[%s40] ss:$16 sm:$0x30] %vm35, %v34
  %s42 = scalar_lea.vmem %s1, 129
  %43 = vst.msk [vmem:[%s42] ss:$16 sm:$0xc0] %vm35, %v34
  %v44 = vld [vmem:[%s0] sm:$0xff]
  %45 = vrot.lane.b32.xlu0 %v44, 126
  %v46 = vpop.permute.xlu0 %45
  %vm47 = vcmask 7168
  %s48 = scalar_lea.vmem %s1, 2
  %49 = vst.msk [vmem:[%s48] ss:$16 sm:$0x3] %vm47, %v46
  %s50 = scalar_lea.vmem %s1, 2
  %51 = vst.msk [vmem:[%s50] ss:$16 sm:$0xc] %vm47, %v46
  %s52 = scalar_lea.vmem %s1, 2
  %53 = vst.msk [vmem:[%s52] ss:$16 sm:$0x30] %vm47, %v46
  %s54 = scalar_lea.vmem %s1, 2
  %55 = vst.msk [vmem:[%s54] ss:$16 sm:$0xc0] %vm47, %v46
  %s56 = scalar_lea.vmem %s0, 8
  %v57 = vld [vmem:[%s56] sm:$0xff]
  %58 = vrot.lane.b32.xlu0 %v57, 126
  %v59 = vpop.permute.xlu0 %58
  %vm60 = vcmask 7168
  %s61 = scalar_lea.vmem %s1, 130
  %62 = vst.msk [vmem:[%s61] ss:$16 sm:$0x3] %vm60, %v59
  %s63 = scalar_lea.vmem %s1, 130
  %64 = vst.msk [vmem:[%s63] ss:$16 sm:$0xc] %vm60, %v59
  %s65 = scalar_lea.vmem %s1, 130
  %66 = vst.msk [vmem:[%s65] ss:$16 sm:$0x30] %vm60, %v59
  %s67 = scalar_lea.vmem %s1, 130
  %68 = vst.msk [vmem:[%s67] ss:$16 sm:$0xc0] %vm60, %v59
  %v69 = vld [vmem:[%s0] sm:$0xff]
  %70 = vrot.lane.b32.xlu0 %v69, 125
  %v71 = vpop.permute.xlu0 %70
  %vm72 = vcmask 7168
  %s73 = scalar_lea.vmem %s1, 3
  %74 = vst.msk [vmem:[%s73] ss:$16 sm:$0x3] %vm72, %v71
  %s75 = scalar_lea.vmem %s1, 3
  %76 = vst.msk [vmem:[%s75] ss:$16 sm:$0xc] %vm72, %v71
  %s77 = scalar_lea.vmem %s1, 3
  %78 = vst.msk [vmem:[%s77] ss:$16 sm:$0x30] %vm72, %v71
  %s79 = scalar_lea.vmem %s1, 3
  %80 = vst.msk [vmem:[%s79] ss:$16 sm:$0xc0] %vm72, %v71
  %s81 = scalar_lea.vmem %s0, 8
  %v82 = vld [vmem:[%s81] sm:$0xff]
  %83 = vrot.lane.b32.xlu0 %v82, 125
  %v84 = vpop.permute.xlu0 %83
  %vm85 = vcmask 7168
  %s86 = scalar_lea.vmem %s1, 131
  %87 = vst.msk [vmem:[%s86] ss:$16 sm:$0x3] %vm85, %v84
  %s88 = scalar_lea.vmem %s1, 131
  %89 = vst.msk [vmem:[%s88] ss:$16 sm:$0xc] %vm85, %v84
  %s90 = scalar_lea.vmem %s1, 131
  %91 = vst.msk [vmem:[%s90] ss:$16 sm:$0x30] %vm85, %v84
  %s92 = scalar_lea.vmem %s1, 131
  %93 = vst.msk [vmem:[%s92] ss:$16 sm:$0xc0] %vm85, %v84
  %v94 = vld [vmem:[%s0] sm:$0xff]
  %95 = vrot.lane.b32.xlu0 %v94, 124
  %v96 = vpop.permute.xlu0 %95
  %vm97 = vcmask 7168
  %s98 = scalar_lea.vmem %s1, 4
  %99 = vst.msk [vmem:[%s98] ss:$16 sm:$0x3] %vm97, %v96
  %s100 = scalar_lea.vmem %s1, 4
  %101 = vst.msk [vmem:[%s100] ss:$16 sm:$0xc] %vm97, %v96
  %s102 = scalar_lea.vmem %s1, 4
  %103 = vst.msk [vmem:[%s102] ss:$16 sm:$0x30] %vm97, %v96
  %s104 = scalar_lea.vmem %s1, 4
  %105 = vst.msk [vmem:[%s104] ss:$16 sm:$0xc0] %vm97, %v96
  %s106 = scalar_lea.vmem %s0, 8
  %v107 = vld [vmem:[%s106] sm:$0xff]
  %108 = vrot.lane.b32.xlu0 %v107, 124
  %v109 = vpop.permute.xlu0 %108
  %vm110 = vcmask 7168
  %s111 = scalar_lea.vmem %s1, 132
  %112 = vst.msk [vmem:[%s111] ss:$16 sm:$0x3] %vm110, %v109
  %s113 = scalar_lea.vmem %s1, 132
  %114 = vst.msk [vmem:[%s113] ss:$16 sm:$0xc] %vm110, %v109
  %s115 = scalar_lea.vmem %s1, 132
  %116 = vst.msk [vmem:[%s115] ss:$16 sm:$0x30] %vm110, %v109
  %s117 = scalar_lea.vmem %s1, 132
  %118 = vst.msk [vmem:[%s117] ss:$16 sm:$0xc0] %vm110, %v109
  %v119 = vld [vmem:[%s0] sm:$0xff]
  %120 = vrot.lane.b32.xlu0 %v119, 123
  %v121 = vpop.permute.xlu0 %120
  %vm122 = vcmask 7168
  %s123 = scalar_lea.vmem %s1, 5
  %124 = vst.msk [vmem:[%s123] ss:$16 sm:$0x3] %vm122, %v121
  %s125 = scalar_lea.vmem %s1, 5
  %126 = vst.msk [vmem:[%s125] ss:$16 sm:$0xc] %vm122, %v121
  %s127 = scalar_lea.vmem %s1, 5
  %128 = vst.msk [vmem:[%s127] ss:$16 sm:$0x30] %vm122, %v121
  %s129 = scalar_lea.vmem %s1, 5
  %130 = vst.msk [vmem:[%s129] ss:$16 sm:$0xc0] %vm122, %v121
  %s131 = scalar_lea.vmem %s0, 8
  %v132 = vld [vmem:[%s131] sm:$0xff]
  %133 = vrot.lane.b32.xlu0 %v132, 123
  %v134 = vpop.permute.xlu0 %133
  %vm135 = vcmask 7168
  %s136 = scalar_lea.vmem %s1, 133
  %137 = vst.msk [vmem:[%s136] ss:$16 sm:$0x3] %vm135, %v134
  %s138 = scalar_lea.vmem %s1, 133
  %139 = vst.msk [vmem:[%s138] ss:$16 sm:$0xc] %vm135, %v134
  %s140 = scalar_lea.vmem %s1, 133
  %141 = vst.msk [vmem:[%s140] ss:$16 sm:$0x30] %vm135, %v134
  %s142 = scalar_lea.vmem %s1, 133
  %143 = vst.msk [vmem:[%s142] ss:$16 sm:$0xc0] %vm135, %v134
  %v144 = vld [vmem:[%s0] sm:$0xff]
  %145 = vrot.lane.b32.xlu0 %v144, 122
  %v146 = vpop.permute.xlu0 %145
  %vm147 = vcmask 7168
  %s148 = scalar_lea.vmem %s1, 6
  %149 = vst.msk [vmem:[%s148] ss:$16 sm:$0x3] %vm147, %v146
  %s150 = scalar_lea.vmem %s1, 6
  %151 = vst.msk [vmem:[%s150] ss:$16 sm:$0xc] %vm147, %v146
  %s152 = scalar_lea.vmem %s1, 6
  %153 = vst.msk [vmem:[%s152] ss:$16 sm:$0x30] %vm147, %v146
  %s154 = scalar_lea.vmem %s1, 6
  %155 = vst.msk [vmem:[%s154] ss:$16 sm:$0xc0] %vm147, %v146
  %s156 = scalar_lea.vmem %s0, 8
  %v157 = vld [vmem:[%s156] sm:$0xff]
  %158 = vrot.lane.b32.xlu0 %v157, 122
  %v159 = vpop.permute.xlu0 %158
  %vm160 = vcmask 7168
  %s161 = scalar_lea.vmem %s1, 134
  %162 = vst.msk [vmem:[%s161] ss:$16 sm:$0x3] %vm160, %v159
  %s163 = scalar_lea.vmem %s1, 134
  %164 = vst.msk [vmem:[%s163] ss:$16 sm:$0xc] %vm160, %v159
  %s165 = scalar_lea.vmem %s1, 134
  %166 = vst.msk [vmem:[%s165] ss:$16 sm:$0x30] %vm160, %v159
  %s167 = scalar_lea.vmem %s1, 134
  %168 = vst.msk [vmem:[%s167] ss:$16 sm:$0xc0] %vm160, %v159
  %v169 = vld [vmem:[%s0] sm:$0xff]
  %170 = vrot.lane.b32.xlu0 %v169, 121
  %v171 = vpop.permute.xlu0 %170
  %vm172 = vcmask 7168
  %s173 = scalar_lea.vmem %s1, 7
  %174 = vst.msk [vmem:[%s173] ss:$16 sm:$0x3] %vm172, %v171
  %s175 = scalar_lea.vmem %s1, 7
  %176 = vst.msk [vmem:[%s175] ss:$16 sm:$0xc] %vm172, %v171
  %s177 = scalar_lea.vmem %s1, 7
  %178 = vst.msk [vmem:[%s177] ss:$16 sm:$0x30] %vm172, %v171
  %s179 = scalar_lea.vmem %s1, 7
  %180 = vst.msk [vmem:[%s179] ss:$16 sm:$0xc0] %vm172, %v171
  %s181 = scalar_lea.vmem %s0, 8
  %v182 = vld [vmem:[%s181] sm:$0xff]
  %183 = vrot.lane.b32.xlu0 %v182, 121
  %v184 = vpop.permute.xlu0 %183
  %vm185 = vcmask 7168
  %s186 = scalar_lea.vmem %s1, 135
  %187 = vst.msk [vmem:[%s186] ss:$16 sm:$0x3] %vm185, %v184
  %s188 = scalar_lea.vmem %s1, 135
  %189 = vst.msk [vmem:[%s188] ss:$16 sm:$0xc] %vm185, %v184
  %s190 = scalar_lea.vmem %s1, 135
  %191 = vst.msk [vmem:[%s190] ss:$16 sm:$0x30] %vm185, %v184
  %s192 = scalar_lea.vmem %s1, 135
  %193 = vst.msk [vmem:[%s192] ss:$16 sm:$0xc0] %vm185, %v184
  %v194 = vld [vmem:[%s0] sm:$0xff]
  %195 = vrot.lane.b32.xlu0 %v194, 120
  %v196 = vpop.permute.xlu0 %195
  %vm197 = vcmask 7168
  %s198 = scalar_lea.vmem %s1, 8
  %199 = vst.msk [vmem:[%s198] ss:$16 sm:$0x3] %vm197, %v196
  %s200 = scalar_lea.vmem %s1, 8
  %201 = vst.msk [vmem:[%s200] ss:$16 sm:$0xc] %vm197, %v196
  %s202 = scalar_lea.vmem %s1, 8
  %203 = vst.msk [vmem:[%s202] ss:$16 sm:$0x30] %vm197, %v196
  %s204 = scalar_lea.vmem %s1, 8
  %205 = vst.msk [vmem:[%s204] ss:$16 sm:$0xc0] %vm197, %v196
  %s206 = scalar_lea.vmem %s0, 8
  %v207 = vld [vmem:[%s206] sm:$0xff]
  %208 = vrot.lane.b32.xlu0 %v207, 120
  %v209 = vpop.permute.xlu0 %208
  %vm210 = vcmask 7168
  %s211 = scalar_lea.vmem %s1, 136
  %212 = vst.msk [vmem:[%s211] ss:$16 sm:$0x3] %vm210, %v209
  %s213 = scalar_lea.vmem %s1, 136
  %214 = vst.msk [vmem:[%s213] ss:$16 sm:$0xc] %vm210, %v209
  %s215 = scalar_lea.vmem %s1, 136
  %216 = vst.msk [vmem:[%s215] ss:$16 sm:$0x30] %vm210, %v209
  %s217 = scalar_lea.vmem %s1, 136
  %218 = vst.msk [vmem:[%s217] ss:$16 sm:$0xc0] %vm210, %v209
  %v219 = vld [vmem:[%s0] sm:$0xff]
  %220 = vrot.lane.b32.xlu0 %v219, 119
  %v221 = vpop.permute.xlu0 %220
  %vm222 = vcmask 7168
  %s223 = scalar_lea.vmem %s1, 9
  %224 = vst.msk [vmem:[%s223] ss:$16 sm:$0x3] %vm222, %v221
  %s225 = scalar_lea.vmem %s1, 9
  %226 = vst.msk [vmem:[%s225] ss:$16 sm:$0xc] %vm222, %v221
  %s227 = scalar_lea.vmem %s1, 9
  %228 = vst.msk [vmem:[%s227] ss:$16 sm:$0x30] %vm222, %v221
  %s229 = scalar_lea.vmem %s1, 9
  %230 = vst.msk [vmem:[%s229] ss:$16 sm:$0xc0] %vm222, %v221
  %s231 = scalar_lea.vmem %s0, 8
  %v232 = vld [vmem:[%s231] sm:$0xff]
  %233 = vrot.lane.b32.xlu0 %v232, 119
  %v234 = vpop.permute.xlu0 %233
  %vm235 = vcmask 7168
  %s236 = scalar_lea.vmem %s1, 137
  %237 = vst.msk [vmem:[%s236] ss:$16 sm:$0x3] %vm235, %v234
  %s238 = scalar_lea.vmem %s1, 137
  %239 = vst.msk [vmem:[%s238] ss:$16 sm:$0xc] %vm235, %v234
  %s240 = scalar_lea.vmem %s1, 137
  %241 = vst.msk [vmem:[%s240] ss:$16 sm:$0x30] %vm235, %v234
  %s242 = scalar_lea.vmem %s1, 137
  %243 = vst.msk [vmem:[%s242] ss:$16 sm:$0xc0] %vm235, %v234
  %v244 = vld [vmem:[%s0] sm:$0xff]
  %245 = vrot.lane.b32.xlu0 %v244, 118
  %v246 = vpop.permute.xlu0 %245
  %vm247 = vcmask 7168
  %s248 = scalar_lea.vmem %s1, 10
  %249 = vst.msk [vmem:[%s248] ss:$16 sm:$0x3] %vm247, %v246
  %s250 = scalar_lea.vmem %s1, 10
  %251 = vst.msk [vmem:[%s250] ss:$16 sm:$0xc] %vm247, %v246
  %s252 = scalar_lea.vmem %s1, 10
  %253 = vst.msk [vmem:[%s252] ss:$16 sm:$0x30] %vm247, %v246
  %s254 = scalar_lea.vmem %s1, 10
  %255 = vst.msk [vmem:[%s254] ss:$16 sm:$0xc0] %vm247, %v246
  %s256 = scalar_lea.vmem %s0, 8
  %v257 = vld [vmem:[%s256] sm:$0xff]
  %258 = vrot.lane.b32.xlu0 %v257, 118
  %v259 = vpop.permute.xlu0 %258
  %vm260 = vcmask 7168
  %s261 = scalar_lea.vmem %s1, 138
  %262 = vst.msk [vmem:[%s261] ss:$16 sm:$0x3] %vm260, %v259
  %s263 = scalar_lea.vmem %s1, 138
  %264 = vst.msk [vmem:[%s263] ss:$16 sm:$0xc] %vm260, %v259
  %s265 = scalar_lea.vmem %s1, 138
  %266 = vst.msk [vmem:[%s265] ss:$16 sm:$0x30] %vm260, %v259
  %s267 = scalar_lea.vmem %s1, 138
  %268 = vst.msk [vmem:[%s267] ss:$16 sm:$0xc0] %vm260, %v259
  %v269 = vld [vmem:[%s0] sm:$0xff]
  %270 = vrot.lane.b32.xlu0 %v269, 117
  %v271 = vpop.permute.xlu0 %270
  %vm272 = vcmask 7168
  %s273 = scalar_lea.vmem %s1, 11
  %274 = vst.msk [vmem:[%s273] ss:$16 sm:$0x3] %vm272, %v271
  %s275 = scalar_lea.vmem %s1, 11
  %276 = vst.msk [vmem:[%s275] ss:$16 sm:$0xc] %vm272, %v271
  %s277 = scalar_lea.vmem %s1, 11
  %278 = vst.msk [vmem:[%s277] ss:$16 sm:$0x30] %vm272, %v271
  %s279 = scalar_lea.vmem %s1, 11
  %280 = vst.msk [vmem:[%s279] ss:$16 sm:$0xc0] %vm272, %v271
  %s281 = scalar_lea.vmem %s0, 8
  %v282 = vld [vmem:[%s281] sm:$0xff]
  %283 = vrot.lane.b32.xlu0 %v282, 117
  %v284 = vpop.permute.xlu0 %283
  %vm285 = vcmask 7168
  %s286 = scalar_lea.vmem %s1, 139
  %287 = vst.msk [vmem:[%s286] ss:$16 sm:$0x3] %vm285, %v284
  %s288 = scalar_lea.vmem %s1, 139
  %289 = vst.msk [vmem:[%s288] ss:$16 sm:$0xc] %vm285, %v284
  %s290 = scalar_lea.vmem %s1, 139
  %291 = vst.msk [vmem:[%s290] ss:$16 sm:$0x30] %vm285, %v284
  %s292 = scalar_lea.vmem %s1, 139
  %293 = vst.msk [vmem:[%s292] ss:$16 sm:$0xc0] %vm285, %v284
  %v294 = vld [vmem:[%s0] sm:$0xff]
  %295 = vrot.lane.b32.xlu0 %v294, 116
  %v296 = vpop.permute.xlu0 %295
  %vm297 = vcmask 7168
  %s298 = scalar_lea.vmem %s1, 12
  %299 = vst.msk [vmem:[%s298] ss:$16 sm:$0x3] %vm297, %v296
  %s300 = scalar_lea.vmem %s1, 12
  %301 = vst.msk [vmem:[%s300] ss:$16 sm:$0xc] %vm297, %v296
  %s302 = scalar_lea.vmem %s1, 12
  %303 = vst.msk [vmem:[%s302] ss:$16 sm:$0x30] %vm297, %v296
  %s304 = scalar_lea.vmem %s1, 12
  %305 = vst.msk [vmem:[%s304] ss:$16 sm:$0xc0] %vm297, %v296
  %s306 = scalar_lea.vmem %s0, 8
  %v307 = vld [vmem:[%s306] sm:$0xff]
  %308 = vrot.lane.b32.xlu0 %v307, 116
  %v309 = vpop.permute.xlu0 %308
  %vm310 = vcmask 7168
  %s311 = scalar_lea.vmem %s1, 140
  %312 = vst.msk [vmem:[%s311] ss:$16 sm:$0x3] %vm310, %v309
  %s313 = scalar_lea.vmem %s1, 140
  %314 = vst.msk [vmem:[%s313] ss:$16 sm:$0xc] %vm310, %v309
  %s315 = scalar_lea.vmem %s1, 140
  %316 = vst.msk [vmem:[%s315] ss:$16 sm:$0x30] %vm310, %v309
  %s317 = scalar_lea.vmem %s1, 140
  %318 = vst.msk [vmem:[%s317] ss:$16 sm:$0xc0] %vm310, %v309
  %v319 = vld [vmem:[%s0] sm:$0xff]
  %320 = vrot.lane.b32.xlu0 %v319, 115
  %v321 = vpop.permute.xlu0 %320
  %vm322 = vcmask 7168
  %s323 = scalar_lea.vmem %s1, 13
  %324 = vst.msk [vmem:[%s323] ss:$16 sm:$0x3] %vm322, %v321
  %s325 = scalar_lea.vmem %s1, 13
  %326 = vst.msk [vmem:[%s325] ss:$16 sm:$0xc] %vm322, %v321
  %s327 = scalar_lea.vmem %s1, 13
  %328 = vst.msk [vmem:[%s327] ss:$16 sm:$0x30] %vm322, %v321
  %s329 = scalar_lea.vmem %s1, 13
  %330 = vst.msk [vmem:[%s329] ss:$16 sm:$0xc0] %vm322, %v321
  %s331 = scalar_lea.vmem %s0, 8
  %v332 = vld [vmem:[%s331] sm:$0xff]
  %333 = vrot.lane.b32.xlu0 %v332, 115
  %v334 = vpop.permute.xlu0 %333
  %vm335 = vcmask 7168
  %s336 = scalar_lea.vmem %s1, 141
  %337 = vst.msk [vmem:[%s336] ss:$16 sm:$0x3] %vm335, %v334
  %s338 = scalar_lea.vmem %s1, 141
  %339 = vst.msk [vmem:[%s338] ss:$16 sm:$0xc] %vm335, %v334
  %s340 = scalar_lea.vmem %s1, 141
  %341 = vst.msk [vmem:[%s340] ss:$16 sm:$0x30] %vm335, %v334
  %s342 = scalar_lea.vmem %s1, 141
  %343 = vst.msk [vmem:[%s342] ss:$16 sm:$0xc0] %vm335, %v334
  %v344 = vld [vmem:[%s0] sm:$0xff]
  %345 = vrot.lane.b32.xlu0 %v344, 114
  %v346 = vpop.permute.xlu0 %345
  %vm347 = vcmask 7168
  %s348 = scalar_lea.vmem %s1, 14
  %349 = vst.msk [vmem:[%s348] ss:$16 sm:$0x3] %vm347, %v346
  %s350 = scalar_lea.vmem %s1, 14
  %351 = vst.msk [vmem:[%s350] ss:$16 sm:$0xc] %vm347, %v346
  %s352 = scalar_lea.vmem %s1, 14
  %353 = vst.msk [vmem:[%s352] ss:$16 sm:$0x30] %vm347, %v346
  %s354 = scalar_lea.vmem %s1, 14
  %355 = vst.msk [vmem:[%s354] ss:$16 sm:$0xc0] %vm347, %v346
  %s356 = scalar_lea.vmem %s0, 8
  %v357 = vld [vmem:[%s356] sm:$0xff]
  %358 = vrot.lane.b32.xlu0 %v357, 114
  %v359 = vpop.permute.xlu0 %358
  %vm360 = vcmask 7168
  %s361 = scalar_lea.vmem %s1, 142
  %362 = vst.msk [vmem:[%s361] ss:$16 sm:$0x3] %vm360, %v359
  %s363 = scalar_lea.vmem %s1, 142
  %364 = vst.msk [vmem:[%s363] ss:$16 sm:$0xc] %vm360, %v359
  %s365 = scalar_lea.vmem %s1, 142
  %366 = vst.msk [vmem:[%s365] ss:$16 sm:$0x30] %vm360, %v359
  %s367 = scalar_lea.vmem %s1, 142
  %368 = vst.msk [vmem:[%s367] ss:$16 sm:$0xc0] %vm360, %v359
  %v369 = vld [vmem:[%s0] sm:$0xff]
  %370 = vrot.lane.b32.xlu0 %v369, 113
  %v371 = vpop.permute.xlu0 %370
  %vm372 = vcmask 7168
  %s373 = scalar_lea.vmem %s1, 15
  %374 = vst.msk [vmem:[%s373] ss:$16 sm:$0x3] %vm372, %v371
  %s375 = scalar_lea.vmem %s1, 15
  %376 = vst.msk [vmem:[%s375] ss:$16 sm:$0xc] %vm372, %v371
  %s377 = scalar_lea.vmem %s1, 15
  %378 = vst.msk [vmem:[%s377] ss:$16 sm:$0x30] %vm372, %v371
  %s379 = scalar_lea.vmem %s1, 15
  %380 = vst.msk [vmem:[%s379] ss:$16 sm:$0xc0] %vm372, %v371
  %s381 = scalar_lea.vmem %s0, 8
  %v382 = vld [vmem:[%s381] sm:$0xff]
  %383 = vrot.lane.b32.xlu0 %v382, 113
  %v384 = vpop.permute.xlu0 %383
  %vm385 = vcmask 7168
  %s386 = scalar_lea.vmem %s1, 143
  %387 = vst.msk [vmem:[%s386] ss:$16 sm:$0x3] %vm385, %v384
  %s388 = scalar_lea.vmem %s1, 143
  %389 = vst.msk [vmem:[%s388] ss:$16 sm:$0xc] %vm385, %v384
  %s390 = scalar_lea.vmem %s1, 143
  %391 = vst.msk [vmem:[%s390] ss:$16 sm:$0x30] %vm385, %v384
  %s392 = scalar_lea.vmem %s1, 143
  %393 = vst.msk [vmem:[%s392] ss:$16 sm:$0xc0] %vm385, %v384

// kernel: tile.13
$region0: #{tile.13}
  #allocation0 [shape = 's32[1]{0}', space=sflag, size = 0x4, scoped, tag = 'scoped memory for tile.13']
  %s0 = inlined_call_operand.vmem [shape: f32[8], index: 0, kind: input, shape index: {}]
  %s1 = inlined_call_operand.vmem [shape: f32[12,8], index: 1, kind: output, shape index: {}]
  // Predicated region
  $region2: #{tile.13} parent=0 // pred_check
    _
  $region3: #{tile.13} parent=0 // pred_check_branch
    %3 = sbr.rel (0) target = $region5
  $region4: #{tile.13} parent=0 // pred_region
    _
  $region5: #{tile.13} parent=0 // pred_fallthru
    _
  %v4 = vld [vmem:[%s0] ss:$0 sm:$0xff]
  %5 = vst [vmem:[%s1] sm:$0xff] %v4
  %s6 = scalar_lea.vmem %s1, 8
  %7 = vst [vmem:[%s6] sm:$0xff] %v4

// kernel: tile.0
$region0: #{tile.0}
  %s0 = inlined_call_operand.vmem [shape: f32[12,8], index: 0, kind: input, shape index: {}]
  %s1 = inlined_call_operand.vmem [shape: f32[96,1], index: 1, kind: output, shape index: {}]
  %v2 = vld [vmem:[%s0] sm:$0xff]
  %vm3 = vcmask 7168
  %4 = vst.msk [vmem:[%s1] ss:$8 sm:$0xf] %vm3, %v2
  %5 = vst.msk [vmem:[%s1] ss:$8 sm:$0xf0] %vm3, %v2
  %s6 = scalar_lea.vmem %s0, 8
  %v7 = vld [vmem:[%s6] sm:$0xf]
  %vm8 = vcmask 7168
  %s9 = scalar_lea.vmem %s1, 64
  %10 = vst.msk [vmem:[%s9] ss:$8 sm:$0xf] %vm8, %v7
  %v11 = vld [vmem:[%s0] sm:$0xff]
  %12 = vrot.lane.b32.xlu0 %v11, 127
  %v13 = vpop.permute.xlu0 %12
  %vm14 = vcmask 7168
  %s15 = scalar_lea.vmem %s1, 1
  %16 = vst.msk [vmem:[%s15] ss:$8 sm:$0xf] %vm14, %v13
  %s17 = scalar_lea.vmem %s1, 1
  %18 = vst.msk [vmem:[%s17] ss:$8 sm:$0xf0] %vm14, %v13
  %s19 = scalar_lea.vmem %s0, 8
  %v20 = vld [vmem:[%s19] sm:$0xf]
  %21 = vrot.lane.b32.xlu0 %v20, 127
  %v22 = vpop.permute.xlu0 %21
  %vm23 = vcmask 7168
  %s24 = scalar_lea.vmem %s1, 65
  %25 = vst.msk [vmem:[%s24] ss:$8 sm:$0xf] %vm23, %v22
  %v26 = vld [vmem:[%s0] sm:$0xff]
  %27 = vrot.lane.b32.xlu0 %v26, 126
  %v28 = vpop.permute.xlu0 %27
  %vm29 = vcmask 7168
  %s30 = scalar_lea.vmem %s1, 2
  %31 = vst.msk [vmem:[%s30] ss:$8 sm:$0xf] %vm29, %v28
  %s32 = scalar_lea.vmem %s1, 2
  %33 = vst.msk [vmem:[%s32] ss:$8 sm:$0xf0] %vm29, %v28
  %s34 = scalar_lea.vmem %s0, 8
  %v35 = vld [vmem:[%s34] sm:$0xf]
  %36 = vrot.lane.b32.xlu0 %v35, 126
  %v37 = vpop.permute.xlu0 %36
  %vm38 = vcmask 7168
  %s39 = scalar_lea.vmem %s1, 66
  %40 = vst.msk [vmem:[%s39] ss:$8 sm:$0xf] %vm38, %v37
  %v41 = vld [vmem:[%s0] sm:$0xff]
  %42 = vrot.lane.b32.xlu0 %v41, 125
  %v43 = vpop.permute.xlu0 %42
  %vm44 = vcmask 7168
  %s45 = scalar_lea.vmem %s1, 3
  %46 = vst.msk [vmem:[%s45] ss:$8 sm:$0xf] %vm44, %v43
  %s47 = scalar_lea.vmem %s1, 3
  %48 = vst.msk [vmem:[%s47] ss:$8 sm:$0xf0] %vm44, %v43
  %s49 = scalar_lea.vmem %s0, 8
  %v50 = vld [vmem:[%s49] sm:$0xf]
  %51 = vrot.lane.b32.xlu0 %v50, 125
  %v52 = vpop.permute.xlu0 %51
  %vm53 = vcmask 7168
  %s54 = scalar_lea.vmem %s1, 67
  %55 = vst.msk [vmem:[%s54] ss:$8 sm:$0xf] %vm53, %v52
  %v56 = vld [vmem:[%s0] sm:$0xff]
  %57 = vrot.lane.b32.xlu0 %v56, 124
  %v58 = vpop.permute.xlu0 %57
  %vm59 = vcmask 7168
  %s60 = scalar_lea.vmem %s1, 4
  %61 = vst.msk [vmem:[%s60] ss:$8 sm:$0xf] %vm59, %v58
  %s62 = scalar_lea.vmem %s1, 4
  %63 = vst.msk [vmem:[%s62] ss:$8 sm:$0xf0] %vm59, %v58
  %s64 = scalar_lea.vmem %s0, 8
  %v65 = vld [vmem:[%s64] sm:$0xf]
  %66 = vrot.lane.b32.xlu0 %v65, 124
  %v67 = vpop.permute.xlu0 %66
  %vm68 = vcmask 7168
  %s69 = scalar_lea.vmem %s1, 68
  %70 = vst.msk [vmem:[%s69] ss:$8 sm:$0xf] %vm68, %v67
  %v71 = vld [vmem:[%s0] sm:$0xff]
  %72 = vrot.lane.b32.xlu0 %v71, 123
  %v73 = vpop.permute.xlu0 %72
  %vm74 = vcmask 7168
  %s75 = scalar_lea.vmem %s1, 5
  %76 = vst.msk [vmem:[%s75] ss:$8 sm:$0xf] %vm74, %v73
  %s77 = scalar_lea.vmem %s1, 5
  %78 = vst.msk [vmem:[%s77] ss:$8 sm:$0xf0] %vm74, %v73
  %s79 = scalar_lea.vmem %s0, 8
  %v80 = vld [vmem:[%s79] sm:$0xf]
  %81 = vrot.lane.b32.xlu0 %v80, 123
  %v82 = vpop.permute.xlu0 %81
  %vm83 = vcmask 7168
  %s84 = scalar_lea.vmem %s1, 69
  %85 = vst.msk [vmem:[%s84] ss:$8 sm:$0xf] %vm83, %v82
  %v86 = vld [vmem:[%s0] sm:$0xff]
  %87 = vrot.lane.b32.xlu0 %v86, 122
  %v88 = vpop.permute.xlu0 %87
  %vm89 = vcmask 7168
  %s90 = scalar_lea.vmem %s1, 6
  %91 = vst.msk [vmem:[%s90] ss:$8 sm:$0xf] %vm89, %v88
  %s92 = scalar_lea.vmem %s1, 6
  %93 = vst.msk [vmem:[%s92] ss:$8 sm:$0xf0] %vm89, %v88
  %s94 = scalar_lea.vmem %s0, 8
  %v95 = vld [vmem:[%s94] sm:$0xf]
  %96 = vrot.lane.b32.xlu0 %v95, 122
  %v97 = vpop.permute.xlu0 %96
  %vm98 = vcmask 7168
  %s99 = scalar_lea.vmem %s1, 70
  %100 = vst.msk [vmem:[%s99] ss:$8 sm:$0xf] %vm98, %v97
  %v101 = vld [vmem:[%s0] sm:$0xff]
  %102 = vrot.lane.b32.xlu0 %v101, 121
  %v103 = vpop.permute.xlu0 %102
  %vm104 = vcmask 7168
  %s105 = scalar_lea.vmem %s1, 7
  %106 = vst.msk [vmem:[%s105] ss:$8 sm:$0xf] %vm104, %v103
  %s107 = scalar_lea.vmem %s1, 7
  %108 = vst.msk [vmem:[%s107] ss:$8 sm:$0xf0] %vm104, %v103
  %s109 = scalar_lea.vmem %s0, 8
  %v110 = vld [vmem:[%s109] sm:$0xf]
  %111 = vrot.lane.b32.xlu0 %v110, 121
  %v112 = vpop.permute.xlu0 %111
  %vm113 = vcmask 7168
  %s114 = scalar_lea.vmem %s1, 71
  %115 = vst.msk [vmem:[%s114] ss:$8 sm:$0xf] %vm113, %v112

// kernel: lenet_forward.1
$region0: #{lenet_forward.1}
  #allocation0 [shape = 'u32[]', space=smem, size = 0x4, offset = 0x4, fixed_abs, tag = 'smem constant byte address 0x4 - core index']
  #allocation1 [shape = 'u32[144,128]{1,0:T(1,128)}', space=vmem, size = 0x12000, scoped, tag = 'internal scratch']
  #allocation2 [shape = 'bf16[12,96,8]{2,1,0:T(16,128)(2,1)}', space=vmem, size = 0x48000, scoped, tag = 'scratch operand']
  %s0 = inlined_call_operand.vmem [shape: bf16[28,32,8], index: 0, kind: input, shape index: {}]
  %s1 = inlined_call_operand.vmem [shape: bf16[96,192], index: 1, kind: input, shape index: {}]
  %s2 = inlined_call_operand.vmem [shape: f32[96,1], index: 2, kind: input, shape index: {}]
  %s3 = inlined_call_operand.vmem [shape: bf16[64,576], index: 3, kind: input, shape index: {}]
  %s4 = inlined_call_operand.vmem [shape: f32[256,1], index: 4, kind: input, shape index: {}]
  %s5 = inlined_call_operand.vmem [shape: bf16[16,256], index: 5, kind: input, shape index: {}]
  %s6 = inlined_call_operand.vmem [shape: f32[16,1], index: 6, kind: input, shape index: {}]
  %s7 = inlined_call_operand.vmem [shape: f32[16,8], index: 7, kind: output, shape index: {}]
  %s8 = sld [smem:[#allocation0]]
  $region38: #{lenet_forward.1} parent=0
    _
  %s10 = ssub.s32 1, %s8
  %s11 = scalar_select 0, %s10, %s8
  // Predicated region
  $region2: #{lenet_forward.1} parent=0 // pred_check
    _
  $region3: #{lenet_forward.1} parent=0 // pred_check_branch
    %13 = sbr.rel (0) target = $region5
  $region4: #{lenet_forward.1} parent=0 // pred_region
    _
  $region5: #{lenet_forward.1} parent=0 // pred_fallthru
    _
  // Predicated region
  $region6: #{lenet_forward.1} parent=0 // pred_check
    _
  $region7: #{lenet_forward.1} parent=0 // pred_check_branch
    %15 = sbr.rel (0) target = $region9
  $region8: #{lenet_forward.1} parent=0 // pred_region
    _
  $region9: #{lenet_forward.1} parent=0 // pred_fallthru
    _
  // Predicated region
  $region10: #{lenet_forward.1} parent=0 // pred_check
    _
  $region11: #{lenet_forward.1} parent=0 // pred_check_branch
    %17 = sbr.rel (0) target = $region13
  $region12: #{lenet_forward.1} parent=0 // pred_region
    _
  $region13: #{lenet_forward.1} parent=0 // pred_fallthru
    _
  // Predicated region
  $region14: #{lenet_forward.1} parent=0 // pred_check
    _
  $region15: #{lenet_forward.1} parent=0 // pred_check_branch
    %19 = sbr.rel (0) target = $region17
  $region16: #{lenet_forward.1} parent=0 // pred_region
    _
  $region17: #{lenet_forward.1} parent=0 // pred_fallthru
    _
  // Predicated region
  $region18: #{lenet_forward.1} parent=0 // pred_check
    _
  $region19: #{lenet_forward.1} parent=0 // pred_check_branch
    %21 = sbr.rel (0) target = $region21
  $region20: #{lenet_forward.1} parent=0 // pred_region
    _
  $region21: #{lenet_forward.1} parent=0 // pred_fallthru
    _
  // Predicated region
  $region22: #{lenet_forward.1} parent=0 // pred_check
    _
  $region23: #{lenet_forward.1} parent=0 // pred_check_branch
    %23 = sbr.rel (0) target = $region25
  $region24: #{lenet_forward.1} parent=0 // pred_region
    _
  $region25: #{lenet_forward.1} parent=0 // pred_fallthru
    _
  // Predicated region
  $region26: #{lenet_forward.1} parent=0 // pred_check
    _
  $region27: #{lenet_forward.1} parent=0 // pred_check_branch
    %25 = sbr.rel (0) target = $region29
  $region28: #{lenet_forward.1} parent=0 // pred_region
    _
  $region29: #{lenet_forward.1} parent=0 // pred_fallthru
    _
  %v27 = vld [vmem:[%s1] sm:$0xff]
  %v28 = vld [vmem:[%s1 + $0x8] sm:$0xff]
  %v29 = vld [vmem:[%s1 + $0x10] sm:$0xff]
  %v30 = vld [vmem:[%s1 + $0x18] sm:$0xff]
  %v31 = vld [vmem:[%s1 + $0x20] sm:$0xff]
  %v32 = vld [vmem:[%s1 + $0x28] sm:$0xff]
  %v33 = vld [vmem:[%s1 + $0x30] sm:$0xff]
  %v34 = vld [vmem:[%s1 + $0x38] sm:$0xff]
  %v35 = vld [vmem:[%s1 + $0x40] sm:$0xff]
  %v36 = vld [vmem:[%s1 + $0x48] sm:$0xff]
  %v37 = vld [vmem:[%s1 + $0x50] sm:$0xff]
  %v38 = vld [vmem:[%s1 + $0x58] sm:$0xff]
  %v39 = vld [vmem:[%s2] sm:$0xff]
  %v40 = vld [vmem:[%s2 + $0x8] sm:$0xff]
  %v41 = vld [vmem:[%s2 + $0x10] sm:$0xff]
  %v42 = vld [vmem:[%s2 + $0x18] sm:$0xff]
  %v43 = vld [vmem:[%s2 + $0x20] sm:$0xff]
  %v44 = vld [vmem:[%s2 + $0x28] sm:$0xff]
  %v45 = vld [vmem:[%s2 + $0x30] sm:$0xff]
  %v46 = vld [vmem:[%s2 + $0x38] sm:$0xff]
  %v47 = vld [vmem:[%s2 + $0x40] sm:$0xff]
  %v48 = vld [vmem:[%s2 + $0x48] sm:$0xff]
  %v49 = vld [vmem:[%s2 + $0x50] sm:$0xff]
  %v50 = vld [vmem:[%s2 + $0x58] sm:$0xff]
  %v51 = vld [vmem:[%s0] sm:$0xf]
  %v52 = vld [vmem:[%s0 + $0x4] sm:$0xf]
  %v53 = vld [vmem:[%s0 + $0x8] sm:$0xf]
  %v54 = vld [vmem:[%s0 + $0xc] sm:$0xf]
  %v55 = vld [vmem:[%s0 + $0x10] sm:$0xf]
  %v56 = vld [vmem:[%s0 + $0x14] sm:$0xf]
  %v57 = vld [vmem:[%s0 + $0x18] sm:$0xf]
  %v58 = vld [vmem:[%s0 + $0x1c] sm:$0xf]
  %v59 = vld [vmem:[%s0 + $0x20] sm:$0xf]
  %v60 = vld [vmem:[%s0 + $0x24] sm:$0xf]
  %v61 = vld [vmem:[%s0 + $0x28] sm:$0xf]
  %v62 = vld [vmem:[%s0 + $0x2c] sm:$0xf]
  %v63 = vld [vmem:[%s0 + $0x30] sm:$0xf]
  %v64 = vld [vmem:[%s0 + $0x34] sm:$0xf]
  %v65 = vld [vmem:[%s0 + $0x38] sm:$0xf]
  %v66 = vld [vmem:[%s0 + $0x3c] sm:$0xf]
  %v67 = vld [vmem:[%s0 + $0x40] sm:$0xf]
  %v68 = vld [vmem:[%s0 + $0x44] sm:$0xf]
  %v69 = vld [vmem:[%s0 + $0x48] sm:$0xf]
  %v70 = vld [vmem:[%s0 + $0x4c] sm:$0xf]
  %v71 = vld [vmem:[%s0 + $0x50] sm:$0xf]
  %v72 = vld [vmem:[%s0 + $0x54] sm:$0xf]
  %v73 = vld [vmem:[%s0 + $0x58] sm:$0xf]
  %v74 = vld [vmem:[%s0 + $0x5c] sm:$0xf]
  %76 = vset.pattern.permute.xlu0 0
  %77 = vperm.xlu0 %76, %v39
  %v78 = vpop.permute.xlu0 %77
  %81 = vset.pattern.permute.xlu0 0
  %82 = vperm.xlu0 %81, %v40
  %v83 = vpop.permute.xlu0 %82
  %86 = vset.pattern.permute.xlu0 0
  %87 = vperm.xlu0 %86, %v41
  %v88 = vpop.permute.xlu0 %87
  %91 = vset.pattern.permute.xlu0 0
  %92 = vperm.xlu0 %91, %v42
  %v93 = vpop.permute.xlu0 %92
  %96 = vset.pattern.permute.xlu0 0
  %97 = vperm.xlu0 %96, %v43
  %v98 = vpop.permute.xlu0 %97
  %101 = vset.pattern.permute.xlu0 0
  %102 = vperm.xlu0 %101, %v44
  %v103 = vpop.permute.xlu0 %102
  %106 = vset.pattern.permute.xlu0 0
  %107 = vperm.xlu0 %106, %v45
  %v108 = vpop.permute.xlu0 %107
  %111 = vset.pattern.permute.xlu0 0
  %112 = vperm.xlu0 %111, %v46
  %v113 = vpop.permute.xlu0 %112
  %116 = vset.pattern.permute.xlu0 0
  %117 = vperm.xlu0 %116, %v47
  %v118 = vpop.permute.xlu0 %117
  %121 = vset.pattern.permute.xlu0 0
  %122 = vperm.xlu0 %121, %v48
  %v123 = vpop.permute.xlu0 %122
  %126 = vset.pattern.permute.xlu0 0
  %127 = vperm.xlu0 %126, %v49
  %v128 = vpop.permute.xlu0 %127
  %131 = vset.pattern.permute.xlu0 0
  %132 = vperm.xlu0 %131, %v50
  %v133 = vpop.permute.xlu0 %132
  %v147 = vunpack.c.l.b16 %v27
  %v148 = vunpack.c.h.b16 %v27
  %v149 = vunpack.c.l.b16 %v28
  %v150 = vunpack.c.h.b16 %v28
  %v151 = vunpack.c.l.b16 %v29
  %v152 = vunpack.c.h.b16 %v29
  %v153 = vunpack.c.l.b16 %v30
  %v154 = vunpack.c.h.b16 %v30
  %v155 = vunpack.c.l.b16 %v31
  %v156 = vunpack.c.h.b16 %v31
  %v157 = vunpack.c.l.b16 %v32
  %v158 = vunpack.c.h.b16 %v32
  %v159 = vunpack.c.l.b16 %v33
  %v160 = vunpack.c.h.b16 %v33
  %v161 = vunpack.c.l.b16 %v34
  %v162 = vunpack.c.h.b16 %v34
  %v163 = vunpack.c.l.b16 %v35
  %v164 = vunpack.c.h.b16 %v35
  %v165 = vunpack.c.l.b16 %v36
  %v166 = vunpack.c.h.b16 %v36
  %v167 = vunpack.c.l.b16 %v37
  %v168 = vunpack.c.h.b16 %v37
  %v169 = vunpack.c.l.b16 %v38
  %v170 = vunpack.c.h.b16 %v38
  %v171 = vpack.c.b16 %v149, %v147
  %v172 = vpack.c.b16 %v150, %v148
  %v173 = vpack.c.b16 %v153, %v151
  %v174 = vpack.c.b16 %v154, %v152
  %v175 = vpack.c.b16 %v157, %v155
  %v176 = vpack.c.b16 %v158, %v156
  %v177 = vpack.c.b16 %v161, %v159
  %v178 = vpack.c.b16 %v162, %v160
  %v179 = vpack.c.b16 %v165, %v163
  %v180 = vpack.c.b16 %v166, %v164
  %v181 = vpack.c.b16 %v169, %v167
  %v182 = vpack.c.b16 %v170, %v168
  %v213 = vunpack.c.l.b16 %v51
  %v214 = vunpack.c.l.b16 %v52
  %v215 = vunpack.c.l.b16 %v53
  %v216 = vunpack.c.l.b16 %v54
  %v217 = vunpack.c.l.b16 %v55
  %v218 = vunpack.c.l.b16 %v56
  %v219 = vunpack.c.l.b16 %v57
  %v220 = vunpack.c.l.b16 %v58
  %v221 = vunpack.c.l.b16 %v59
  %v222 = vunpack.c.l.b16 %v60
  %v223 = vunpack.c.l.b16 %v61
  %v224 = vunpack.c.l.b16 %v62
  %v225 = vunpack.c.l.b16 %v63
  %v226 = vunpack.c.l.b16 %v64
  %v227 = vunpack.c.l.b16 %v65
  %v228 = vunpack.c.l.b16 %v66
  %v229 = vunpack.c.l.b16 %v67
  %v230 = vunpack.c.l.b16 %v68
  %v231 = vunpack.c.l.b16 %v69
  %v232 = vunpack.c.l.b16 %v70
  %v233 = vunpack.c.l.b16 %v71
  %v234 = vunpack.c.l.b16 %v72
  %v235 = vunpack.c.l.b16 %v73
  %v236 = vunpack.c.l.b16 %v74
  %v237 = vpack.c.b16 %v214, %v213
  %v238 = vpack.c.b16 %v216, %v215
  %v239 = vpack.c.b16 %v218, %v217
  %v240 = vpack.c.b16 %v220, %v219
  %v241 = vpack.c.b16 %v222, %v221
  %v242 = vpack.c.b16 %v224, %v223
  %v243 = vpack.c.b16 %v226, %v225
  %v244 = vpack.c.b16 %v228, %v227
  %v245 = vpack.c.b16 %v230, %v229
  %v246 = vpack.c.b16 %v232, %v231
  %v247 = vpack.c.b16 %v234, %v233
  %v248 = vpack.c.b16 %v236, %v235
  %vm261 = vcmask 523264
  %v263 = vsel %vm261, %v172, 0
  %v266 = vsel %vm261, %v174, 0
  %v269 = vsel %vm261, %v176, 0
  %v272 = vsel %vm261, %v178, 0
  %v275 = vsel %vm261, %v180, 0
  %v278 = vsel %vm261, %v182, 0
  %280 = vmatprep.subr.bf16.mxu0 0
  %281 = vmatpush1.bf16.msra.mxu0 %v237
  %282 = vmatprep.subr.bf16.mxu0 0
  %283 = vmatpush1.bf16.msra.mxu0 %v238
  %284 = vmatprep.subr.bf16.mxu0 0
  %285 = vmatpush1.bf16.msra.mxu0 %v239
  %286 = vmatprep.subr.bf16.mxu0 0
  %287 = vmatpush1.bf16.msra.mxu0 %v240
  %288 = vmatprep.subr.bf16.mxu0 0
  %289 = vmatpush1.bf16.msra.mxu0 %v241
  %290 = vmatprep.subr.bf16.mxu0 0
  %291 = vmatpush1.bf16.msra.mxu0 %v242
  %292 = vmatprep.subr.bf16.mxu0 0
  %293 = vmatpush1.bf16.msra.mxu0 %v243
  %294 = vmatprep.subr.bf16.mxu0 0
  %295 = vmatpush1.bf16.msra.mxu0 %v244
  %296 = vmatprep.subr.bf16.mxu0 0
  %297 = vmatpush1.bf16.msra.mxu0 %v245
  %298 = vmatprep.subr.bf16.mxu0 0
  %299 = vmatpush1.bf16.msra.mxu0 %v246
  %300 = vmatprep.subr.bf16.mxu0 0
  %301 = vmatpush1.bf16.msra.mxu0 %v247
  %302 = vmatprep.subr.bf16.mxu0 0
  %303 = vmatpush1.bf16.msra.mxu0 %v248
  %304 = vmatprep.subr.bf16.mxu0 0
  %305 = vmatpush1.bf16.msra.mxu0 0
  %306 = vmatprep.subr.bf16.mxu0 0
  %307 = vmatpush1.bf16.msra.mxu0 0
  %308 = vmatprep.subr.bf16.mxu0 0
  %309 = vmatpush1.bf16.msra.mxu0 0
  %310 = vmatprep.subr.bf16.mxu0 0
  %311 = vmatpush1.bf16.msra.mxu0 0
  %312 = vmatprep.mubr.bf16.mxu0 %v263
  %313 = vmatmul.mubr.bf16.gmra.mrb[0].mxu0 %v171
  %v314 = vpop.f32.mrb[0].mxu0
  %v315 = vadd.f32 %v78, %v314
  %v316 = vpop.f32.mrb[0].mxu0
  %v317 = vpop.f32.mrb[0].mxu0
  %v318 = vadd.f32 %v83, %v317
  %v319 = vpop.f32.mrb[0].mxu0
  %320 = vmatprep.mubr.bf16.mxu0 %v266
  %321 = vmatmul.mubr.bf16.gmra.mrb[0].mxu0 %v173
  %v322 = vpop.f32.mrb[0].mxu0
  %v323 = vadd.f32 %v88, %v322
  %v324 = vpop.f32.mrb[0].mxu0
  %v325 = vpop.f32.mrb[0].mxu0
  %v326 = vadd.f32 %v93, %v325
  %v327 = vpop.f32.mrb[0].mxu0
  %328 = vmatprep.mubr.bf16.mxu0 %v269
  %329 = vmatmul.mubr.bf16.gmra.mrb[0].mxu0 %v175
  %v330 = vpop.f32.mrb[0].mxu0
  %v331 = vadd.f32 %v98, %v330
  %v332 = vpop.f32.mrb[0].mxu0
  %v333 = vpop.f32.mrb[0].mxu0
  %v334 = vadd.f32 %v103, %v333
  %v335 = vpop.f32.mrb[0].mxu0
  %336 = vmatprep.mubr.bf16.mxu0 %v272
  %337 = vmatmul.mubr.bf16.gmra.mrb[0].mxu0 %v177
  %v338 = vpop.f32.mrb[0].mxu0
  %v339 = vadd.f32 %v108, %v338
  %v340 = vpop.f32.mrb[0].mxu0
  %v341 = vpop.f32.mrb[0].mxu0
  %v342 = vadd.f32 %v113, %v341
  %v343 = vpop.f32.mrb[0].mxu0
  %344 = vmatprep.mubr.bf16.mxu0 %v275
  %345 = vmatmul.mubr.bf16.gmra.mrb[0].mxu0 %v179
  %v346 = vpop.f32.mrb[0].mxu0
  %v347 = vadd.f32 %v118, %v346
  %v348 = vpop.f32.mrb[0].mxu0
  %v349 = vpop.f32.mrb[0].mxu0
  %v350 = vadd.f32 %v123, %v349
  %v351 = vpop.f32.mrb[0].mxu0
  %352 = vmatprep.mubr.bf16.mxu0 %v278
  %353 = vmatmul.mubr.bf16.gmra.mrb[0].mxu0 %v181
  %v354 = vpop.f32.mrb[0].mxu0
  %v355 = vadd.f32 %v128, %v354
  %v356 = vpop.f32.mrb[0].mxu0
  %v357 = vpop.f32.mrb[0].mxu0
  %v358 = vadd.f32 %v133, %v357
  %v359 = vpop.f32.mrb[0].mxu0
  %360 = vdwg.mxu0
  %v361 = vxor.u32 %v315, 2147483648
  %v362 = vxor.u32 %v318, 2147483648
  %v363 = vxor.u32 %v323, 2147483648
  %v364 = vxor.u32 %v326, 2147483648
  %v365 = vxor.u32 %v331, 2147483648
  %v366 = vxor.u32 %v334, 2147483648
  %v367 = vxor.u32 %v339, 2147483648
  %v368 = vxor.u32 %v342, 2147483648
  %v369 = vxor.u32 %v347, 2147483648
  %v370 = vxor.u32 %v350, 2147483648
  %v371 = vxor.u32 %v355, 2147483648
  %v372 = vxor.u32 %v358, 2147483648
  %v373 = vmul.f32 %v361, 1.442695
  %v374 = vpow.pop %v373
  %v375 = vmul.f32 %v362, 1.442695
  %v376 = vpow.pop %v375
  %v377 = vmul.f32 %v363, 1.442695
  %v378 = vpow.pop %v377
  %v379 = vmul.f32 %v364, 1.442695
  %v380 = vpow.pop %v379
  %v381 = vmul.f32 %v365, 1.442695
  %v382 = vpow.pop %v381
  %v383 = vmul.f32 %v366, 1.442695
  %v384 = vpow.pop %v383
  %v385 = vmul.f32 %v367, 1.442695
  %v386 = vpow.pop %v385
  %v387 = vmul.f32 %v368, 1.442695
  %v388 = vpow.pop %v387
  %v389 = vmul.f32 %v369, 1.442695
  %v390 = vpow.pop %v389
  %v391 = vmul.f32 %v370, 1.442695
  %v392 = vpow.pop %v391
  %v393 = vmul.f32 %v371, 1.442695
  %v394 = vpow.pop %v393
  %v395 = vmul.f32 %v372, 1.442695
  %v396 = vpow.pop %v395
  %v397 = vadd.f32 %v374, 1.0
  %v398 = vadd.f32 %v376, 1.0
  %v399 = vadd.f32 %v378, 1.0
  %v400 = vadd.f32 %v380, 1.0
  %v401 = vadd.f32 %v382, 1.0
  %v402 = vadd.f32 %v384, 1.0
  %v403 = vadd.f32 %v386, 1.0
  %v404 = vadd.f32 %v388, 1.0
  %v405 = vadd.f32 %v390, 1.0
  %v406 = vadd.f32 %v392, 1.0
  %v407 = vadd.f32 %v394, 1.0
  %v408 = vadd.f32 %v396, 1.0
  %v409 = vrcp.pop %v397
  %v410 = vmul.f32 1.0, %v409
  %v411 = vrcp.pop %v398
  %v412 = vmul.f32 1.0, %v411
  %v413 = vrcp.pop %v399
  %v414 = vmul.f32 1.0, %v413
  %v415 = vrcp.pop %v400
  %v416 = vmul.f32 1.0, %v415
  %v417 = vrcp.pop %v401
  %v418 = vmul.f32 1.0, %v417
  %v419 = vrcp.pop %v402
  %v420 = vmul.f32 1.0, %v419
  %v421 = vrcp.pop %v403
  %v422 = vmul.f32 1.0, %v421
  %v423 = vrcp.pop %v404
  %v424 = vmul.f32 1.0, %v423
  %v425 = vrcp.pop %v405
  %v426 = vmul.f32 1.0, %v425
  %v427 = vrcp.pop %v406
  %v428 = vmul.f32 1.0, %v427
  %v429 = vrcp.pop %v407
  %v430 = vmul.f32 1.0, %v429
  %v431 = vrcp.pop %v408
  %v432 = vmul.f32 1.0, %v431
  %v433 = vpack.c.bf16 %v412, %v410
  %v434 = vpack.c.bf16 %v416, %v414
  %v435 = vpack.c.bf16 %v420, %v418
  %v436 = vpack.c.bf16 %v424, %v422
  %v437 = vpack.c.bf16 %v428, %v426
  %v438 = vpack.c.bf16 %v432, %v430
  %vm439 = vcmask 64512
  %440 = vst.msk [vmem:[#allocation2] sm:$0xff] %vm439, %v433
  %441 = vst.msk [vmem:[#allocation2 + $0x8] sm:$0xff] %vm439, %v434
  %442 = vst.msk [vmem:[#allocation2 + $0x10] sm:$0xff] %vm439, %v435
  %443 = vst.msk [vmem:[#allocation2 + $0x18] sm:$0xff] %vm439, %v436
  %444 = vst.msk [vmem:[#allocation2 + $0x20] sm:$0xff] %vm439, %v437
  %445 = vst.msk [vmem:[#allocation2 + $0x28] sm:$0xff] %vm439, %v438
  %s446 = scalar_lea.vmem %s0, 32
  %v447 = vld [vmem:[%s446] sm:$0xf]
  %v448 = vld [vmem:[%s446 + $0x4] sm:$0xf]
  %v449 = vld [vmem:[%s446 + $0x8] sm:$0xf]
  %v450 = vld [vmem:[%s446 + $0xc] sm:$0xf]
  %v451 = vld [vmem:[%s446 + $0x10] sm:$0xf]
  %v452 = vld [vmem:[%s446 + $0x14] sm:$0xf]
  %v453 = vld [vmem:[%s446 + $0x18] sm:$0xf]
  %v454 = vld [vmem:[%s446 + $0x1c] sm:$0xf]
  %v455 = vld [vmem:[%s446 + $0x20] sm:$0xf]
  %v456 = vld [vmem:[%s446 + $0x24] sm:$0xf]
  %v457 = vld [vmem:[%s446 + $0x28] sm:$0xf]
  %v458 = vld [vmem:[%s446 + $0x2c] sm:$0xf]
  %v459 = vld [vmem:[%s446 + $0x30] sm:$0xf]
  %v460 = vld [vmem:[%s446 + $0x34] sm:$0xf]
  %v461 = vld [vmem:[%s446 + $0x38] sm:$0xf]
  %v462 = vld [vmem:[%s446 + $0x3c] sm:$0xf]
  %v463 = vld [vmem:[%s446 + $0x40] sm:$0xf]
  %v464 = vld [vmem:[%s446 + $0x44] sm:$0xf]
  %v465 = vld [vmem:[%s446 + $0x48] sm:$0xf]
  %v466 = vld [vmem:[%s446 + $0x4c] sm:$0xf]
  %v467 = vld [vmem:[%s446 + $0x50] sm:$0xf]
  %v468 = vld [vmem:[%s446 + $0x54] sm:$0xf]
  %v469 = vld [vmem:[%s446 + $0x58] sm:$0xf]
  %v470 = vld [vmem:[%s446 + $0x5c] sm:$0xf]
  %v495 = vunpack.c.l.b16 %v447
  %v496 = vunpack.c.l.b16 %v448
  %v497 = vunpack.c.l.b16 %v449
  %v498 = vunpack.c.l.b16 %v450
  %v499 = vunpack.c.l.b16 %v451
  %v500 = vunpack.c.l.b16 %v452
  %v501 = vunpack.c.l.b16 %v453
  %v502 = vunpack.c.l.b16 %v454
  %v503 = vunpack.c.l.b16 %v455
  %v504 = vunpack.c.l.b16 %v456
  %v505 = vunpack.c.l.b16 %v457
  %v506 = vunpack.c.l.b16 %v458
  %v507 = vunpack.c.l.b16 %v459
  %v508 = vunpack.c.l.b16 %v460
  %v509 = vunpack.c.l.b16 %v461
  %v510 = vunpack.c.l.b16 %v462
  %v511 = vunpack.c.l.b16 %v463
  %v512 = vunpack.c.l.b16 %v464
  %v513 = vunpack.c.l.b16 %v465
  %v514 = vunpack.c.l.b16 %v466
  %v515 = vunpack.c.l.b16 %v467
  %v516 = vunpack.c.l.b16 %v468
  %v517 = vunpack.c.l.b16 %v469
  %v518 = vunpack.c.l.b16 %v470
  %v519 = vpack.c.b16 %v496, %v495
  %v520 = vpack.c.b16 %v498, %v497
  %v521 = vpack.c.b16 %v500, %v499
  %v522 = vpack.c.b16 %v502, %v501
  %v523 = vpack.c.b16 %v504, %v503
  %v524 = vpack.c.b16 %v506, %v505
  %v525 = vpack.c.b16 %v508, %v507
  %v526 = vpack.c.b16 %v510, %v509
  %v527 = vpack.c.b16 %v512, %v511
  %v528 = vpack.c.b16 %v514, %v513
  %v529 = vpack.c.b16 %v516, %v515
  %v530 = vpack.c.b16 %v518, %v517
  %543 = vmatprep.subr.bf16.mxu0 0
  %544 = vmatpush1.bf16.msra.mxu0 %v519
  %545 = vmatprep.subr.bf16.mxu0 0
  %546 = vmatpush1.bf16.msra.mxu0 %v520
  %547 = vmatprep.subr.bf16.mxu0 0
  %548 = vmatpush1.bf16.msra.mxu0 %v521
  %549 = vmatprep.subr.bf16.mxu0 0
  %550 = vmatpush1.bf16.msra.mxu0 %v522
  %551 = vmatprep.subr.bf16.mxu0 0
  %552 = vmatpush1.bf16.msra.mxu0 %v523
  %553 = vmatprep.subr.bf16.mxu0 0
  %554 = vmatpush1.bf16.msra.mxu0 %v524
  %555 = vmatprep.subr.bf16.mxu0 0
  %556 = vmatpush1.bf16.msra.mxu0 %v525
  %557 = vmatprep.subr.bf16.mxu0 0
  %558 = vmatpush1.bf16.msra.mxu0 %v526
  %559 = vmatprep.subr.bf16.mxu0 0
  %560 = vmatpush1.bf16.msra.mxu0 %v527
  %561 = vmatprep.subr.bf16.mxu0 0
  %562 = vmatpush1.bf16.msra.mxu0 %v528
  %563 = vmatprep.subr.bf16.mxu0 0
  %564 = vmatpush1.bf16.msra.mxu0 %v529
  %565 = vmatprep.subr.bf16.mxu0 0
  %566 = vmatpush1.bf16.msra.mxu0 %v530
  %567 = vmatprep.subr.bf16.mxu0 0
  %568 = vmatpush1.bf16.msra.mxu0 0
  %569 = vmatprep.subr.bf16.mxu0 0
  %570 = vmatpush1.bf16.msra.mxu0 0
  %571 = vmatprep.subr.bf16.mxu0 0
  %572 = vmatpush1.bf16.msra.mxu0 0
  %573 = vmatprep.subr.bf16.mxu0 0
  %574 = vmatpush1.bf16.msra.mxu0 0
  %575 = vmatprep.mubr.bf16.mxu0 %v263
  %576 = vmatmul.mubr.bf16.gmra.mrb[0].mxu0 %v171
  %v577 = vpop.f32.mrb[0].mxu0
  %v578 = vadd.f32 %v78, %v577
  %v579 = vpop.f32.mrb[0].mxu0
  %v580 = vpop.f32.mrb[0].mxu0
  %v581 = vadd.f32 %v83, %v580
  %v582 = vpop.f32.mrb[0].mxu0
  %583 = vmatprep.mubr.bf16.mxu0 %v266
  %584 = vmatmul.mubr.bf16.gmra.mrb[0].mxu0 %v173
  %v585 = vpop.f32.mrb[0].mxu0
  %v586 = vadd.f32 %v88, %v585
  %v587 = vpop.f32.mrb[0].mxu0
  %v588 = vpop.f32.mrb[0].mxu0
  %v589 = vadd.f32 %v93, %v588
  %v590 = vpop.f32.mrb[0].mxu0
  %591 = vmatprep.mubr.bf16.mxu0 %v269
  %592 = vmatmul.mubr.bf16.gmra.mrb[0].mxu0 %v175
  %v593 = vpop.f32.mrb[0].mxu0
  %v594 = vadd.f32 %v98, %v593
  %v595 = vpop.f32.mrb[0].mxu0
  %v596 = vpop.f32.mrb[0].mxu0
  %v597 = vadd.f32 %v103, %v596
  %v598 = vpop.f32.mrb[0].mxu0
  %599 = vmatprep.mubr.bf16.mxu0 %v272
  %600 = vmatmul.mubr.bf16.gmra.mrb[0].mxu0 %v177
  %v601 = vpop.f32.mrb[0].mxu0
  %v602 = vadd.f32 %v108, %v601
  %v603 = vpop.f32.mrb[0].mxu0
  %v604 = vpop.f32.mrb[0].mxu0
  %v605 = vadd.f32 %v113, %v604
  %v606 = vpop.f32.mrb[0].mxu0
  %607 = vmatprep.mubr.bf16.mxu0 %v275
  %608 = vmatmul.mubr.bf16.gmra.mrb[0].mxu0 %v179
  %v609 = vpop.f32.mrb[0].mxu0
  %v610 = vadd.f32 %v118, %v609
  %v611 = vpop.f32.mrb[0].mxu0
  %v612 = vpop.f32.mrb[0].mxu0
  %v613 = vadd.f32 %v123, %v612
  %v614 = vpop.f32.mrb[0].mxu0
  %615 = vmatprep.mubr.bf16.mxu0 %v278
  %616 = vmatmul.mubr.bf16.gmra.mrb[0].mxu0 %v181
  %v617 = vpop.f32.mrb[0].mxu0
  %v618 = vadd.f32 %v128, %v617
  %v619 = vpop.f32.mrb[0].mxu0
  %v620 = vpop.f32.mrb[0].mxu0
  %v621 = vadd.f32 %v133, %v620
  %v622 = vpop.f32.mrb[0].mxu0
  %623 = vdwg.mxu0
  %v624 = vxor.u32 %v578, 2147483648
  %v625 = vxor.u32 %v581, 2147483648
  %v626 = vxor.u32 %v586, 2147483648
  %v627 = vxor.u32 %v589, 2147483648
  %v628 = vxor.u32 %v594, 2147483648
  %v629 = vxor.u32 %v597, 2147483648
  %v630 = vxor.u32 %v602, 2147483648
  %v631 = vxor.u32 %v605, 2147483648
  %v632 = vxor.u32 %v610, 2147483648
  %v633 = vxor.u32 %v613, 2147483648
  %v634 = vxor.u32 %v618, 2147483648
  %v635 = vxor.u32 %v621, 2147483648
  %v636 = vmul.f32 %v624, 1.442695
  %v637 = vpow.pop %v636
  %v638 = vmul.f32 %v625, 1.442695
  %v639 = vpow.pop %v638
  %v640 = vmul.f32 %v626, 1.442695
  %v641 = vpow.pop %v640
  %v642 = vmul.f32 %v627, 1.442695
  %v643 = vpow.pop %v642
  %v644 = vmul.f32 %v628, 1.442695
  %v645 = vpow.pop %v644
  %v646 = vmul.f32 %v629, 1.442695
  %v647 = vpow.pop %v646
  %v648 = vmul.f32 %v630, 1.442695
  %v649 = vpow.pop %v648
  %v650 = vmul.f32 %v631, 1.442695
  %v651 = vpow.pop %v650
  %v652 = vmul.f32 %v632, 1.442695
  %v653 = vpow.pop %v652
  %v654 = vmul.f32 %v633, 1.442695
  %v655 = vpow.pop %v654
  %v656 = vmul.f32 %v634, 1.442695
  %v657 = vpow.pop %v656
  %v658 = vmul.f32 %v635, 1.442695
  %v659 = vpow.pop %v658
  %v660 = vadd.f32 %v637, 1.0
  %v661 = vadd.f32 %v639, 1.0
  %v662 = vadd.f32 %v641, 1.0
  %v663 = vadd.f32 %v643, 1.0
  %v664 = vadd.f32 %v645, 1.0
  %v665 = vadd.f32 %v647, 1.0
  %v666 = vadd.f32 %v649, 1.0
  %v667 = vadd.f32 %v651, 1.0
  %v668 = vadd.f32 %v653, 1.0
  %v669 = vadd.f32 %v655, 1.0
  %v670 = vadd.f32 %v657, 1.0
  %v671 = vadd.f32 %v659, 1.0
  %v672 = vrcp.pop %v660
  %v673 = vmul.f32 1.0, %v672
  %v674 = vrcp.pop %v661
  %v675 = vmul.f32 1.0, %v674
  %v676 = vrcp.pop %v662
  %v677 = vmul.f32 1.0, %v676
  %v678 = vrcp.pop %v663
  %v679 = vmul.f32 1.0, %v678
  %v680 = vrcp.pop %v664
  %v681 = vmul.f32 1.0, %v680
  %v682 = vrcp.pop %v665
  %v683 = vmul.f32 1.0, %v682
  %v684 = vrcp.pop %v666
  %v685 = vmul.f32 1.0, %v684
  %v686 = vrcp.pop %v667
  %v687 = vmul.f32 1.0, %v686
  %v688 = vrcp.pop %v668
  %v689 = vmul.f32 1.0, %v688
  %v690 = vrcp.pop %v669
  %v691 = vmul.f32 1.0, %v690
  %v692 = vrcp.pop %v670
  %v693 = vmul.f32 1.0, %v692
  %v694 = vrcp.pop %v671
  %v695 = vmul.f32 1.0, %v694
  %v696 = vpack.c.bf16 %v675, %v673
  %v697 = vpack.c.bf16 %v679, %v677
  %v698 = vpack.c.bf16 %v683, %v681
  %v699 = vpack.c.bf16 %v687, %v685
  %v700 = vpack.c.bf16 %v691, %v689
  %v701 = vpack.c.bf16 %v695, %v693
  %s702 = scalar_lea.vmem [#allocation2], 48
  %703 = vst.msk [vmem:[%s702] sm:$0xff] %vm439, %v696
  %704 = vst.msk [vmem:[%s702 + $0x8] sm:$0xff] %vm439, %v697
  %705 = vst.msk [vmem:[%s702 + $0x10] sm:$0xff] %vm439, %v698
  %706 = vst.msk [vmem:[%s702 + $0x18] sm:$0xff] %vm439, %v699
  %707 = vst.msk [vmem:[%s702 + $0x20] sm:$0xff] %vm439, %v700
  %708 = vst.msk [vmem:[%s702 + $0x28] sm:$0xff] %vm439, %v701
  %s709 = scalar_lea.vmem %s0, 64
  %v710 = vld [vmem:[%s709] sm:$0xf]
  %v711 = vld [vmem:[%s709 + $0x4] sm:$0xf]
  %v712 = vld [vmem:[%s709 + $0x8] sm:$0xf]
  %v713 = vld [vmem:[%s709 + $0xc] sm:$0xf]
  %v714 = vld [vmem:[%s709 + $0x10] sm:$0xf]
  %v715 = vld [vmem:[%s709 + $0x14] sm:$0xf]
  %v716 = vld [vmem:[%s709 + $0x18] sm:$0xf]
  %v717 = vld [vmem:[%s709 + $0x1c] sm:$0xf]
  %v718 = vld [vmem:[%s709 + $0x20] sm:$0xf]
  %v719 = vld [vmem:[%s709 + $0x24] sm:$0xf]
  %v720 = vld [vmem:[%s709 + $0x28] sm:$0xf]
  %v721 = vld [vmem:[%s709 + $0x2c] sm:$0xf]
  %v722 = vld [vmem:[%s709 + $0x30] sm:$0xf]
  %v723 = vld [vmem:[%s709 + $0x34] sm:$0xf]
  %v724 = vld [vmem:[%s709 + $0x38] sm:$0xf]
  %v725 = vld [vmem:[%s709 + $0x3c] sm:$0xf]
  %v726 = vld [vmem:[%s709 + $0x40] sm:$0xf]
  %v727 = vld [vmem:[%s709 + $0x44] sm:$0xf]
  %v728 = vld [vmem:[%s709 + $0x48] sm:$0xf]
  %v729 = vld [vmem:[%s709 + $0x4c] sm:$0xf]
  %v730 = vld [vmem:[%s709 + $0x50] sm:$0xf]
  %v731 = vld [vmem:[%s709 + $0x54] sm:$0xf]
  %v732 = vld [vmem:[%s709 + $0x58] sm:$0xf]
  %v733 = vld [vmem:[%s709 + $0x5c] sm:$0xf]
  %v758 = vunpack.c.l.b16 %v710
  %v759 = vunpack.c.l.b16 %v711
  %v760 = vunpack.c.l.b16 %v712
  %v761 = vunpack.c.l.b16 %v713
  %v762 = vunpack.c.l.b16 %v714
  %v763 = vunpack.c.l.b16 %v715
  %v764 = vunpack.c.l.b16 %v716
  %v765 = vunpack.c.l.b16 %v717
  %v766 = vunpack.c.l.b16 %v718
  %v767 = vunpack.c.l.b16 %v719
  %v768 = vunpack.c.l.b16 %v720
  %v769 = vunpack.c.l.b16 %v721
  %v770 = vunpack.c.l.b16 %v722
  %v771 = vunpack.c.l.b16 %v723
  %v772 = vunpack.c.l.b16 %v724
  %v773 = vunpack.c.l.b16 %v725
  %v774 = vunpack.c.l.b16 %v726
  %v775 = vunpack.c.l.b16 %v727
  %v776 = vunpack.c.l.b16 %v728
  %v777 = vunpack.c.l.b16 %v729
  %v778 = vunpack.c.l.b16 %v730
  %v779 = vunpack.c.l.b16 %v731
  %v780 = vunpack.c.l.b16 %v732
  %v781 = vunpack.c.l.b16 %v733
  %v782 = vpack.c.b16 %v759, %v758
  %v783 = vpack.c.b16 %v761, %v760
  %v784 = vpack.c.b16 %v763, %v762
  %v785 = vpack.c.b16 %v765, %v764
  %v786 = vpack.c.b16 %v767, %v766
  %v787 = vpack.c.b16 %v769, %v768
  %v788 = vpack.c.b16 %v771, %v770
  %v789 = vpack.c.b16 %v773, %v772
  %v790 = vpack.c.b16 %v775, %v774
  %v791 = vpack.c.b16 %v777, %v776
  %v792 = vpack.c.b16 %v779, %v778
  %v793 = vpack.c.b16 %v781, %v780
  %806 = vmatprep.subr.bf16.mxu0 0
  %807 = vmatpush1.bf16.msra.mxu0 %v782
  %808 = vmatprep.subr.bf16.mxu0 0
  %809 = vmatpush1.bf16.msra.mxu0 %v783
  %810 = vmatprep.subr.bf16.mxu0 0
  %811 = vmatpush1.bf16.msra.mxu0 %v784
  %812 = vmatprep.subr.bf16.mxu0 0
  %813 = vmatpush1.bf16.msra.mxu0 %v785
  %814 = vmatprep.subr.bf16.mxu0 0
  %815 = vmatpush1.bf16.msra.mxu0 %v786
  %816 = vmatprep.subr.bf16.mxu0 0
  %817 = vmatpush1.bf16.msra.mxu0 %v787
  %818 = vmatprep.subr.bf16.mxu0 0
  %819 = vmatpush1.bf16.msra.mxu0 %v788
  %820 = vmatprep.subr.bf16.mxu0 0
  %821 = vmatpush1.bf16.msra.mxu0 %v789
  %822 = vmatprep.subr.bf16.mxu0 0
  %823 = vmatpush1.bf16.msra.mxu0 %v790
  %824 = vmatprep.subr.bf16.mxu0 0
  %825 = vmatpush1.bf16.msra.mxu0 %v791
  %826 = vmatprep.subr.bf16.mxu0 0
  %827 = vmatpush1.bf16.msra.mxu0 %v792
  %828 = vmatprep.subr.bf16.mxu0 0
  %829 = vmatpush1.bf16.msra.mxu0 %v793
  %830 = vmatprep.subr.bf16.mxu0 0
  %831 = vmatpush1.bf16.msra.mxu0 0
  %832 = vmatprep.subr.bf16.mxu0 0
  %833 = vmatpush1.bf16.msra.mxu0 0
  %834 = vmatprep.subr.bf16.mxu0 0
  %835 = vmatpush1.bf16.msra.mxu0 0
  %836 = vmatprep.subr.bf16.mxu0 0
  %837 = vmatpush1.bf16.msra.mxu0 0
  %838 = vmatprep.mubr.bf16.mxu0 %v263
  %839 = vmatmul.mubr.bf16.gmra.mrb[0].mxu0 %v171
  %v840 = vpop.f32.mrb[0].mxu0
  %v841 = vadd.f32 %v78, %v840
  %v842 = vpop.f32.mrb[0].mxu0
  %v843 = vpop.f32.mrb[0].mxu0
  %v844 = vadd.f32 %v83, %v843
  %v845 = vpop.f32.mrb[0].mxu0
  %846 = vmatprep.mubr.bf16.mxu0 %v266
  %847 = vmatmul.mubr.bf16.gmra.mrb[0].mxu0 %v173
  %v848 = vpop.f32.mrb[0].mxu0
  %v849 = vadd.f32 %v88, %v848
  %v850 = vpop.f32.mrb[0].mxu0
  %v851 = vpop.f32.mrb[0].mxu0
  %v852 = vadd.f32 %v93, %v851
  %v853 = vpop.f32.mrb[0].mxu0
  %854 = vmatprep.mubr.bf16.mxu0 %v269
  %855 = vmatmul.mubr.bf16.gmra.mrb[0].mxu0 %v175
  %v856 = vpop.f32.mrb[0].mxu0
  %v857 = vadd.f32 %v98, %v856
  %v858 = vpop.f32.mrb[0].mxu0
  %v859 = vpop.f32.mrb[0].mxu0
  %v860 = vadd.f32 %v103, %v859
  %v861 = vpop.f32.mrb[0].mxu0
  %862 = vmatprep.mubr.bf16.mxu0 %v272
  %863 = vmatmul.mubr.bf16.gmra.mrb[0].mxu0 %v177
  %v864 = vpop.f32.mrb[0].mxu0
  %v865 = vadd.f32 %v108, %v864
  %v866 = vpop.f32.mrb[0].mxu0
  %v867 = vpop.f32.mrb[0].mxu0
  %v868 = vadd.f32 %v113, %v867
  %v869 = vpop.f32.mrb[0].mxu0
  %870 = vmatprep.mubr.bf16.mxu0 %v275
  %871 = vmatmul.mubr.bf16.gmra.mrb[0].mxu0 %v179
  %v872 = vpop.f32.mrb[0].mxu0
  %v873 = vadd.f32 %v118, %v872
  %v874 = vpop.f32.mrb[0].mxu0
  %v875 = vpop.f32.mrb[0].mxu0
  %v876 = vadd.f32 %v123, %v875
  %v877 = vpop.f32.mrb[0].mxu0
  %878 = vmatprep.mubr.bf16.mxu0 %v278
  %879 = vmatmul.mubr.bf16.gmra.mrb[0].mxu0 %v181
  %v880 = vpop.f32.mrb[0].mxu0
  %v881 = vadd.f32 %v128, %v880
  %v882 = vpop.f32.mrb[0].mxu0
  %v883 = vpop.f32.mrb[0].mxu0
  %v884 = vadd.f32 %v133, %v883
  %v885 = vpop.f32.mrb[0].mxu0
  %886 = vdwg.mxu0
  %v887 = vxor.u32 %v841, 2147483648
  %v888 = vxor.u32 %v844, 2147483648
  %v889 = vxor.u32 %v849, 2147483648
  %v890 = vxor.u32 %v852, 2147483648
  %v891 = vxor.u32 %v857, 2147483648
  %v892 = vxor.u32 %v860, 2147483648
  %v893 = vxor.u32 %v865, 2147483648
  %v894 = vxor.u32 %v868, 2147483648
  %v895 = vxor.u32 %v873, 2147483648
  %v896 = vxor.u32 %v876, 2147483648
  %v897 = vxor.u32 %v881, 2147483648
  %v898 = vxor.u32 %v884, 2147483648
  %v899 = vmul.f32 %v887, 1.442695
  %v900 = vpow.pop %v899
  %v901 = vmul.f32 %v888, 1.442695
  %v902 = vpow.pop %v901
  %v903 = vmul.f32 %v889, 1.442695
  %v904 = vpow.pop %v903
  %v905 = vmul.f32 %v890, 1.442695
  %v906 = vpow.pop %v905
  %v907 = vmul.f32 %v891, 1.442695
  %v908 = vpow.pop %v907
  %v909 = vmul.f32 %v892, 1.442695
  %v910 = vpow.pop %v909
  %v911 = vmul.f32 %v893, 1.442695
  %v912 = vpow.pop %v911
  %v913 = vmul.f32 %v894, 1.442695
  %v914 = vpow.pop %v913
  %v915 = vmul.f32 %v895, 1.442695
  %v916 = vpow.pop %v915
  %v917 = vmul.f32 %v896, 1.442695
  %v918 = vpow.pop %v917
  %v919 = vmul.f32 %v897, 1.442695
  %v920 = vpow.pop %v919
  %v921 = vmul.f32 %v898, 1.442695
  %v922 = vpow.pop %v921
  %v923 = vadd.f32 %v900, 1.0
  %v924 = vadd.f32 %v902, 1.0
  %v925 = vadd.f32 %v904, 1.0
  %v926 = vadd.f32 %v906, 1.0
  %v927 = vadd.f32 %v908, 1.0
  %v928 = vadd.f32 %v910, 1.0
  %v929 = vadd.f32 %v912, 1.0
  %v930 = vadd.f32 %v914, 1.0
  %v931 = vadd.f32 %v916, 1.0
  %v932 = vadd.f32 %v918, 1.0
  %v933 = vadd.f32 %v920, 1.0
  %v934 = vadd.f32 %v922, 1.0
  %v935 = vrcp.pop %v923
  %v936 = vmul.f32 1.0, %v935
  %v937 = vrcp.pop %v924
  %v938 = vmul.f32 1.0, %v937
  %v939 = vrcp.pop %v925
  %v940 = vmul.f32 1.0, %v939
  %v941 = vrcp.pop %v926
  %v942 = vmul.f32 1.0, %v941
  %v943 = vrcp.pop %v927
  %v944 = vmul.f32 1.0, %v943
  %v945 = vrcp.pop %v928
  %v946 = vmul.f32 1.0, %v945
  %v947 = vrcp.pop %v929
  %v948 = vmul.f32 1.0, %v947
  %v949 = vrcp.pop %v930
  %v950 = vmul.f32 1.0, %v949
  %v951 = vrcp.pop %v931
  %v952 = vmul.f32 1.0, %v951
  %v953 = vrcp.pop %v932
  %v954 = vmul.f32 1.0, %v953
  %v955 = vrcp.pop %v933
  %v956 = vmul.f32 1.0, %v955
  %v957 = vrcp.pop %v934
  %v958 = vmul.f32 1.0, %v957
  %v959 = vpack.c.bf16 %v938, %v936
  %v960 = vpack.c.bf16 %v942, %v940
  %v961 = vpack.c.bf16 %v946, %v944
  %v962 = vpack.c.bf16 %v950, %v948
  %v963 = vpack.c.bf16 %v954, %v952
  %v964 = vpack.c.bf16 %v958, %v956
  %s965 = scalar_lea.vmem [#allocation2], 96
  %966 = vst.msk [vmem:[%s965] sm:$0xff] %vm439, %v959
  %967 = vst.msk [vmem:[%s965 + $0x8] sm:$0xff] %vm439, %v960
  %968 = vst.msk [vmem:[%s965 + $0x10] sm:$0xff] %vm439, %v961
  %969 = vst.msk [vmem:[%s965 + $0x18] sm:$0xff] %vm439, %v962
  %970 = vst.msk [vmem:[%s965 + $0x20] sm:$0xff] %vm439, %v963
  %971 = vst.msk [vmem:[%s965 + $0x28] sm:$0xff] %vm439, %v964
  %s972 = scalar_lea.vmem %s0, 96
  %v973 = vld [vmem:[%s972] sm:$0xf]
  %v974 = vld [vmem:[%s972 + $0x4] sm:$0xf]
  %v975 = vld [vmem:[%s972 + $0x8] sm:$0xf]
  %v976 = vld [vmem:[%s972 + $0xc] sm:$0xf]
  %v977 = vld [vmem:[%s972 + $0x10] sm:$0xf]
  %v978 = vld [vmem:[%s972 + $0x14] sm:$0xf]
  %v979 = vld [vmem:[%s972 + $0x18] sm:$0xf]
  %v980 = vld [vmem:[%s972 + $0x1c] sm:$0xf]
  %v981 = vld [vmem:[%s972 + $0x20] sm:$0xf]
  %v982 = vld [vmem:[%s972 + $0x24] sm:$0xf]
  %v983 = vld [vmem:[%s972 + $0x28] sm:$0xf]
  %v984 = vld [vmem:[%s972 + $0x2c] sm:$0xf]
  %v985 = vld [vmem:[%s972 + $0x30] sm:$0xf]
  %v986 = vld [vmem:[%s972 + $0x34] sm:$0xf]
  %v987 = vld [vmem:[%s972 + $0x38] sm:$0xf]
  %v988 = vld [vmem:[%s972 + $0x3c] sm:$0xf]
  %v989 = vld [vmem:[%s972 + $0x40] sm:$0xf]
  %v990 = vld [vmem:[%s972 + $0x44] sm:$0xf]
  %v991 = vld [vmem:[%s972 + $0x48] sm:$0xf]
  %v992 = vld [vmem:[%s972 + $0x4c] sm:$0xf]
  %v993 = vld [vmem:[%s972 + $0x50] sm:$0xf]
  %v994 = vld [vmem:[%s972 + $0x54] sm:$0xf]
  %v995 = vld [vmem:[%s972 + $0x58] sm:$0xf]
  %v996 = vld [vmem:[%s972 + $0x5c] sm:$0xf]
  %v1021 = vunpack.c.l.b16 %v973
  %v1022 = vunpack.c.l.b16 %v974
  %v1023 = vunpack.c.l.b16 %v975
  %v1024 = vunpack.c.l.b16 %v976
  %v1025 = vunpack.c.l.b16 %v977
  %v1026 = vunpack.c.l.b16 %v978
  %v1027 = vunpack.c.l.b16 %v979
  %v1028 = vunpack.c.l.b16 %v980
  %v1029 = vunpack.c.l.b16 %v981
  %v1030 = vunpack.c.l.b16 %v982
  %v1031 = vunpack.c.l.b16 %v983
  %v1032 = vunpack.c.l.b16 %v984
  %v1033 = vunpack.c.l.b16 %v985
  %v1034 = vunpack.c.l.b16 %v986
  %v1035 = vunpack.c.l.b16 %v987
  %v1036 = vunpack.c.l.b16 %v988
  %v1037 = vunpack.c.l.b16 %v989
  %v1038 = vunpack.c.l.b16 %v990
  %v1039 = vunpack.c.l.b16 %v991
  %v1040 = vunpack.c.l.b16 %v992
  %v1041 = vunpack.c.l.b16 %v993
  %v1042 = vunpack.c.l.b16 %v994
  %v1043 = vunpack.c.l.b16 %v995
  %v1044 = vunpack.c.l.b16 %v996
  %v1045 = vpack.c.b16 %v1022, %v1021
  %v1046 = vpack.c.b16 %v1024, %v1023
  %v1047 = vpack.c.b16 %v1026, %v1025
  %v1048 = vpack.c.b16 %v1028, %v1027
  %v1049 = vpack.c.b16 %v1030, %v1029
  %v1050 = vpack.c.b16 %v1032, %v1031
  %v1051 = vpack.c.b16 %v1034, %v1033
  %v1052 = vpack.c.b16 %v1036, %v1035
  %v1053 = vpack.c.b16 %v1038, %v1037
  %v1054 = vpack.c.b16 %v1040, %v1039
  %v1055 = vpack.c.b16 %v1042, %v1041
  %v1056 = vpack.c.b16 %v1044, %v1043
  %1069 = vmatprep.subr.bf16.mxu0 0
  %1070 = vmatpush1.bf16.msra.mxu0 %v1045
  %1071 = vmatprep.subr.bf16.mxu0 0
  %1072 = vmatpush1.bf16.msra.mxu0 %v1046
  %1073 = vmatprep.subr.bf16.mxu0 0
  %1074 = vmatpush1.bf16.msra.mxu0 %v1047
  %1075 = vmatprep.subr.bf16.mxu0 0
  %1076 = vmatpush1.bf16.msra.mxu0 %v1048
  %1077 = vmatprep.subr.bf16.mxu0 0
  %1078 = vmatpush1.bf16.msra.mxu0 %v1049
  %1079 = vmatprep.subr.bf16.mxu0 0
  %1080 = vmatpush1.bf16.msra.mxu0 %v1050
  %1081 = vmatprep.subr.bf16.mxu0 0
  %1082 = vmatpush1.bf16.msra.mxu0 %v1051
  %1083 = vmatprep.subr.bf16.mxu0 0
  %1084 = vmatpush1.bf16.msra.mxu0 %v1052
  %1085 = vmatprep.subr.bf16.mxu0 0
  %1086 = vmatpush1.bf16.msra.mxu0 %v1053
  %1087 = vmatprep.subr.bf16.mxu0 0
  %1088 = vmatpush1.bf16.msra.mxu0 %v1054
  %1089 = vmatprep.subr.bf16.mxu0 0
  %1090 = vmatpush1.bf16.msra.mxu0 %v1055
  %1091 = vmatprep.subr.bf16.mxu0 0
  %1092 = vmatpush1.bf16.msra.mxu0 %v1056
  %1093 = vmatprep.subr.bf16.mxu0 0
  %1094 = vmatpush1.bf16.msra.mxu0 0
  %1095 = vmatprep.subr.bf16.mxu0 0
  %1096 = vmatpush1.bf16.msra.mxu0 0
  %1097 = vmatprep.subr.bf16.mxu0 0
  %1098 = vmatpush1.bf16.msra.mxu0 0
  %1099 = vmatprep.subr.bf16.mxu0 0
  %1100 = vmatpush1.bf16.msra.mxu0 0
  %1101 = vmatprep.mubr.bf16.mxu0 %v263
  %1102 = vmatmul.mubr.bf16.gmra.mrb[0].mxu0 %v171
  %v1103 = vpop.f32.mrb[0].mxu0
  %v1104 = vadd.f32 %v78, %v1103
  %v1105 = vpop.f32.mrb[0].mxu0
  %v1106 = vpop.f32.mrb[0].mxu0
  %v1107 = vadd.f32 %v83, %v1106
  %v1108 = vpop.f32.mrb[0].mxu0
  %1109 = vmatprep.mubr.bf16.mxu0 %v266
  %1110 = vmatmul.mubr.bf16.gmra.mrb[0].mxu0 %v173
  %v1111 = vpop.f32.mrb[0].mxu0
  %v1112 = vadd.f32 %v88, %v1111
  %v1113 = vpop.f32.mrb[0].mxu0
  %v1114 = vpop.f32.mrb[0].mxu0
  %v1115 = vadd.f32 %v93, %v1114
  %v1116 = vpop.f32.mrb[0].mxu0
  %1117 = vmatprep.mubr.bf16.mxu0 %v269
  %1118 = vmatmul.mubr.bf16.gmra.mrb[0].mxu0 %v175
  %v1119 = vpop.f32.mrb[0].mxu0
  %v1120 = vadd.f32 %v98, %v1119
  %v1121 = vpop.f32.mrb[0].mxu0
  %v1122 = vpop.f32.mrb[0].mxu0
  %v1123 = vadd.f32 %v103, %v1122
  %v1124 = vpop.f32.mrb[0].mxu0
  %1125 = vmatprep.mubr.bf16.mxu0 %v272
  %1126 = vmatmul.mubr.bf16.gmra.mrb[0].mxu0 %v177
  %v1127 = vpop.f32.mrb[0].mxu0
  %v1128 = vadd.f32 %v108, %v1127
  %v1129 = vpop.f32.mrb[0].mxu0
  %v1130 = vpop.f32.mrb[0].mxu0
  %v1131 = vadd.f32 %v113, %v1130
  %v1132 = vpop.f32.mrb[0].mxu0
  %1133 = vmatprep.mubr.bf16.mxu0 %v275
  %1134 = vmatmul.mubr.bf16.gmra.mrb[0].mxu0 %v179
  %v1135 = vpop.f32.mrb[0].mxu0
  %v1136 = vadd.f32 %v118, %v1135
  %v1137 = vpop.f32.mrb[0].mxu0
  %v1138 = vpop.f32.mrb[0].mxu0
  %v1139 = vadd.f32 %v123, %v1138
  %v1140 = vpop.f32.mrb[0].mxu0
  %1141 = vmatprep.mubr.bf16.mxu0 %v278
  %1142 = vmatmul.mubr.bf16.gmra.mrb[0].mxu0 %v181
  %v1143 = vpop.f32.mrb[0].mxu0
  %v1144 = vadd.f32 %v128, %v1143
  %v1145 = vpop.f32.mrb[0].mxu0
  %v1146 = vpop.f32.mrb[0].mxu0
  %v1147 = vadd.f32 %v133, %v1146
  %v1148 = vpop.f32.mrb[0].mxu0
  %1149 = vdwg.mxu0
  %v1150 = vxor.u32 %v1104, 2147483648
  %v1151 = vxor.u32 %v1107, 2147483648
  %v1152 = vxor.u32 %v1112, 2147483648
  %v1153 = vxor.u32 %v1115, 2147483648
  %v1154 = vxor.u32 %v1120, 2147483648
  %v1155 = vxor.u32 %v1123, 2147483648
  %v1156 = vxor.u32 %v1128, 2147483648
  %v1157 = vxor.u32 %v1131, 2147483648
  %v1158 = vxor.u32 %v1136, 2147483648
  %v1159 = vxor.u32 %v1139, 2147483648
  %v1160 = vxor.u32 %v1144, 2147483648
  %v1161 = vxor.u32 %v1147, 2147483648
  %v1162 = vmul.f32 %v1150, 1.442695
  %v1163 = vpow.pop %v1162
  %v1164 = vmul.f32 %v1151, 1.442695
  %v1165 = vpow.pop %v1164
  %v1166 = vmul.f32 %v1152, 1.442695
  %v1167 = vpow.pop %v1166
  %v1168 = vmul.f32 %v1153, 1.442695
  %v1169 = vpow.pop %v1168
  %v1170 = vmul.f32 %v1154, 1.442695
  %v1171 = vpow.pop %v1170
  %v1172 = vmul.f32 %v1155, 1.442695
  %v1173 = vpow.pop %v1172
  %v1174 = vmul.f32 %v1156, 1.442695
  %v1175 = vpow.pop %v1174
  %v1176 = vmul.f32 %v1157, 1.442695
  %v1177 = vpow.pop %v1176
  %v1178 = vmul.f32 %v1158, 1.442695
  %v1179 = vpow.pop %v1178
  %v1180 = vmul.f32 %v1159, 1.442695
  %v1181 = vpow.pop %v1180
  %v1182 = vmul.f32 %v1160, 1.442695
  %v1183 = vpow.pop %v1182
  %v1184 = vmul.f32 %v1161, 1.442695
  %v1185 = vpow.pop %v1184
  %v1186 = vadd.f32 %v1163, 1.0
  %v1187 = vadd.f32 %v1165, 1.0
  %v1188 = vadd.f32 %v1167, 1.0
  %v1189 = vadd.f32 %v1169, 1.0
  %v1190 = vadd.f32 %v1171, 1.0
  %v1191 = vadd.f32 %v1173, 1.0
  %v1192 = vadd.f32 %v1175, 1.0
  %v1193 = vadd.f32 %v1177, 1.0
  %v1194 = vadd.f32 %v1179, 1.0
  %v1195 = vadd.f32 %v1181, 1.0
  %v1196 = vadd.f32 %v1183, 1.0
  %v1197 = vadd.f32 %v1185, 1.0
  %v1198 = vrcp.pop %v1186
  %v1199 = vmul.f32 1.0, %v1198
  %v1200 = vrcp.pop %v1187
  %v1201 = vmul.f32 1.0, %v1200
  %v1202 = vrcp.pop %v1188
  %v1203 = vmul.f32 1.0, %v1202
  %v1204 = vrcp.pop %v1189
  %v1205 = vmul.f32 1.0, %v1204
  %v1206 = vrcp.pop %v1190
  %v1207 = vmul.f32 1.0, %v1206
  %v1208 = vrcp.pop %v1191
  %v1209 = vmul.f32 1.0, %v1208
  %v1210 = vrcp.pop %v1192
  %v1211 = vmul.f32 1.0, %v1210
  %v1212 = vrcp.pop %v1193
  %v1213 = vmul.f32 1.0, %v1212
  %v1214 = vrcp.pop %v1194
  %v1215 = vmul.f32 1.0, %v1214
  %v1216 = vrcp.pop %v1195
  %v1217 = vmul.f32 1.0, %v1216
  %v1218 = vrcp.pop %v1196
  %v1219 = vmul.f32 1.0, %v1218
  %v1220 = vrcp.pop %v1197
  %v1221 = vmul.f32 1.0, %v1220
  %v1222 = vpack.c.bf16 %v1201, %v1199
  %v1223 = vpack.c.bf16 %v1205, %v1203
  %v1224 = vpack.c.bf16 %v1209, %v1207
  %v1225 = vpack.c.bf16 %v1213, %v1211
  %v1226 = vpack.c.bf16 %v1217, %v1215
  %v1227 = vpack.c.bf16 %v1221, %v1219
  %s1228 = scalar_lea.vmem [#allocation2], 144
  %1229 = vst.msk [vmem:[%s1228] sm:$0xff] %vm439, %v1222
  %1230 = vst.msk [vmem:[%s1228 + $0x8] sm:$0xff] %vm439, %v1223
  %1231 = vst.msk [vmem:[%s1228 + $0x10] sm:$0xff] %vm439, %v1224
  %1232 = vst.msk [vmem:[%s1228 + $0x18] sm:$0xff] %vm439, %v1225
  %1233 = vst.msk [vmem:[%s1228 + $0x20] sm:$0xff] %vm439, %v1226
  %1234 = vst.msk [vmem:[%s1228 + $0x28] sm:$0xff] %vm439, %v1227
  %s1235 = scalar_lea.vmem %s0, 128
  %v1236 = vld [vmem:[%s1235] sm:$0xf]
  %v1237 = vld [vmem:[%s1235 + $0x4] sm:$0xf]
  %v1238 = vld [vmem:[%s1235 + $0x8] sm:$0xf]
  %v1239 = vld [vmem:[%s1235 + $0xc] sm:$0xf]
  %v1240 = vld [vmem:[%s1235 + $0x10] sm:$0xf]
  %v1241 = vld [vmem:[%s1235 + $0x14] sm:$0xf]
  %v1242 = vld [vmem:[%s1235 + $0x18] sm:$0xf]
  %v1243 = vld [vmem:[%s1235 + $0x1c] sm:$0xf]
  %v1244 = vld [vmem:[%s1235 + $0x20] sm:$0xf]
  %v1245 = vld [vmem:[%s1235 + $0x24] sm:$0xf]
  %v1246 = vld [vmem:[%s1235 + $0x28] sm:$0xf]
  %v1247 = vld [vmem:[%s1235 + $0x2c] sm:$0xf]
  %v1248 = vld [vmem:[%s1235 + $0x30] sm:$0xf]
  %v1249 = vld [vmem:[%s1235 + $0x34] sm:$0xf]
  %v1250 = vld [vmem:[%s1235 + $0x38] sm:$0xf]
  %v1251 = vld [vmem:[%s1235 + $0x3c] sm:$0xf]
  %v1252 = vld [vmem:[%s1235 + $0x40] sm:$0xf]
  %v1253 = vld [vmem:[%s1235 + $0x44] sm:$0xf]
  %v1254 = vld [vmem:[%s1235 + $0x48] sm:$0xf]
  %v1255 = vld [vmem:[%s1235 + $0x4c] sm:$0xf]
  %v1256 = vld [vmem:[%s1235 + $0x50] sm:$0xf]
  %v1257 = vld [vmem:[%s1235 + $0x54] sm:$0xf]
  %v1258 = vld [vmem:[%s1235 + $0x58] sm:$0xf]
  %v1259 = vld [vmem:[%s1235 + $0x5c] sm:$0xf]
  %v1284 = vunpack.c.l.b16 %v1236
  %v1285 = vunpack.c.l.b16 %v1237
  %v1286 = vunpack.c.l.b16 %v1238
  %v1287 = vunpack.c.l.b16 %v1239
  %v1288 = vunpack.c.l.b16 %v1240
  %v1289 = vunpack.c.l.b16 %v1241
  %v1290 = vunpack.c.l.b16 %v1242
  %v1291 = vunpack.c.l.b16 %v1243
  %v1292 = vunpack.c.l.b16 %v1244
  %v1293 = vunpack.c.l.b16 %v1245
  %v1294 = vunpack.c.l.b16 %v1246
  %v1295 = vunpack.c.l.b16 %v1247
  %v1296 = vunpack.c.l.b16 %v1248
  %v1297 = vunpack.c.l.b16 %v1249
  %v1298 = vunpack.c.l.b16 %v1250
  %v1299 = vunpack.c.l.b16 %v1251
  %v1300 = vunpack.c.l.b16 %v1252
  %v1301 = vunpack.c.l.b16 %v1253
  %v1302 = vunpack.c.l.b16 %v1254
  %v1303 = vunpack.c.l.b16 %v1255
  %v1304 = vunpack.c.l.b16 %v1256
  %v1305 = vunpack.c.l.b16 %v1257
  %v1306 = vunpack.c.l.b16 %v1258
  %v1307 = vunpack.c.l.b16 %v1259
  %v1308 = vpack.c.b16 %v1285, %v1284
  %v1309 = vpack.c.b16 %v1287, %v1286
  %v1310 = vpack.c.b16 %v1289, %v1288
  %v1311 = vpack.c.b16 %v1291, %v1290
  %v1312 = vpack.c.b16 %v1293, %v1292
  %v1313 = vpack.c.b16 %v1295, %v1294
  %v1314 = vpack.c.b16 %v1297, %v1296
  %v1315 = vpack.c.b16 %v1299, %v1298
  %v1316 = vpack.c.b16 %v1301, %v1300
  %v1317 = vpack.c.b16 %v1303, %v1302
  %v1318 = vpack.c.b16 %v1305, %v1304
  %v1319 = vpack.c.b16 %v1307, %v1306
  %1332 = vmatprep.subr.bf16.mxu0 0
  %1333 = vmatpush1.bf16.msra.mxu0 %v1308
  %1334 = vmatprep.subr.bf16.mxu0 0
  %1335 = vmatpush1.bf16.msra.mxu0 %v1309
  %1336 = vmatprep.subr.bf16.mxu0 0
  %1337 = vmatpush1.bf16.msra.mxu0 %v1310
  %1338 = vmatprep.subr.bf16.mxu0 0
  %1339 = vmatpush1.bf16.msra.mxu0 %v1311
  %1340 = vmatprep.subr.bf16.mxu0 0
  %1341 = vmatpush1.bf16.msra.mxu0 %v1312
  %1342 = vmatprep.subr.bf16.mxu0 0
  %1343 = vmatpush1.bf16.msra.mxu0 %v1313
  %1344 = vmatprep.subr.bf16.mxu0 0
  %1345 = vmatpush1.bf16.msra.mxu0 %v1314
  %1346 = vmatprep.subr.bf16.mxu0 0
  %1347 = vmatpush1.bf16.msra.mxu0 %v1315
  %1348 = vmatprep.subr.bf16.mxu0 0
  %1349 = vmatpush1.bf16.msra.mxu0 %v1316
  %1350 = vmatprep.subr.bf16.mxu0 0
  %1351 = vmatpush1.bf16.msra.mxu0 %v1317
  %1352 = vmatprep.subr.bf16.mxu0 0
  %1353 = vmatpush1.bf16.msra.mxu0 %v1318
  %1354 = vmatprep.subr.bf16.mxu0 0
  %1355 = vmatpush1.bf16.msra.mxu0 %v1319
  %1356 = vmatprep.subr.bf16.mxu0 0
  %1357 = vmatpush1.bf16.msra.mxu0 0
  %1358 = vmatprep.subr.bf16.mxu0 0
  %1359 = vmatpush1.bf16.msra.mxu0 0
  %1360 = vmatprep.subr.bf16.mxu0 0
  %1361 = vmatpush1.bf16.msra.mxu0 0
  %1362 = vmatprep.subr.bf16.mxu0 0
  %1363 = vmatpush1.bf16.msra.mxu0 0
  %1364 = vmatprep.mubr.bf16.mxu0 %v263
  %1365 = vmatmul.mubr.bf16.gmra.mrb[0].mxu0 %v171
  %v1366 = vpop.f32.mrb[0].mxu0
  %v1367 = vadd.f32 %v78, %v1366
  %v1368 = vpop.f32.mrb[0].mxu0
  %v1369 = vpop.f32.mrb[0].mxu0
  %v1370 = vadd.f32 %v83, %v1369
  %v1371 = vpop.f32.mrb[0].mxu0
  %1372 = vmatprep.mubr.bf16.mxu0 %v266
  %1373 = vmatmul.mubr.bf16.gmra.mrb[0].mxu0 %v173
  %v1374 = vpop.f32.mrb[0].mxu0
  %v1375 = vadd.f32 %v88, %v1374
  %v1376 = vpop.f32.mrb[0].mxu0
  %v1377 = vpop.f32.mrb[0].mxu0
  %v1378 = vadd.f32 %v93, %v1377
  %v1379 = vpop.f32.mrb[0].mxu0
  %1380 = vmatprep.mubr.bf16.mxu0 %v269
  %1381 = vmatmul.mubr.bf16.gmra.mrb[0].mxu0 %v175
  %v1382 = vpop.f32.mrb[0].mxu0
  %v1383 = vadd.f32 %v98, %v1382
  %v1384 = vpop.f32.mrb[0].mxu0
  %v1385 = vpop.f32.mrb[0].mxu0
  %v1386 = vadd.f32 %v103, %v1385
  %v1387 = vpop.f32.mrb[0].mxu0
  %1388 = vmatprep.mubr.bf16.mxu0 %v272
  %1389 = vmatmul.mubr.bf16.gmra.mrb[0].mxu0 %v177
  %v1390 = vpop.f32.mrb[0].mxu0
  %v1391 = vadd.f32 %v108, %v1390
  %v1392 = vpop.f32.mrb[0].mxu0
  %v1393 = vpop.f32.mrb[0].mxu0
  %v1394 = vadd.f32 %v113, %v1393
  %v1395 = vpop.f32.mrb[0].mxu0
  %1396 = vmatprep.mubr.bf16.mxu0 %v275
  %1397 = vmatmul.mubr.bf16.gmra.mrb[0].mxu0 %v179
  %v1398 = vpop.f32.mrb[0].mxu0
  %v1399 = vadd.f32 %v118, %v1398
  %v1400 = vpop.f32.mrb[0].mxu0
  %v1401 = vpop.f32.mrb[0].mxu0
  %v1402 = vadd.f32 %v123, %v1401
  %v1403 = vpop.f32.mrb[0].mxu0
  %1404 = vmatprep.mubr.bf16.mxu0 %v278
  %1405 = vmatmul.mubr.bf16.gmra.mrb[0].mxu0 %v181
  %v1406 = vpop.f32.mrb[0].mxu0
  %v1407 = vadd.f32 %v128, %v1406
  %v1408 = vpop.f32.mrb[0].mxu0
  %v1409 = vpop.f32.mrb[0].mxu0
  %v1410 = vadd.f32 %v133, %v1409
  %v1411 = vpop.f32.mrb[0].mxu0
  %1412 = vdwg.mxu0
  %v1413 = vxor.u32 %v1367, 2147483648
  %v1414 = vxor.u32 %v1370, 2147483648
  %v1415 = vxor.u32 %v1375, 2147483648
  %v1416 = vxor.u32 %v1378, 2147483648
  %v1417 = vxor.u32 %v1383, 2147483648
  %v1418 = vxor.u32 %v1386, 2147483648
  %v1419 = vxor.u32 %v1391, 2147483648
  %v1420 = vxor.u32 %v1394, 2147483648
  %v1421 = vxor.u32 %v1399, 2147483648
  %v1422 = vxor.u32 %v1402, 2147483648
  %v1423 = vxor.u32 %v1407, 2147483648
  %v1424 = vxor.u32 %v1410, 2147483648
  %v1425 = vmul.f32 %v1413, 1.442695
  %v1426 = vpow.pop %v1425
  %v1427 = vmul.f32 %v1414, 1.442695
  %v1428 = vpow.pop %v1427
  %v1429 = vmul.f32 %v1415, 1.442695
  %v1430 = vpow.pop %v1429
  %v1431 = vmul.f32 %v1416, 1.442695
  %v1432 = vpow.pop %v1431
  %v1433 = vmul.f32 %v1417, 1.442695
  %v1434 = vpow.pop %v1433
  %v1435 = vmul.f32 %v1418, 1.442695
  %v1436 = vpow.pop %v1435
  %v1437 = vmul.f32 %v1419, 1.442695
  %v1438 = vpow.pop %v1437
  %v1439 = vmul.f32 %v1420, 1.442695
  %v1440 = vpow.pop %v1439
  %v1441 = vmul.f32 %v1421, 1.442695
  %v1442 = vpow.pop %v1441
  %v1443 = vmul.f32 %v1422, 1.442695
  %v1444 = vpow.pop %v1443
  %v1445 = vmul.f32 %v1423, 1.442695
  %v1446 = vpow.pop %v1445
  %v1447 = vmul.f32 %v1424, 1.442695
  %v1448 = vpow.pop %v1447
  %v1449 = vadd.f32 %v1426, 1.0
  %v1450 = vadd.f32 %v1428, 1.0
  %v1451 = vadd.f32 %v1430, 1.0
  %v1452 = vadd.f32 %v1432, 1.0
  %v1453 = vadd.f32 %v1434, 1.0
  %v1454 = vadd.f32 %v1436, 1.0
  %v1455 = vadd.f32 %v1438, 1.0
  %v1456 = vadd.f32 %v1440, 1.0
  %v1457 = vadd.f32 %v1442, 1.0
  %v1458 = vadd.f32 %v1444, 1.0
  %v1459 = vadd.f32 %v1446, 1.0
  %v1460 = vadd.f32 %v1448, 1.0
  %v1461 = vrcp.pop %v1449
  %v1462 = vmul.f32 1.0, %v1461
  %v1463 = vrcp.pop %v1450
  %v1464 = vmul.f32 1.0, %v1463
  %v1465 = vrcp.pop %v1451
  %v1466 = vmul.f32 1.0, %v1465
  %v1467 = vrcp.pop %v1452
  %v1468 = vmul.f32 1.0, %v1467
  %v1469 = vrcp.pop %v1453
  %v1470 = vmul.f32 1.0, %v1469
  %v1471 = vrcp.pop %v1454
  %v1472 = vmul.f32 1.0, %v1471
  %v1473 = vrcp.pop %v1455
  %v1474 = vmul.f32 1.0, %v1473
  %v1475 = vrcp.pop %v1456
  %v1476 = vmul.f32 1.0, %v1475
  %v1477 = vrcp.pop %v1457
  %v1478 = vmul.f32 1.0, %v1477
  %v1479 = vrcp.pop %v1458
  %v1480 = vmul.f32 1.0, %v1479
  %v1481 = vrcp.pop %v1459
  %v1482 = vmul.f32 1.0, %v1481
  %v1483 = vrcp.pop %v1460
  %v1484 = vmul.f32 1.0, %v1483
  %v1485 = vpack.c.bf16 %v1464, %v1462
  %v1486 = vpack.c.bf16 %v1468, %v1466
  %v1487 = vpack.c.bf16 %v1472, %v1470
  %v1488 = vpack.c.bf16 %v1476, %v1474
  %v1489 = vpack.c.bf16 %v1480, %v1478
  %v1490 = vpack.c.bf16 %v1484, %v1482
  %s1491 = scalar_lea.vmem [#allocation2], 192
  %1492 = vst.msk [vmem:[%s1491] sm:$0xff] %vm439, %v1485
  %1493 = vst.msk [vmem:[%s1491 + $0x8] sm:$0xff] %vm439, %v1486
  %1494 = vst.msk [vmem:[%s1491 + $0x10] sm:$0xff] %vm439, %v1487
  %1495 = vst.msk [vmem:[%s1491 + $0x18] sm:$0xff] %vm439, %v1488
  %1496 = vst.msk [vmem:[%s1491 + $0x20] sm:$0xff] %vm439, %v1489
  %1497 = vst.msk [vmem:[%s1491 + $0x28] sm:$0xff] %vm439, %v1490
  %s1498 = scalar_lea.vmem %s0, 160
  %v1499 = vld [vmem:[%s1498] sm:$0xf]
  %v1500 = vld [vmem:[%s1498 + $0x4] sm:$0xf]
  %v1501 = vld [vmem:[%s1498 + $0x8] sm:$0xf]
  %v1502 = vld [vmem:[%s1498 + $0xc] sm:$0xf]
  %v1503 = vld [vmem:[%s1498 + $0x10] sm:$0xf]
  %v1504 = vld [vmem:[%s1498 + $0x14] sm:$0xf]
  %v1505 = vld [vmem:[%s1498 + $0x18] sm:$0xf]
  %v1506 = vld [vmem:[%s1498 + $0x1c] sm:$0xf]
  %v1507 = vld [vmem:[%s1498 + $0x20] sm:$0xf]
  %v1508 = vld [vmem:[%s1498 + $0x24] sm:$0xf]
  %v1509 = vld [vmem:[%s1498 + $0x28] sm:$0xf]
  %v1510 = vld [vmem:[%s1498 + $0x2c] sm:$0xf]
  %v1511 = vld [vmem:[%s1498 + $0x30] sm:$0xf]
  %v1512 = vld [vmem:[%s1498 + $0x34] sm:$0xf]
  %v1513 = vld [vmem:[%s1498 + $0x38] sm:$0xf]
  %v1514 = vld [vmem:[%s1498 + $0x3c] sm:$0xf]
  %v1515 = vld [vmem:[%s1498 + $0x40] sm:$0xf]
  %v1516 = vld [vmem:[%s1498 + $0x44] sm:$0xf]
  %v1517 = vld [vmem:[%s1498 + $0x48] sm:$0xf]
  %v1518 = vld [vmem:[%s1498 + $0x4c] sm:$0xf]
  %v1519 = vld [vmem:[%s1498 + $0x50] sm:$0xf]
  %v1520 = vld [vmem:[%s1498 + $0x54] sm:$0xf]
  %v1521 = vld [vmem:[%s1498 + $0x58] sm:$0xf]
  %v1522 = vld [vmem:[%s1498 + $0x5c] sm:$0xf]
  %v1547 = vunpack.c.l.b16 %v1499
  %v1548 = vunpack.c.l.b16 %v1500
  %v1549 = vunpack.c.l.b16 %v1501
  %v1550 = vunpack.c.l.b16 %v1502
  %v1551 = vunpack.c.l.b16 %v1503
  %v1552 = vunpack.c.l.b16 %v1504
  %v1553 = vunpack.c.l.b16 %v1505
  %v1554 = vunpack.c.l.b16 %v1506
  %v1555 = vunpack.c.l.b16 %v1507
  %v1556 = vunpack.c.l.b16 %v1508
  %v1557 = vunpack.c.l.b16 %v1509
  %v1558 = vunpack.c.l.b16 %v1510
  %v1559 = vunpack.c.l.b16 %v1511
  %v1560 = vunpack.c.l.b16 %v1512
  %v1561 = vunpack.c.l.b16 %v1513
  %v1562 = vunpack.c.l.b16 %v1514
  %v1563 = vunpack.c.l.b16 %v1515
  %v1564 = vunpack.c.l.b16 %v1516
  %v1565 = vunpack.c.l.b16 %v1517
  %v1566 = vunpack.c.l.b16 %v1518
  %v1567 = vunpack.c.l.b16 %v1519
  %v1568 = vunpack.c.l.b16 %v1520
  %v1569 = vunpack.c.l.b16 %v1521
  %v1570 = vunpack.c.l.b16 %v1522
  %v1571 = vpack.c.b16 %v1548, %v1547
  %v1572 = vpack.c.b16 %v1550, %v1549
  %v1573 = vpack.c.b16 %v1552, %v1551
  %v1574 = vpack.c.b16 %v1554, %v1553
  %v1575 = vpack.c.b16 %v1556, %v1555
  %v1576 = vpack.c.b16 %v1558, %v1557
  %v1577 = vpack.c.b16 %v1560, %v1559
  %v1578 = vpack.c.b16 %v1562, %v1561
  %v1579 = vpack.c.b16 %v1564, %v1563
  %v1580 = vpack.c.b16 %v1566, %v1565
  %v1581 = vpack.c.b16 %v1568, %v1567
  %v1582 = vpack.c.b16 %v1570, %v1569
  %1595 = vmatprep.subr.bf16.mxu0 0
  %1596 = vmatpush1.bf16.msra.mxu0 %v1571
  %1597 = vmatprep.subr.bf16.mxu0 0
  %1598 = vmatpush1.bf16.msra.mxu0 %v1572
  %1599 = vmatprep.subr.bf16.mxu0 0
  %1600 = vmatpush1.bf16.msra.mxu0 %v1573
  %1601 = vmatprep.subr.bf16.mxu0 0
  %1602 = vmatpush1.bf16.msra.mxu0 %v1574
  %1603 = vmatprep.subr.bf16.mxu0 0
  %1604 = vmatpush1.bf16.msra.mxu0 %v1575
  %1605 = vmatprep.subr.bf16.mxu0 0
  %1606 = vmatpush1.bf16.msra.mxu0 %v1576
  %1607 = vmatprep.subr.bf16.mxu0 0
  %1608 = vmatpush1.bf16.msra.mxu0 %v1577
  %1609 = vmatprep.subr.bf16.mxu0 0
  %1610 = vmatpush1.bf16.msra.mxu0 %v1578
  %1611 = vmatprep.subr.bf16.mxu0 0
  %1612 = vmatpush1.bf16.msra.mxu0 %v1579
  %1613 = vmatprep.subr.bf16.mxu0 0
  %1614 = vmatpush1.bf16.msra.mxu0 %v1580
  %1615 = vmatprep.subr.bf16.mxu0 0
  %1616 = vmatpush1.bf16.msra.mxu0 %v1581
  %1617 = vmatprep.subr.bf16.mxu0 0
  %1618 = vmatpush1.bf16.msra.mxu0 %v1582
  %1619 = vmatprep.subr.bf16.mxu0 0
  %1620 = vmatpush1.bf16.msra.mxu0 0
  %1621 = vmatprep.subr.bf16.mxu0 0
  %1622 = vmatpush1.bf16.msra.mxu0 0
  %1623 = vmatprep.subr.bf16.mxu0 0
  %1624 = vmatpush1.bf16.msra.mxu0 0
  %1625 = vmatprep.subr.bf16.mxu0 0
  %1626 = vmatpush1.bf16.msra.mxu0 0
  %1627 = vmatprep.mubr.bf16.mxu0 %v263
  %1628 = vmatmul.mubr.bf16.gmra.mrb[0].mxu0 %v171
  %v1629 = vpop.f32.mrb[0].mxu0
  %v1630 = vadd.f32 %v78, %v1629
  %v1631 = vpop.f32.mrb[0].mxu0
  %v1632 = vpop.f32.mrb[0].mxu0
  %v1633 = vadd.f32 %v83, %v1632
  %v1634 = vpop.f32.mrb[0].mxu0
  %1635 = vmatprep.mubr.bf16.mxu0 %v266
  %1636 = vmatmul.mubr.bf16.gmra.mrb[0].mxu0 %v173
  %v1637 = vpop.f32.mrb[0].mxu0
  %v1638 = vadd.f32 %v88, %v1637
  %v1639 = vpop.f32.mrb[0].mxu0
  %v1640 = vpop.f32.mrb[0].mxu0
  %v1641 = vadd.f32 %v93, %v1640
  %v1642 = vpop.f32.mrb[0].mxu0
  %1643 = vmatprep.mubr.bf16.mxu0 %v269
  %1644 = vmatmul.mubr.bf16.gmra.mrb[0].mxu0 %v175
  %v1645 = vpop.f32.mrb[0].mxu0
  %v1646 = vadd.f32 %v98, %v1645
  %v1647 = vpop.f32.mrb[0].mxu0
  %v1648 = vpop.f32.mrb[0].mxu0
  %v1649 = vadd.f32 %v103, %v1648
  %v1650 = vpop.f32.mrb[0].mxu0
  %1651 = vmatprep.mubr.bf16.mxu0 %v272
  %1652 = vmatmul.mubr.bf16.gmra.mrb[0].mxu0 %v177
  %v1653 = vpop.f32.mrb[0].mxu0
  %v1654 = vadd.f32 %v108, %v1653
  %v1655 = vpop.f32.mrb[0].mxu0
  %v1656 = vpop.f32.mrb[0].mxu0
  %v1657 = vadd.f32 %v113, %v1656
  %v1658 = vpop.f32.mrb[0].mxu0
  %1659 = vmatprep.mubr.bf16.mxu0 %v275
  %1660 = vmatmul.mubr.bf16.gmra.mrb[0].mxu0 %v179
  %v1661 = vpop.f32.mrb[0].mxu0
  %v1662 = vadd.f32 %v118, %v1661
  %v1663 = vpop.f32.mrb[0].mxu0
  %v1664 = vpop.f32.mrb[0].mxu0
  %v1665 = vadd.f32 %v123, %v1664
  %v1666 = vpop.f32.mrb[0].mxu0
  %1667 = vmatprep.mubr.bf16.mxu0 %v278
  %1668 = vmatmul.mubr.bf16.gmra.mrb[0].mxu0 %v181
  %v1669 = vpop.f32.mrb[0].mxu0
  %v1670 = vadd.f32 %v128, %v1669
  %v1671 = vpop.f32.mrb[0].mxu0
  %v1672 = vpop.f32.mrb[0].mxu0
  %v1673 = vadd.f32 %v133, %v1672
  %v1674 = vpop.f32.mrb[0].mxu0
  %1675 = vdwg.mxu0
  %v1676 = vxor.u32 %v1630, 2147483648
  %v1677 = vxor.u32 %v1633, 2147483648
  %v1678 = vxor.u32 %v1638, 2147483648
  %v1679 = vxor.u32 %v1641, 2147483648
  %v1680 = vxor.u32 %v1646, 2147483648
  %v1681 = vxor.u32 %v1649, 2147483648
  %v1682 = vxor.u32 %v1654, 2147483648
  %v1683 = vxor.u32 %v1657, 2147483648
  %v1684 = vxor.u32 %v1662, 2147483648
  %v1685 = vxor.u32 %v1665, 2147483648
  %v1686 = vxor.u32 %v1670, 2147483648
  %v1687 = vxor.u32 %v1673, 2147483648
  %v1688 = vmul.f32 %v1676, 1.442695
  %v1689 = vpow.pop %v1688
  %v1690 = vmul.f32 %v1677, 1.442695
  %v1691 = vpow.pop %v1690
  %v1692 = vmul.f32 %v1678, 1.442695
  %v1693 = vpow.pop %v1692
  %v1694 = vmul.f32 %v1679, 1.442695
  %v1695 = vpow.pop %v1694
  %v1696 = vmul.f32 %v1680, 1.442695
  %v1697 = vpow.pop %v1696
  %v1698 = vmul.f32 %v1681, 1.442695
  %v1699 = vpow.pop %v1698
  %v1700 = vmul.f32 %v1682, 1.442695
  %v1701 = vpow.pop %v1700
  %v1702 = vmul.f32 %v1683, 1.442695
  %v1703 = vpow.pop %v1702
  %v1704 = vmul.f32 %v1684, 1.442695
  %v1705 = vpow.pop %v1704
  %v1706 = vmul.f32 %v1685, 1.442695
  %v1707 = vpow.pop %v1706
  %v1708 = vmul.f32 %v1686, 1.442695
  %v1709 = vpow.pop %v1708
  %v1710 = vmul.f32 %v1687, 1.442695
  %v1711 = vpow.pop %v1710
  %v1712 = vadd.f32 %v1689, 1.0
  %v1713 = vadd.f32 %v1691, 1.0
  %v1714 = vadd.f32 %v1693, 1.0
  %v1715 = vadd.f32 %v1695, 1.0
  %v1716 = vadd.f32 %v1697, 1.0
  %v1717 = vadd.f32 %v1699, 1.0
  %v1718 = vadd.f32 %v1701, 1.0
  %v1719 = vadd.f32 %v1703, 1.0
  %v1720 = vadd.f32 %v1705, 1.0
  %v1721 = vadd.f32 %v1707, 1.0
  %v1722 = vadd.f32 %v1709, 1.0
  %v1723 = vadd.f32 %v1711, 1.0
  %v1724 = vrcp.pop %v1712
  %v1725 = vmul.f32 1.0, %v1724
  %v1726 = vrcp.pop %v1713
  %v1727 = vmul.f32 1.0, %v1726
  %v1728 = vrcp.pop %v1714
  %v1729 = vmul.f32 1.0, %v1728
  %v1730 = vrcp.pop %v1715
  %v1731 = vmul.f32 1.0, %v1730
  %v1732 = vrcp.pop %v1716
  %v1733 = vmul.f32 1.0, %v1732
  %v1734 = vrcp.pop %v1717
  %v1735 = vmul.f32 1.0, %v1734
  %v1736 = vrcp.pop %v1718
  %v1737 = vmul.f32 1.0, %v1736
  %v1738 = vrcp.pop %v1719
  %v1739 = vmul.f32 1.0, %v1738
  %v1740 = vrcp.pop %v1720
  %v1741 = vmul.f32 1.0, %v1740
  %v1742 = vrcp.pop %v1721
  %v1743 = vmul.f32 1.0, %v1742
  %v1744 = vrcp.pop %v1722
  %v1745 = vmul.f32 1.0, %v1744
  %v1746 = vrcp.pop %v1723
  %v1747 = vmul.f32 1.0, %v1746
  %v1748 = vpack.c.bf16 %v1727, %v1725
  %v1749 = vpack.c.bf16 %v1731, %v1729
  %v1750 = vpack.c.bf16 %v1735, %v1733
  %v1751 = vpack.c.bf16 %v1739, %v1737
  %v1752 = vpack.c.bf16 %v1743, %v1741
  %v1753 = vpack.c.bf16 %v1747, %v1745
  %s1754 = scalar_lea.vmem [#allocation2], 240
  %1755 = vst.msk [vmem:[%s1754] sm:$0xff] %vm439, %v1748
  %1756 = vst.msk [vmem:[%s1754 + $0x8] sm:$0xff] %vm439, %v1749
  %1757 = vst.msk [vmem:[%s1754 + $0x10] sm:$0xff] %vm439, %v1750
  %1758 = vst.msk [vmem:[%s1754 + $0x18] sm:$0xff] %vm439, %v1751
  %1759 = vst.msk [vmem:[%s1754 + $0x20] sm:$0xff] %vm439, %v1752
  %1760 = vst.msk [vmem:[%s1754 + $0x28] sm:$0xff] %vm439, %v1753
  %s1761 = scalar_lea.vmem %s0, 192
  %v1762 = vld [vmem:[%s1761] sm:$0xf]
  %v1763 = vld [vmem:[%s1761 + $0x4] sm:$0xf]
  %v1764 = vld [vmem:[%s1761 + $0x8] sm:$0xf]
  %v1765 = vld [vmem:[%s1761 + $0xc] sm:$0xf]
  %v1766 = vld [vmem:[%s1761 + $0x10] sm:$0xf]
  %v1767 = vld [vmem:[%s1761 + $0x14] sm:$0xf]
  %v1768 = vld [vmem:[%s1761 + $0x18] sm:$0xf]
  %v1769 = vld [vmem:[%s1761 + $0x1c] sm:$0xf]
  %v1770 = vld [vmem:[%s1761 + $0x20] sm:$0xf]
  %v1771 = vld [vmem:[%s1761 + $0x24] sm:$0xf]
  %v1772 = vld [vmem:[%s1761 + $0x28] sm:$0xf]
  %v1773 = vld [vmem:[%s1761 + $0x2c] sm:$0xf]
  %v1774 = vld [vmem:[%s1761 + $0x30] sm:$0xf]
  %v1775 = vld [vmem:[%s1761 + $0x34] sm:$0xf]
  %v1776 = vld [vmem:[%s1761 + $0x38] sm:$0xf]
  %v1777 = vld [vmem:[%s1761 + $0x3c] sm:$0xf]
  %v1778 = vld [vmem:[%s1761 + $0x40] sm:$0xf]
  %v1779 = vld [vmem:[%s1761 + $0x44] sm:$0xf]
  %v1780 = vld [vmem:[%s1761 + $0x48] sm:$0xf]
  %v1781 = vld [vmem:[%s1761 + $0x4c] sm:$0xf]
  %v1782 = vld [vmem:[%s1761 + $0x50] sm:$0xf]
  %v1783 = vld [vmem:[%s1761 + $0x54] sm:$0xf]
  %v1784 = vld [vmem:[%s1761 + $0x58] sm:$0xf]
  %v1785 = vld [vmem:[%s1761 + $0x5c] sm:$0xf]
  %v1810 = vunpack.c.l.b16 %v1762
  %v1811 = vunpack.c.l.b16 %v1763
  %v1812 = vunpack.c.l.b16 %v1764
  %v1813 = vunpack.c.l.b16 %v1765
  %v1814 = vunpack.c.l.b16 %v1766
  %v1815 = vunpack.c.l.b16 %v1767
  %v1816 = vunpack.c.l.b16 %v1768
  %v1817 = vunpack.c.l.b16 %v1769
  %v1818 = vunpack.c.l.b16 %v1770
  %v1819 = vunpack.c.l.b16 %v1771
  %v1820 = vunpack.c.l.b16 %v1772
  %v1821 = vunpack.c.l.b16 %v1773
  %v1822 = vunpack.c.l.b16 %v1774
  %v1823 = vunpack.c.l.b16 %v1775
  %v1824 = vunpack.c.l.b16 %v1776
  %v1825 = vunpack.c.l.b16 %v1777
  %v1826 = vunpack.c.l.b16 %v1778
  %v1827 = vunpack.c.l.b16 %v1779
  %v1828 = vunpack.c.l.b16 %v1780
  %v1829 = vunpack.c.l.b16 %v1781
  %v1830 = vunpack.c.l.b16 %v1782
  %v1831 = vunpack.c.l.b16 %v1783
  %v1832 = vunpack.c.l.b16 %v1784
  %v1833 = vunpack.c.l.b16 %v1785
  %v1834 = vpack.c.b16 %v1811, %v1810
  %v1835 = vpack.c.b16 %v1813, %v1812
  %v1836 = vpack.c.b16 %v1815, %v1814
  %v1837 = vpack.c.b16 %v1817, %v1816
  %v1838 = vpack.c.b16 %v1819, %v1818
  %v1839 = vpack.c.b16 %v1821, %v1820
  %v1840 = vpack.c.b16 %v1823, %v1822
  %v1841 = vpack.c.b16 %v1825, %v1824
  %v1842 = vpack.c.b16 %v1827, %v1826
  %v1843 = vpack.c.b16 %v1829, %v1828
  %v1844 = vpack.c.b16 %v1831, %v1830
  %v1845 = vpack.c.b16 %v1833, %v1832
  %1858 = vmatprep.subr.bf16.mxu0 0
  %1859 = vmatpush1.bf16.msra.mxu0 %v1834
  %1860 = vmatprep.subr.bf16.mxu0 0
  %1861 = vmatpush1.bf16.msra.mxu0 %v1835
  %1862 = vmatprep.subr.bf16.mxu0 0
  %1863 = vmatpush1.bf16.msra.mxu0 %v1836
  %1864 = vmatprep.subr.bf16.mxu0 0
  %1865 = vmatpush1.bf16.msra.mxu0 %v1837
  %1866 = vmatprep.subr.bf16.mxu0 0
  %1867 = vmatpush1.bf16.msra.mxu0 %v1838
  %1868 = vmatprep.subr.bf16.mxu0 0
  %1869 = vmatpush1.bf16.msra.mxu0 %v1839
  %1870 = vmatprep.subr.bf16.mxu0 0
  %1871 = vmatpush1.bf16.msra.mxu0 %v1840
  %1872 = vmatprep.subr.bf16.mxu0 0
  %1873 = vmatpush1.bf16.msra.mxu0 %v1841
  %1874 = vmatprep.subr.bf16.mxu0 0
  %1875 = vmatpush1.bf16.msra.mxu0 %v1842
  %1876 = vmatprep.subr.bf16.mxu0 0
  %1877 = vmatpush1.bf16.msra.mxu0 %v1843
  %1878 = vmatprep.subr.bf16.mxu0 0
  %1879 = vmatpush1.bf16.msra.mxu0 %v1844
  %1880 = vmatprep.subr.bf16.mxu0 0
  %1881 = vmatpush1.bf16.msra.mxu0 %v1845
  %1882 = vmatprep.subr.bf16.mxu0 0
  %1883 = vmatpush1.bf16.msra.mxu0 0
  %1884 = vmatprep.subr.bf16.mxu0 0
  %1885 = vmatpush1.bf16.msra.mxu0 0
  %1886 = vmatprep.subr.bf16.mxu0 0
  %1887 = vmatpush1.bf16.msra.mxu0 0
  %1888 = vmatprep.subr.bf16.mxu0 0
  %1889 = vmatpush1.bf16.msra.mxu0 0
  %1890 = vmatprep.mubr.bf16.mxu0 %v263
  %1891 = vmatmul.mubr.bf16.gmra.mrb[0].mxu0 %v171
  %v1892 = vpop.f32.mrb[0].mxu0
  %v1893 = vadd.f32 %v78, %v1892
  %v1894 = vpop.f32.mrb[0].mxu0
  %v1895 = vpop.f32.mrb[0].mxu0
  %v1896 = vadd.f32 %v83, %v1895
  %v1897 = vpop.f32.mrb[0].mxu0
  %1898 = vmatprep.mubr.bf16.mxu0 %v266
  %1899 = vmatmul.mubr.bf16.gmra.mrb[0].mxu0 %v173
  %v1900 = vpop.f32.mrb[0].mxu0
  %v1901 = vadd.f32 %v88, %v1900
  %v1902 = vpop.f32.mrb[0].mxu0
  %v1903 = vpop.f32.mrb[0].mxu0
  %v1904 = vadd.f32 %v93, %v1903
  %v1905 = vpop.f32.mrb[0].mxu0
  %1906 = vmatprep.mubr.bf16.mxu0 %v269
  %1907 = vmatmul.mubr.bf16.gmra.mrb[0].mxu0 %v175
  %v1908 = vpop.f32.mrb[0].mxu0
  %v1909 = vadd.f32 %v98, %v1908
  %v1910 = vpop.f32.mrb[0].mxu0
  %v1911 = vpop.f32.mrb[0].mxu0
  %v1912 = vadd.f32 %v103, %v1911
  %v1913 = vpop.f32.mrb[0].mxu0
  %1914 = vmatprep.mubr.bf16.mxu0 %v272
  %1915 = vmatmul.mubr.bf16.gmra.mrb[0].mxu0 %v177
  %v1916 = vpop.f32.mrb[0].mxu0
  %v1917 = vadd.f32 %v108, %v1916
  %v1918 = vpop.f32.mrb[0].mxu0
  %v1919 = vpop.f32.mrb[0].mxu0
  %v1920 = vadd.f32 %v113, %v1919
  %v1921 = vpop.f32.mrb[0].mxu0
  %1922 = vmatprep.mubr.bf16.mxu0 %v275
  %1923 = vmatmul.mubr.bf16.gmra.mrb[0].mxu0 %v179
  %v1924 = vpop.f32.mrb[0].mxu0
  %v1925 = vadd.f32 %v118, %v1924
  %v1926 = vpop.f32.mrb[0].mxu0
  %v1927 = vpop.f32.mrb[0].mxu0
  %v1928 = vadd.f32 %v123, %v1927
  %v1929 = vpop.f32.mrb[0].mxu0
  %1930 = vmatprep.mubr.bf16.mxu0 %v278
  %1931 = vmatmul.mubr.bf16.gmra.mrb[0].mxu0 %v181
  %v1932 = vpop.f32.mrb[0].mxu0
  %v1933 = vadd.f32 %v128, %v1932
  %v1934 = vpop.f32.mrb[0].mxu0
  %v1935 = vpop.f32.mrb[0].mxu0
  %v1936 = vadd.f32 %v133, %v1935
  %v1937 = vpop.f32.mrb[0].mxu0
  %1938 = vdwg.mxu0
  %v1939 = vxor.u32 %v1893, 2147483648
  %v1940 = vxor.u32 %v1896, 2147483648
  %v1941 = vxor.u32 %v1901, 2147483648
  %v1942 = vxor.u32 %v1904, 2147483648
  %v1943 = vxor.u32 %v1909, 2147483648
  %v1944 = vxor.u32 %v1912, 2147483648
  %v1945 = vxor.u32 %v1917, 2147483648
  %v1946 = vxor.u32 %v1920, 2147483648
  %v1947 = vxor.u32 %v1925, 2147483648
  %v1948 = vxor.u32 %v1928, 2147483648
  %v1949 = vxor.u32 %v1933, 2147483648
  %v1950 = vxor.u32 %v1936, 2147483648
  %v1951 = vmul.f32 %v1939, 1.442695
  %v1952 = vpow.pop %v1951
  %v1953 = vmul.f32 %v1940, 1.442695
  %v1954 = vpow.pop %v1953
  %v1955 = vmul.f32 %v1941, 1.442695
  %v1956 = vpow.pop %v1955
  %v1957 = vmul.f32 %v1942, 1.442695
  %v1958 = vpow.pop %v1957
  %v1959 = vmul.f32 %v1943, 1.442695
  %v1960 = vpow.pop %v1959
  %v1961 = vmul.f32 %v1944, 1.442695
  %v1962 = vpow.pop %v1961
  %v1963 = vmul.f32 %v1945, 1.442695
  %v1964 = vpow.pop %v1963
  %v1965 = vmul.f32 %v1946, 1.442695
  %v1966 = vpow.pop %v1965
  %v1967 = vmul.f32 %v1947, 1.442695
  %v1968 = vpow.pop %v1967
  %v1969 = vmul.f32 %v1948, 1.442695
  %v1970 = vpow.pop %v1969
  %v1971 = vmul.f32 %v1949, 1.442695
  %v1972 = vpow.pop %v1971
  %v1973 = vmul.f32 %v1950, 1.442695
  %v1974 = vpow.pop %v1973
  %v1975 = vadd.f32 %v1952, 1.0
  %v1976 = vadd.f32 %v1954, 1.0
  %v1977 = vadd.f32 %v1956, 1.0
  %v1978 = vadd.f32 %v1958, 1.0
  %v1979 = vadd.f32 %v1960, 1.0
  %v1980 = vadd.f32 %v1962, 1.0
  %v1981 = vadd.f32 %v1964, 1.0
  %v1982 = vadd.f32 %v1966, 1.0
  %v1983 = vadd.f32 %v1968, 1.0
  %v1984 = vadd.f32 %v1970, 1.0
  %v1985 = vadd.f32 %v1972, 1.0
  %v1986 = vadd.f32 %v1974, 1.0
  %v1987 = vrcp.pop %v1975
  %v1988 = vmul.f32 1.0, %v1987
  %v1989 = vrcp.pop %v1976
  %v1990 = vmul.f32 1.0, %v1989
  %v1991 = vrcp.pop %v1977
  %v1992 = vmul.f32 1.0, %v1991
  %v1993 = vrcp.pop %v1978
  %v1994 = vmul.f32 1.0, %v1993
  %v1995 = vrcp.pop %v1979
  %v1996 = vmul.f32 1.0, %v1995
  %v1997 = vrcp.pop %v1980
  %v1998 = vmul.f32 1.0, %v1997
  %v1999 = vrcp.pop %v1981
  %v2000 = vmul.f32 1.0, %v1999
  %v2001 = vrcp.pop %v1982
  %v2002 = vmul.f32 1.0, %v2001
  %v2003 = vrcp.pop %v1983
  %v2004 = vmul.f32 1.0, %v2003
  %v2005 = vrcp.pop %v1984
  %v2006 = vmul.f32 1.0, %v2005
  %v2007 = vrcp.pop %v1985
  %v2008 = vmul.f32 1.0, %v2007
  %v2009 = vrcp.pop %v1986
  %v2010 = vmul.f32 1.0, %v2009
  %v2011 = vpack.c.bf16 %v1990, %v1988
  %v2012 = vpack.c.bf16 %v1994, %v1992
  %v2013 = vpack.c.bf16 %v1998, %v1996
  %v2014 = vpack.c.bf16 %v2002, %v2000
  %v2015 = vpack.c.bf16 %v2006, %v2004
  %v2016 = vpack.c.bf16 %v2010, %v2008
  %s2017 = scalar_lea.vmem [#allocation2], 288
  %2018 = vst.msk [vmem:[%s2017] sm:$0xff] %vm439, %v2011
  %2019 = vst.msk [vmem:[%s2017 + $0x8] sm:$0xff] %vm439, %v2012
  %2020 = vst.msk [vmem:[%s2017 + $0x10] sm:$0xff] %vm439, %v2013
  %2021 = vst.msk [vmem:[%s2017 + $0x18] sm:$0xff] %vm439, %v2014
  %2022 = vst.msk [vmem:[%s2017 + $0x20] sm:$0xff] %vm439, %v2015
  %2023 = vst.msk [vmem:[%s2017 + $0x28] sm:$0xff] %vm439, %v2016
  %s2024 = scalar_lea.vmem %s0, 224
  %v2025 = vld [vmem:[%s2024] sm:$0xf]
  %v2026 = vld [vmem:[%s2024 + $0x4] sm:$0xf]
  %v2027 = vld [vmem:[%s2024 + $0x8] sm:$0xf]
  %v2028 = vld [vmem:[%s2024 + $0xc] sm:$0xf]
  %v2029 = vld [vmem:[%s2024 + $0x10] sm:$0xf]
  %v2030 = vld [vmem:[%s2024 + $0x14] sm:$0xf]
  %v2031 = vld [vmem:[%s2024 + $0x18] sm:$0xf]
  %v2032 = vld [vmem:[%s2024 + $0x1c] sm:$0xf]
  %v2033 = vld [vmem:[%s2024 + $0x20] sm:$0xf]
  %v2034 = vld [vmem:[%s2024 + $0x24] sm:$0xf]
  %v2035 = vld [vmem:[%s2024 + $0x28] sm:$0xf]
  %v2036 = vld [vmem:[%s2024 + $0x2c] sm:$0xf]
  %v2037 = vld [vmem:[%s2024 + $0x30] sm:$0xf]
  %v2038 = vld [vmem:[%s2024 + $0x34] sm:$0xf]
  %v2039 = vld [vmem:[%s2024 + $0x38] sm:$0xf]
  %v2040 = vld [vmem:[%s2024 + $0x3c] sm:$0xf]
  %v2041 = vld [vmem:[%s2024 + $0x40] sm:$0xf]
  %v2042 = vld [vmem:[%s2024 + $0x44] sm:$0xf]
  %v2043 = vld [vmem:[%s2024 + $0x48] sm:$0xf]
  %v2044 = vld [vmem:[%s2024 + $0x4c] sm:$0xf]
  %v2045 = vld [vmem:[%s2024 + $0x50] sm:$0xf]
  %v2046 = vld [vmem:[%s2024 + $0x54] sm:$0xf]
  %v2047 = vld [vmem:[%s2024 + $0x58] sm:$0xf]
  %v2048 = vld [vmem:[%s2024 + $0x5c] sm:$0xf]
  %v2073 = vunpack.c.l.b16 %v2025
  %v2074 = vunpack.c.l.b16 %v2026
  %v2075 = vunpack.c.l.b16 %v2027
  %v2076 = vunpack.c.l.b16 %v2028
  %v2077 = vunpack.c.l.b16 %v2029
  %v2078 = vunpack.c.l.b16 %v2030
  %v2079 = vunpack.c.l.b16 %v2031
  %v2080 = vunpack.c.l.b16 %v2032
  %v2081 = vunpack.c.l.b16 %v2033
  %v2082 = vunpack.c.l.b16 %v2034
  %v2083 = vunpack.c.l.b16 %v2035
  %v2084 = vunpack.c.l.b16 %v2036
  %v2085 = vunpack.c.l.b16 %v2037
  %v2086 = vunpack.c.l.b16 %v2038
  %v2087 = vunpack.c.l.b16 %v2039
  %v2088 = vunpack.c.l.b16 %v2040
  %v2089 = vunpack.c.l.b16 %v2041
  %v2090 = vunpack.c.l.b16 %v2042
  %v2091 = vunpack.c.l.b16 %v2043
  %v2092 = vunpack.c.l.b16 %v2044
  %v2093 = vunpack.c.l.b16 %v2045
  %v2094 = vunpack.c.l.b16 %v2046
  %v2095 = vunpack.c.l.b16 %v2047
  %v2096 = vunpack.c.l.b16 %v2048
  %v2097 = vpack.c.b16 %v2074, %v2073
  %v2098 = vpack.c.b16 %v2076, %v2075
  %v2099 = vpack.c.b16 %v2078, %v2077
  %v2100 = vpack.c.b16 %v2080, %v2079
  %v2101 = vpack.c.b16 %v2082, %v2081
  %v2102 = vpack.c.b16 %v2084, %v2083
  %v2103 = vpack.c.b16 %v2086, %v2085
  %v2104 = vpack.c.b16 %v2088, %v2087
  %v2105 = vpack.c.b16 %v2090, %v2089
  %v2106 = vpack.c.b16 %v2092, %v2091
  %v2107 = vpack.c.b16 %v2094, %v2093
  %v2108 = vpack.c.b16 %v2096, %v2095
  %2121 = vmatprep.subr.bf16.mxu0 0
  %2122 = vmatpush1.bf16.msra.mxu0 %v2097
  %2123 = vmatprep.subr.bf16.mxu0 0
  %2124 = vmatpush1.bf16.msra.mxu0 %v2098
  %2125 = vmatprep.subr.bf16.mxu0 0
  %2126 = vmatpush1.bf16.msra.mxu0 %v2099
  %2127 = vmatprep.subr.bf16.mxu0 0
  %2128 = vmatpush1.bf16.msra.mxu0 %v2100
  %2129 = vmatprep.subr.bf16.mxu0 0
  %2130 = vmatpush1.bf16.msra.mxu0 %v2101
  %2131 = vmatprep.subr.bf16.mxu0 0
  %2132 = vmatpush1.bf16.msra.mxu0 %v2102
  %2133 = vmatprep.subr.bf16.mxu0 0
  %2134 = vmatpush1.bf16.msra.mxu0 %v2103
  %2135 = vmatprep.subr.bf16.mxu0 0
  %2136 = vmatpush1.bf16.msra.mxu0 %v2104
  %2137 = vmatprep.subr.bf16.mxu0 0
  %2138 = vmatpush1.bf16.msra.mxu0 %v2105
  %2139 = vmatprep.subr.bf16.mxu0 0
  %2140 = vmatpush1.bf16.msra.mxu0 %v2106
  %2141 = vmatprep.subr.bf16.mxu0 0
  %2142 = vmatpush1.bf16.msra.mxu0 %v2107
  %2143 = vmatprep.subr.bf16.mxu0 0
  %2144 = vmatpush1.bf16.msra.mxu0 %v2108
  %2145 = vmatprep.subr.bf16.mxu0 0
  %2146 = vmatpush1.bf16.msra.mxu0 0
  %2147 = vmatprep.subr.bf16.mxu0 0
  %2148 = vmatpush1.bf16.msra.mxu0 0
  %2149 = vmatprep.subr.bf16.mxu0 0
  %2150 = vmatpush1.bf16.msra.mxu0 0
  %2151 = vmatprep.subr.bf16.mxu0 0
  %2152 = vmatpush1.bf16.msra.mxu0 0
  %2153 = vmatprep.mubr.bf16.mxu0 %v263
  %2154 = vmatmul.mubr.bf16.gmra.mrb[0].mxu0 %v171
  %v2155 = vpop.f32.mrb[0].mxu0
  %v2156 = vadd.f32 %v78, %v2155
  %v2157 = vpop.f32.mrb[0].mxu0
  %v2158 = vpop.f32.mrb[0].mxu0
  %v2159 = vadd.f32 %v83, %v2158
  %v2160 = vpop.f32.mrb[0].mxu0
  %2161 = vmatprep.mubr.bf16.mxu0 %v266
  %2162 = vmatmul.mubr.bf16.gmra.mrb[0].mxu0 %v173
  %v2163 = vpop.f32.mrb[0].mxu0
  %v2164 = vadd.f32 %v88, %v2163
  %v2165 = vpop.f32.mrb[0].mxu0
  %v2166 = vpop.f32.mrb[0].mxu0
  %v2167 = vadd.f32 %v93, %v2166
  %v2168 = vpop.f32.mrb[0].mxu0
  %2169 = vmatprep.mubr.bf16.mxu0 %v269
  %2170 = vmatmul.mubr.bf16.gmra.mrb[0].mxu0 %v175
  %v2171 = vpop.f32.mrb[0].mxu0
  %v2172 = vadd.f32 %v98, %v2171
  %v2173 = vpop.f32.mrb[0].mxu0
  %v2174 = vpop.f32.mrb[0].mxu0
  %v2175 = vadd.f32 %v103, %v2174
  %v2176 = vpop.f32.mrb[0].mxu0
  %2177 = vmatprep.mubr.bf16.mxu0 %v272
  %2178 = vmatmul.mubr.bf16.gmra.mrb[0].mxu0 %v177
  %v2179 = vpop.f32.mrb[0].mxu0
  %v2180 = vadd.f32 %v108, %v2179
  %v2181 = vpop.f32.mrb[0].mxu0
  %v2182 = vpop.f32.mrb[0].mxu0
  %v2183 = vadd.f32 %v113, %v2182
  %v2184 = vpop.f32.mrb[0].mxu0
  %2185 = vmatprep.mubr.bf16.mxu0 %v275
  %2186 = vmatmul.mubr.bf16.gmra.mrb[0].mxu0 %v179
  %v2187 = vpop.f32.mrb[0].mxu0
  %v2188 = vadd.f32 %v118, %v2187
  %v2189 = vpop.f32.mrb[0].mxu0
  %v2190 = vpop.f32.mrb[0].mxu0
  %v2191 = vadd.f32 %v123, %v2190
  %v2192 = vpop.f32.mrb[0].mxu0
  %2193 = vmatprep.mubr.bf16.mxu0 %v278
  %2194 = vmatmul.mubr.bf16.gmra.mrb[0].mxu0 %v181
  %v2195 = vpop.f32.mrb[0].mxu0
  %v2196 = vadd.f32 %v128, %v2195
  %v2197 = vpop.f32.mrb[0].mxu0
  %v2198 = vpop.f32.mrb[0].mxu0
  %v2199 = vadd.f32 %v133, %v2198
  %v2200 = vpop.f32.mrb[0].mxu0
  %2201 = vdwg.mxu0
  %v2202 = vxor.u32 %v2156, 2147483648
  %v2203 = vxor.u32 %v2159, 2147483648
  %v2204 = vxor.u32 %v2164, 2147483648
  %v2205 = vxor.u32 %v2167, 2147483648
  %v2206 = vxor.u32 %v2172, 2147483648
  %v2207 = vxor.u32 %v2175, 2147483648
  %v2208 = vxor.u32 %v2180, 2147483648
  %v2209 = vxor.u32 %v2183, 2147483648
  %v2210 = vxor.u32 %v2188, 2147483648
  %v2211 = vxor.u32 %v2191, 2147483648
  %v2212 = vxor.u32 %v2196, 2147483648
  %v2213 = vxor.u32 %v2199, 2147483648
  %v2214 = vmul.f32 %v2202, 1.442695
  %v2215 = vpow.pop %v2214
  %v2216 = vmul.f32 %v2203, 1.442695
  %v2217 = vpow.pop %v2216
  %v2218 = vmul.f32 %v2204, 1.442695
  %v2219 = vpow.pop %v2218
  %v2220 = vmul.f32 %v2205, 1.442695
  %v2221 = vpow.pop %v2220
  %v2222 = vmul.f32 %v2206, 1.442695
  %v2223 = vpow.pop %v2222
  %v2224 = vmul.f32 %v2207, 1.442695
  %v2225 = vpow.pop %v2224
  %v2226 = vmul.f32 %v2208, 1.442695
  %v2227 = vpow.pop %v2226
  %v2228 = vmul.f32 %v2209, 1.442695
  %v2229 = vpow.pop %v2228
  %v2230 = vmul.f32 %v2210, 1.442695
  %v2231 = vpow.pop %v2230
  %v2232 = vmul.f32 %v2211, 1.442695
  %v2233 = vpow.pop %v2232
  %v2234 = vmul.f32 %v2212, 1.442695
  %v2235 = vpow.pop %v2234
  %v2236 = vmul.f32 %v2213, 1.442695
  %v2237 = vpow.pop %v2236
  %v2238 = vadd.f32 %v2215, 1.0
  %v2239 = vadd.f32 %v2217, 1.0
  %v2240 = vadd.f32 %v2219, 1.0
  %v2241 = vadd.f32 %v2221, 1.0
  %v2242 = vadd.f32 %v2223, 1.0
  %v2243 = vadd.f32 %v2225, 1.0
  %v2244 = vadd.f32 %v2227, 1.0
  %v2245 = vadd.f32 %v2229, 1.0
  %v2246 = vadd.f32 %v2231, 1.0
  %v2247 = vadd.f32 %v2233, 1.0
  %v2248 = vadd.f32 %v2235, 1.0
  %v2249 = vadd.f32 %v2237, 1.0
  %v2250 = vrcp.pop %v2238
  %v2251 = vmul.f32 1.0, %v2250
  %v2252 = vrcp.pop %v2239
  %v2253 = vmul.f32 1.0, %v2252
  %v2254 = vrcp.pop %v2240
  %v2255 = vmul.f32 1.0, %v2254
  %v2256 = vrcp.pop %v2241
  %v2257 = vmul.f32 1.0, %v2256
  %v2258 = vrcp.pop %v2242
  %v2259 = vmul.f32 1.0, %v2258
  %v2260 = vrcp.pop %v2243
  %v2261 = vmul.f32 1.0, %v2260
  %v2262 = vrcp.pop %v2244
  %v2263 = vmul.f32 1.0, %v2262
  %v2264 = vrcp.pop %v2245
  %v2265 = vmul.f32 1.0, %v2264
  %v2266 = vrcp.pop %v2246
  %v2267 = vmul.f32 1.0, %v2266
  %v2268 = vrcp.pop %v2247
  %v2269 = vmul.f32 1.0, %v2268
  %v2270 = vrcp.pop %v2248
  %v2271 = vmul.f32 1.0, %v2270
  %v2272 = vrcp.pop %v2249
  %v2273 = vmul.f32 1.0, %v2272
  %v2274 = vpack.c.bf16 %v2253, %v2251
  %v2275 = vpack.c.bf16 %v2257, %v2255
  %v2276 = vpack.c.bf16 %v2261, %v2259
  %v2277 = vpack.c.bf16 %v2265, %v2263
  %v2278 = vpack.c.bf16 %v2269, %v2267
  %v2279 = vpack.c.bf16 %v2273, %v2271
  %s2280 = scalar_lea.vmem [#allocation2], 336
  %2281 = vst.msk [vmem:[%s2280] sm:$0xff] %vm439, %v2274
  %2282 = vst.msk [vmem:[%s2280 + $0x8] sm:$0xff] %vm439, %v2275
  %2283 = vst.msk [vmem:[%s2280 + $0x10] sm:$0xff] %vm439, %v2276
  %2284 = vst.msk [vmem:[%s2280 + $0x18] sm:$0xff] %vm439, %v2277
  %2285 = vst.msk [vmem:[%s2280 + $0x20] sm:$0xff] %vm439, %v2278
  %2286 = vst.msk [vmem:[%s2280 + $0x28] sm:$0xff] %vm439, %v2279
  %s2287 = scalar_lea.vmem %s0, 256
  %v2288 = vld [vmem:[%s2287] sm:$0xf]
  %v2289 = vld [vmem:[%s2287 + $0x4] sm:$0xf]
  %v2290 = vld [vmem:[%s2287 + $0x8] sm:$0xf]
  %v2291 = vld [vmem:[%s2287 + $0xc] sm:$0xf]
  %v2292 = vld [vmem:[%s2287 + $0x10] sm:$0xf]
  %v2293 = vld [vmem:[%s2287 + $0x14] sm:$0xf]
  %v2294 = vld [vmem:[%s2287 + $0x18] sm:$0xf]
  %v2295 = vld [vmem:[%s2287 + $0x1c] sm:$0xf]
  %v2296 = vld [vmem:[%s2287 + $0x20] sm:$0xf]
  %v2297 = vld [vmem:[%s2287 + $0x24] sm:$0xf]
  %v2298 = vld [vmem:[%s2287 + $0x28] sm:$0xf]
  %v2299 = vld [vmem:[%s2287 + $0x2c] sm:$0xf]
  %v2300 = vld [vmem:[%s2287 + $0x30] sm:$0xf]
  %v2301 = vld [vmem:[%s2287 + $0x34] sm:$0xf]
  %v2302 = vld [vmem:[%s2287 + $0x38] sm:$0xf]
  %v2303 = vld [vmem:[%s2287 + $0x3c] sm:$0xf]
  %v2304 = vld [vmem:[%s2287 + $0x40] sm:$0xf]
  %v2305 = vld [vmem:[%s2287 + $0x44] sm:$0xf]
  %v2306 = vld [vmem:[%s2287 + $0x48] sm:$0xf]
  %v2307 = vld [vmem:[%s2287 + $0x4c] sm:$0xf]
  %v2308 = vld [vmem:[%s2287 + $0x50] sm:$0xf]
  %v2309 = vld [vmem:[%s2287 + $0x54] sm:$0xf]
  %v2310 = vld [vmem:[%s2287 + $0x58] sm:$0xf]
  %v2311 = vld [vmem:[%s2287 + $0x5c] sm:$0xf]
  %v2336 = vunpack.c.l.b16 %v2288
  %v2337 = vunpack.c.l.b16 %v2289
  %v2338 = vunpack.c.l.b16 %v2290
  %v2339 = vunpack.c.l.b16 %v2291
  %v2340 = vunpack.c.l.b16 %v2292
  %v2341 = vunpack.c.l.b16 %v2293
  %v2342 = vunpack.c.l.b16 %v2294
  %v2343 = vunpack.c.l.b16 %v2295
  %v2344 = vunpack.c.l.b16 %v2296
  %v2345 = vunpack.c.l.b16 %v2297
  %v2346 = vunpack.c.l.b16 %v2298
  %v2347 = vunpack.c.l.b16 %v2299
  %v2348 = vunpack.c.l.b16 %v2300
  %v2349 = vunpack.c.l.b16 %v2301
  %v2350 = vunpack.c.l.b16 %v2302
  %v2351 = vunpack.c.l.b16 %v2303
  %v2352 = vunpack.c.l.b16 %v2304
  %v2353 = vunpack.c.l.b16 %v2305
  %v2354 = vunpack.c.l.b16 %v2306
  %v2355 = vunpack.c.l.b16 %v2307
  %v2356 = vunpack.c.l.b16 %v2308
  %v2357 = vunpack.c.l.b16 %v2309
  %v2358 = vunpack.c.l.b16 %v2310
  %v2359 = vunpack.c.l.b16 %v2311
  %v2360 = vpack.c.b16 %v2337, %v2336
  %v2361 = vpack.c.b16 %v2339, %v2338
  %v2362 = vpack.c.b16 %v2341, %v2340
  %v2363 = vpack.c.b16 %v2343, %v2342
  %v2364 = vpack.c.b16 %v2345, %v2344
  %v2365 = vpack.c.b16 %v2347, %v2346
  %v2366 = vpack.c.b16 %v2349, %v2348
  %v2367 = vpack.c.b16 %v2351, %v2350
  %v2368 = vpack.c.b16 %v2353, %v2352
  %v2369 = vpack.c.b16 %v2355, %v2354
  %v2370 = vpack.c.b16 %v2357, %v2356
  %v2371 = vpack.c.b16 %v2359, %v2358
  %2384 = vmatprep.subr.bf16.mxu0 0
  %2385 = vmatpush1.bf16.msra.mxu0 %v2360
  %2386 = vmatprep.subr.bf16.mxu0 0
  %2387 = vmatpush1.bf16.msra.mxu0 %v2361
  %2388 = vmatprep.subr.bf16.mxu0 0
  %2389 = vmatpush1.bf16.msra.mxu0 %v2362
  %2390 = vmatprep.subr.bf16.mxu0 0
  %2391 = vmatpush1.bf16.msra.mxu0 %v2363
  %2392 = vmatprep.subr.bf16.mxu0 0
  %2393 = vmatpush1.bf16.msra.mxu0 %v2364
  %2394 = vmatprep.subr.bf16.mxu0 0
  %2395 = vmatpush1.bf16.msra.mxu0 %v2365
  %2396 = vmatprep.subr.bf16.mxu0 0
  %2397 = vmatpush1.bf16.msra.mxu0 %v2366
  %2398 = vmatprep.subr.bf16.mxu0 0
  %2399 = vmatpush1.bf16.msra.mxu0 %v2367
  %2400 = vmatprep.subr.bf16.mxu0 0
  %2401 = vmatpush1.bf16.msra.mxu0 %v2368
  %2402 = vmatprep.subr.bf16.mxu0 0
  %2403 = vmatpush1.bf16.msra.mxu0 %v2369
  %2404 = vmatprep.subr.bf16.mxu0 0
  %2405 = vmatpush1.bf16.msra.mxu0 %v2370
  %2406 = vmatprep.subr.bf16.mxu0 0
  %2407 = vmatpush1.bf16.msra.mxu0 %v2371
  %2408 = vmatprep.subr.bf16.mxu0 0
  %2409 = vmatpush1.bf16.msra.mxu0 0
  %2410 = vmatprep.subr.bf16.mxu0 0
  %2411 = vmatpush1.bf16.msra.mxu0 0
  %2412 = vmatprep.subr.bf16.mxu0 0
  %2413 = vmatpush1.bf16.msra.mxu0 0
  %2414 = vmatprep.subr.bf16.mxu0 0
  %2415 = vmatpush1.bf16.msra.mxu0 0
  %2416 = vmatprep.mubr.bf16.mxu0 %v263
  %2417 = vmatmul.mubr.bf16.gmra.mrb[0].mxu0 %v171
  %v2418 = vpop.f32.mrb[0].mxu0
  %v2419 = vadd.f32 %v78, %v2418
  %v2420 = vpop.f32.mrb[0].mxu0
  %v2421 = vpop.f32.mrb[0].mxu0
  %v2422 = vadd.f32 %v83, %v2421
  %v2423 = vpop.f32.mrb[0].mxu0
  %2424 = vmatprep.mubr.bf16.mxu0 %v266
  %2425 = vmatmul.mubr.bf16.gmra.mrb[0].mxu0 %v173
  %v2426 = vpop.f32.mrb[0].mxu0
  %v2427 = vadd.f32 %v88, %v2426
  %v2428 = vpop.f32.mrb[0].mxu0
  %v2429 = vpop.f32.mrb[0].mxu0
  %v2430 = vadd.f32 %v93, %v2429
  %v2431 = vpop.f32.mrb[0].mxu0
  %2432 = vmatprep.mubr.bf16.mxu0 %v269
  %2433 = vmatmul.mubr.bf16.gmra.mrb[0].mxu0 %v175
  %v2434 = vpop.f32.mrb[0].mxu0
  %v2435 = vadd.f32 %v98, %v2434
  %v2436 = vpop.f32.mrb[0].mxu0
  %v2437 = vpop.f32.mrb[0].mxu0
  %v2438 = vadd.f32 %v103, %v2437
  %v2439 = vpop.f32.mrb[0].mxu0
  %2440 = vmatprep.mubr.bf16.mxu0 %v272
  %2441 = vmatmul.mubr.bf16.gmra.mrb[0].mxu0 %v177
  %v2442 = vpop.f32.mrb[0].mxu0
  %v2443 = vadd.f32 %v108, %v2442
  %v2444 = vpop.f32.mrb[0].mxu0
  %v2445 = vpop.f32.mrb[0].mxu0
  %v2446 = vadd.f32 %v113, %v2445
  %v2447 = vpop.f32.mrb[0].mxu0
  %2448 = vmatprep.mubr.bf16.mxu0 %v275
  %2449 = vmatmul.mubr.bf16.gmra.mrb[0].mxu0 %v179
  %v2450 = vpop.f32.mrb[0].mxu0
  %v2451 = vadd.f32 %v118, %v2450
  %v2452 = vpop.f32.mrb[0].mxu0
  %v2453 = vpop.f32.mrb[0].mxu0
  %v2454 = vadd.f32 %v123, %v2453
  %v2455 = vpop.f32.mrb[0].mxu0
  %2456 = vmatprep.mubr.bf16.mxu0 %v278
  %2457 = vmatmul.mubr.bf16.gmra.mrb[0].mxu0 %v181
  %v2458 = vpop.f32.mrb[0].mxu0
  %v2459 = vadd.f32 %v128, %v2458
  %v2460 = vpop.f32.mrb[0].mxu0
  %v2461 = vpop.f32.mrb[0].mxu0
  %v2462 = vadd.f32 %v133, %v2461
  %v2463 = vpop.f32.mrb[0].mxu0
  %2464 = vdwg.mxu0
  %v2465 = vxor.u32 %v2419, 2147483648
  %v2466 = vxor.u32 %v2422, 2147483648
  %v2467 = vxor.u32 %v2427, 2147483648
  %v2468 = vxor.u32 %v2430, 2147483648
  %v2469 = vxor.u32 %v2435, 2147483648
  %v2470 = vxor.u32 %v2438, 2147483648
  %v2471 = vxor.u32 %v2443, 2147483648
  %v2472 = vxor.u32 %v2446, 2147483648
  %v2473 = vxor.u32 %v2451, 2147483648
  %v2474 = vxor.u32 %v2454, 2147483648
  %v2475 = vxor.u32 %v2459, 2147483648
  %v2476 = vxor.u32 %v2462, 2147483648
  %v2477 = vmul.f32 %v2465, 1.442695
  %v2478 = vpow.pop %v2477
  %v2479 = vmul.f32 %v2466, 1.442695
  %v2480 = vpow.pop %v2479
  %v2481 = vmul.f32 %v2467, 1.442695
  %v2482 = vpow.pop %v2481
  %v2483 = vmul.f32 %v2468, 1.442695
  %v2484 = vpow.pop %v2483
  %v2485 = vmul.f32 %v2469, 1.442695
  %v2486 = vpow.pop %v2485
  %v2487 = vmul.f32 %v2470, 1.442695
  %v2488 = vpow.pop %v2487
  %v2489 = vmul.f32 %v2471, 1.442695
  %v2490 = vpow.pop %v2489
  %v2491 = vmul.f32 %v2472, 1.442695
  %v2492 = vpow.pop %v2491
  %v2493 = vmul.f32 %v2473, 1.442695
  %v2494 = vpow.pop %v2493
  %v2495 = vmul.f32 %v2474, 1.442695
  %v2496 = vpow.pop %v2495
  %v2497 = vmul.f32 %v2475, 1.442695
  %v2498 = vpow.pop %v2497
  %v2499 = vmul.f32 %v2476, 1.442695
  %v2500 = vpow.pop %v2499
  %v2501 = vadd.f32 %v2478, 1.0
  %v2502 = vadd.f32 %v2480, 1.0
  %v2503 = vadd.f32 %v2482, 1.0
  %v2504 = vadd.f32 %v2484, 1.0
  %v2505 = vadd.f32 %v2486, 1.0
  %v2506 = vadd.f32 %v2488, 1.0
  %v2507 = vadd.f32 %v2490, 1.0
  %v2508 = vadd.f32 %v2492, 1.0
  %v2509 = vadd.f32 %v2494, 1.0
  %v2510 = vadd.f32 %v2496, 1.0
  %v2511 = vadd.f32 %v2498, 1.0
  %v2512 = vadd.f32 %v2500, 1.0
  %v2513 = vrcp.pop %v2501
  %v2514 = vmul.f32 1.0, %v2513
  %v2515 = vrcp.pop %v2502
  %v2516 = vmul.f32 1.0, %v2515
  %v2517 = vrcp.pop %v2503
  %v2518 = vmul.f32 1.0, %v2517
  %v2519 = vrcp.pop %v2504
  %v2520 = vmul.f32 1.0, %v2519
  %v2521 = vrcp.pop %v2505
  %v2522 = vmul.f32 1.0, %v2521
  %v2523 = vrcp.pop %v2506
  %v2524 = vmul.f32 1.0, %v2523
  %v2525 = vrcp.pop %v2507
  %v2526 = vmul.f32 1.0, %v2525
  %v2527 = vrcp.pop %v2508
  %v2528 = vmul.f32 1.0, %v2527
  %v2529 = vrcp.pop %v2509
  %v2530 = vmul.f32 1.0, %v2529
  %v2531 = vrcp.pop %v2510
  %v2532 = vmul.f32 1.0, %v2531
  %v2533 = vrcp.pop %v2511
  %v2534 = vmul.f32 1.0, %v2533
  %v2535 = vrcp.pop %v2512
  %v2536 = vmul.f32 1.0, %v2535
  %v2537 = vpack.c.bf16 %v2516, %v2514
  %v2538 = vpack.c.bf16 %v2520, %v2518
  %v2539 = vpack.c.bf16 %v2524, %v2522
  %v2540 = vpack.c.bf16 %v2528, %v2526
  %v2541 = vpack.c.bf16 %v2532, %v2530
  %v2542 = vpack.c.bf16 %v2536, %v2534
  %s2543 = scalar_lea.vmem [#allocation2], 384
  %2544 = vst.msk [vmem:[%s2543] sm:$0xff] %vm439, %v2537
  %2545 = vst.msk [vmem:[%s2543 + $0x8] sm:$0xff] %vm439, %v2538
  %2546 = vst.msk [vmem:[%s2543 + $0x10] sm:$0xff] %vm439, %v2539
  %2547 = vst.msk [vmem:[%s2543 + $0x18] sm:$0xff] %vm439, %v2540
  %2548 = vst.msk [vmem:[%s2543 + $0x20] sm:$0xff] %vm439, %v2541
  %2549 = vst.msk [vmem:[%s2543 + $0x28] sm:$0xff] %vm439, %v2542
  %s2550 = scalar_lea.vmem %s0, 288
  %v2551 = vld [vmem:[%s2550] sm:$0xf]
  %v2552 = vld [vmem:[%s2550 + $0x4] sm:$0xf]
  %v2553 = vld [vmem:[%s2550 + $0x8] sm:$0xf]
  %v2554 = vld [vmem:[%s2550 + $0xc] sm:$0xf]
  %v2555 = vld [vmem:[%s2550 + $0x10] sm:$0xf]
  %v2556 = vld [vmem:[%s2550 + $0x14] sm:$0xf]
  %v2557 = vld [vmem:[%s2550 + $0x18] sm:$0xf]
  %v2558 = vld [vmem:[%s2550 + $0x1c] sm:$0xf]
  %v2559 = vld [vmem:[%s2550 + $0x20] sm:$0xf]
  %v2560 = vld [vmem:[%s2550 + $0x24] sm:$0xf]
  %v2561 = vld [vmem:[%s2550 + $0x28] sm:$0xf]
  %v2562 = vld [vmem:[%s2550 + $0x2c] sm:$0xf]
  %v2563 = vld [vmem:[%s2550 + $0x30] sm:$0xf]
  %v2564 = vld [vmem:[%s2550 + $0x34] sm:$0xf]
  %v2565 = vld [vmem:[%s2550 + $0x38] sm:$0xf]
  %v2566 = vld [vmem:[%s2550 + $0x3c] sm:$0xf]
  %v2567 = vld [vmem:[%s2550 + $0x40] sm:$0xf]
  %v2568 = vld [vmem:[%s2550 + $0x44] sm:$0xf]
  %v2569 = vld [vmem:[%s2550 + $0x48] sm:$0xf]
  %v2570 = vld [vmem:[%s2550 + $0x4c] sm:$0xf]
  %v2571 = vld [vmem:[%s2550 + $0x50] sm:$0xf]
  %v2572 = vld [vmem:[%s2550 + $0x54] sm:$0xf]
  %v2573 = vld [vmem:[%s2550 + $0x58] sm:$0xf]
  %v2574 = vld [vmem:[%s2550 + $0x5c] sm:$0xf]
  %v2599 = vunpack.c.l.b16 %v2551
  %v2600 = vunpack.c.l.b16 %v2552
  %v2601 = vunpack.c.l.b16 %v2553
  %v2602 = vunpack.c.l.b16 %v2554
  %v2603 = vunpack.c.l.b16 %v2555
  %v2604 = vunpack.c.l.b16 %v2556
  %v2605 = vunpack.c.l.b16 %v2557
  %v2606 = vunpack.c.l.b16 %v2558
  %v2607 = vunpack.c.l.b16 %v2559
  %v2608 = vunpack.c.l.b16 %v2560
  %v2609 = vunpack.c.l.b16 %v2561
  %v2610 = vunpack.c.l.b16 %v2562
  %v2611 = vunpack.c.l.b16 %v2563
  %v2612 = vunpack.c.l.b16 %v2564
  %v2613 = vunpack.c.l.b16 %v2565
  %v2614 = vunpack.c.l.b16 %v2566
  %v2615 = vunpack.c.l.b16 %v2567
  %v2616 = vunpack.c.l.b16 %v2568
  %v2617 = vunpack.c.l.b16 %v2569
  %v2618 = vunpack.c.l.b16 %v2570
  %v2619 = vunpack.c.l.b16 %v2571
  %v2620 = vunpack.c.l.b16 %v2572
  %v2621 = vunpack.c.l.b16 %v2573
  %v2622 = vunpack.c.l.b16 %v2574
  %v2623 = vpack.c.b16 %v2600, %v2599
  %v2624 = vpack.c.b16 %v2602, %v2601
  %v2625 = vpack.c.b16 %v2604, %v2603
  %v2626 = vpack.c.b16 %v2606, %v2605
  %v2627 = vpack.c.b16 %v2608, %v2607
  %v2628 = vpack.c.b16 %v2610, %v2609
  %v2629 = vpack.c.b16 %v2612, %v2611
  %v2630 = vpack.c.b16 %v2614, %v2613
  %v2631 = vpack.c.b16 %v2616, %v2615
  %v2632 = vpack.c.b16 %v2618, %v2617
  %v2633 = vpack.c.b16 %v2620, %v2619
  %v2634 = vpack.c.b16 %v2622, %v2621
  %2647 = vmatprep.subr.bf16.mxu0 0
  %2648 = vmatpush1.bf16.msra.mxu0 %v2623
  %2649 = vmatprep.subr.bf16.mxu0 0
  %2650 = vmatpush1.bf16.msra.mxu0 %v2624
  %2651 = vmatprep.subr.bf16.mxu0 0
  %2652 = vmatpush1.bf16.msra.mxu0 %v2625
  %2653 = vmatprep.subr.bf16.mxu0 0
  %2654 = vmatpush1.bf16.msra.mxu0 %v2626
  %2655 = vmatprep.subr.bf16.mxu0 0
  %2656 = vmatpush1.bf16.msra.mxu0 %v2627
  %2657 = vmatprep.subr.bf16.mxu0 0
  %2658 = vmatpush1.bf16.msra.mxu0 %v2628
  %2659 = vmatprep.subr.bf16.mxu0 0
  %2660 = vmatpush1.bf16.msra.mxu0 %v2629
  %2661 = vmatprep.subr.bf16.mxu0 0
  %2662 = vmatpush1.bf16.msra.mxu0 %v2630
  %2663 = vmatprep.subr.bf16.mxu0 0
  %2664 = vmatpush1.bf16.msra.mxu0 %v2631
  %2665 = vmatprep.subr.bf16.mxu0 0
  %2666 = vmatpush1.bf16.msra.mxu0 %v2632
  %2667 = vmatprep.subr.bf16.mxu0 0
  %2668 = vmatpush1.bf16.msra.mxu0 %v2633
  %2669 = vmatprep.subr.bf16.mxu0 0
  %2670 = vmatpush1.bf16.msra.mxu0 %v2634
  %2671 = vmatprep.subr.bf16.mxu0 0
  %2672 = vmatpush1.bf16.msra.mxu0 0
  %2673 = vmatprep.subr.bf16.mxu0 0
  %2674 = vmatpush1.bf16.msra.mxu0 0
  %2675 = vmatprep.subr.bf16.mxu0 0
  %2676 = vmatpush1.bf16.msra.mxu0 0
  %2677 = vmatprep.subr.bf16.mxu0 0
  %2678 = vmatpush1.bf16.msra.mxu0 0
  %2679 = vmatprep.mubr.bf16.mxu0 %v263
  %2680 = vmatmul.mubr.bf16.gmra.mrb[0].mxu0 %v171
  %v2681 = vpop.f32.mrb[0].mxu0
  %v2682 = vadd.f32 %v78, %v2681
  %v2683 = vpop.f32.mrb[0].mxu0
  %v2684 = vpop.f32.mrb[0].mxu0
  %v2685 = vadd.f32 %v83, %v2684
  %v2686 = vpop.f32.mrb[0].mxu0
  %2687 = vmatprep.mubr.bf16.mxu0 %v266
  %2688 = vmatmul.mubr.bf16.gmra.mrb[0].mxu0 %v173
  %v2689 = vpop.f32.mrb[0].mxu0
  %v2690 = vadd.f32 %v88, %v2689
  %v2691 = vpop.f32.mrb[0].mxu0
  %v2692 = vpop.f32.mrb[0].mxu0
  %v2693 = vadd.f32 %v93, %v2692
  %v2694 = vpop.f32.mrb[0].mxu0
  %2695 = vmatprep.mubr.bf16.mxu0 %v269
  %2696 = vmatmul.mubr.bf16.gmra.mrb[0].mxu0 %v175
  %v2697 = vpop.f32.mrb[0].mxu0
  %v2698 = vadd.f32 %v98, %v2697
  %v2699 = vpop.f32.mrb[0].mxu0
  %v2700 = vpop.f32.mrb[0].mxu0
  %v2701 = vadd.f32 %v103, %v2700
  %v2702 = vpop.f32.mrb[0].mxu0
  %2703 = vmatprep.mubr.bf16.mxu0 %v272
  %2704 = vmatmul.mubr.bf16.gmra.mrb[0].mxu0 %v177
  %v2705 = vpop.f32.mrb[0].mxu0
  %v2706 = vadd.f32 %v108, %v2705
  %v2707 = vpop.f32.mrb[0].mxu0
  %v2708 = vpop.f32.mrb[0].mxu0
  %v2709 = vadd.f32 %v113, %v2708
  %v2710 = vpop.f32.mrb[0].mxu0
  %2711 = vmatprep.mubr.bf16.mxu0 %v275
  %2712 = vmatmul.mubr.bf16.gmra.mrb[0].mxu0 %v179
  %v2713 = vpop.f32.mrb[0].mxu0
  %v2714 = vadd.f32 %v118, %v2713
  %v2715 = vpop.f32.mrb[0].mxu0
  %v2716 = vpop.f32.mrb[0].mxu0
  %v2717 = vadd.f32 %v123, %v2716
  %v2718 = vpop.f32.mrb[0].mxu0
  %2719 = vmatprep.mubr.bf16.mxu0 %v278
  %2720 = vmatmul.mubr.bf16.gmra.mrb[0].mxu0 %v181
  %v2721 = vpop.f32.mrb[0].mxu0
  %v2722 = vadd.f32 %v128, %v2721
  %v2723 = vpop.f32.mrb[0].mxu0
  %v2724 = vpop.f32.mrb[0].mxu0
  %v2725 = vadd.f32 %v133, %v2724
  %v2726 = vpop.f32.mrb[0].mxu0
  %2727 = vdwg.mxu0
  %v2728 = vxor.u32 %v2682, 2147483648
  %v2729 = vxor.u32 %v2685, 2147483648
  %v2730 = vxor.u32 %v2690, 2147483648
  %v2731 = vxor.u32 %v2693, 2147483648
  %v2732 = vxor.u32 %v2698, 2147483648
  %v2733 = vxor.u32 %v2701, 2147483648
  %v2734 = vxor.u32 %v2706, 2147483648
  %v2735 = vxor.u32 %v2709, 2147483648
  %v2736 = vxor.u32 %v2714, 2147483648
  %v2737 = vxor.u32 %v2717, 2147483648
  %v2738 = vxor.u32 %v2722, 2147483648
  %v2739 = vxor.u32 %v2725, 2147483648
  %v2740 = vmul.f32 %v2728, 1.442695
  %v2741 = vpow.pop %v2740
  %v2742 = vmul.f32 %v2729, 1.442695
  %v2743 = vpow.pop %v2742
  %v2744 = vmul.f32 %v2730, 1.442695
  %v2745 = vpow.pop %v2744
  %v2746 = vmul.f32 %v2731, 1.442695
  %v2747 = vpow.pop %v2746
  %v2748 = vmul.f32 %v2732, 1.442695
  %v2749 = vpow.pop %v2748
  %v2750 = vmul.f32 %v2733, 1.442695
  %v2751 = vpow.pop %v2750
  %v2752 = vmul.f32 %v2734, 1.442695
  %v2753 = vpow.pop %v2752
  %v2754 = vmul.f32 %v2735, 1.442695
  %v2755 = vpow.pop %v2754
  %v2756 = vmul.f32 %v2736, 1.442695
  %v2757 = vpow.pop %v2756
  %v2758 = vmul.f32 %v2737, 1.442695
  %v2759 = vpow.pop %v2758
  %v2760 = vmul.f32 %v2738, 1.442695
  %v2761 = vpow.pop %v2760
  %v2762 = vmul.f32 %v2739, 1.442695
  %v2763 = vpow.pop %v2762
  %v2764 = vadd.f32 %v2741, 1.0
  %v2765 = vadd.f32 %v2743, 1.0
  %v2766 = vadd.f32 %v2745, 1.0
  %v2767 = vadd.f32 %v2747, 1.0
  %v2768 = vadd.f32 %v2749, 1.0
  %v2769 = vadd.f32 %v2751, 1.0
  %v2770 = vadd.f32 %v2753, 1.0
  %v2771 = vadd.f32 %v2755, 1.0
  %v2772 = vadd.f32 %v2757, 1.0
  %v2773 = vadd.f32 %v2759, 1.0
  %v2774 = vadd.f32 %v2761, 1.0
  %v2775 = vadd.f32 %v2763, 1.0
  %v2776 = vrcp.pop %v2764
  %v2777 = vmul.f32 1.0, %v2776
  %v2778 = vrcp.pop %v2765
  %v2779 = vmul.f32 1.0, %v2778
  %v2780 = vrcp.pop %v2766
  %v2781 = vmul.f32 1.0, %v2780
  %v2782 = vrcp.pop %v2767
  %v2783 = vmul.f32 1.0, %v2782
  %v2784 = vrcp.pop %v2768
  %v2785 = vmul.f32 1.0, %v2784
  %v2786 = vrcp.pop %v2769
  %v2787 = vmul.f32 1.0, %v2786
  %v2788 = vrcp.pop %v2770
  %v2789 = vmul.f32 1.0, %v2788
  %v2790 = vrcp.pop %v2771
  %v2791 = vmul.f32 1.0, %v2790
  %v2792 = vrcp.pop %v2772
  %v2793 = vmul.f32 1.0, %v2792
  %v2794 = vrcp.pop %v2773
  %v2795 = vmul.f32 1.0, %v2794
  %v2796 = vrcp.pop %v2774
  %v2797 = vmul.f32 1.0, %v2796
  %v2798 = vrcp.pop %v2775
  %v2799 = vmul.f32 1.0, %v2798
  %v2800 = vpack.c.bf16 %v2779, %v2777
  %v2801 = vpack.c.bf16 %v2783, %v2781
  %v2802 = vpack.c.bf16 %v2787, %v2785
  %v2803 = vpack.c.bf16 %v2791, %v2789
  %v2804 = vpack.c.bf16 %v2795, %v2793
  %v2805 = vpack.c.bf16 %v2799, %v2797
  %s2806 = scalar_lea.vmem [#allocation2], 432
  %2807 = vst.msk [vmem:[%s2806] sm:$0xff] %vm439, %v2800
  %2808 = vst.msk [vmem:[%s2806 + $0x8] sm:$0xff] %vm439, %v2801
  %2809 = vst.msk [vmem:[%s2806 + $0x10] sm:$0xff] %vm439, %v2802
  %2810 = vst.msk [vmem:[%s2806 + $0x18] sm:$0xff] %vm439, %v2803
  %2811 = vst.msk [vmem:[%s2806 + $0x20] sm:$0xff] %vm439, %v2804
  %2812 = vst.msk [vmem:[%s2806 + $0x28] sm:$0xff] %vm439, %v2805
  %s2813 = scalar_lea.vmem %s0, 320
  %v2814 = vld [vmem:[%s2813] sm:$0xf]
  %v2815 = vld [vmem:[%s2813 + $0x4] sm:$0xf]
  %v2816 = vld [vmem:[%s2813 + $0x8] sm:$0xf]
  %v2817 = vld [vmem:[%s2813 + $0xc] sm:$0xf]
  %v2818 = vld [vmem:[%s2813 + $0x10] sm:$0xf]
  %v2819 = vld [vmem:[%s2813 + $0x14] sm:$0xf]
  %v2820 = vld [vmem:[%s2813 + $0x18] sm:$0xf]
  %v2821 = vld [vmem:[%s2813 + $0x1c] sm:$0xf]
  %v2822 = vld [vmem:[%s2813 + $0x20] sm:$0xf]
  %v2823 = vld [vmem:[%s2813 + $0x24] sm:$0xf]
  %v2824 = vld [vmem:[%s2813 + $0x28] sm:$0xf]
  %v2825 = vld [vmem:[%s2813 + $0x2c] sm:$0xf]
  %v2826 = vld [vmem:[%s2813 + $0x30] sm:$0xf]
  %v2827 = vld [vmem:[%s2813 + $0x34] sm:$0xf]
  %v2828 = vld [vmem:[%s2813 + $0x38] sm:$0xf]
  %v2829 = vld [vmem:[%s2813 + $0x3c] sm:$0xf]
  %v2830 = vld [vmem:[%s2813 + $0x40] sm:$0xf]
  %v2831 = vld [vmem:[%s2813 + $0x44] sm:$0xf]
  %v2832 = vld [vmem:[%s2813 + $0x48] sm:$0xf]
  %v2833 = vld [vmem:[%s2813 + $0x4c] sm:$0xf]
  %v2834 = vld [vmem:[%s2813 + $0x50] sm:$0xf]
  %v2835 = vld [vmem:[%s2813 + $0x54] sm:$0xf]
  %v2836 = vld [vmem:[%s2813 + $0x58] sm:$0xf]
  %v2837 = vld [vmem:[%s2813 + $0x5c] sm:$0xf]
  %v2862 = vunpack.c.l.b16 %v2814
  %v2863 = vunpack.c.l.b16 %v2815
  %v2864 = vunpack.c.l.b16 %v2816
  %v2865 = vunpack.c.l.b16 %v2817
  %v2866 = vunpack.c.l.b16 %v2818
  %v2867 = vunpack.c.l.b16 %v2819
  %v2868 = vunpack.c.l.b16 %v2820
  %v2869 = vunpack.c.l.b16 %v2821
  %v2870 = vunpack.c.l.b16 %v2822
  %v2871 = vunpack.c.l.b16 %v2823
  %v2872 = vunpack.c.l.b16 %v2824
  %v2873 = vunpack.c.l.b16 %v2825
  %v2874 = vunpack.c.l.b16 %v2826
  %v2875 = vunpack.c.l.b16 %v2827
  %v2876 = vunpack.c.l.b16 %v2828
  %v2877 = vunpack.c.l.b16 %v2829
  %v2878 = vunpack.c.l.b16 %v2830
  %v2879 = vunpack.c.l.b16 %v2831
  %v2880 = vunpack.c.l.b16 %v2832
  %v2881 = vunpack.c.l.b16 %v2833
  %v2882 = vunpack.c.l.b16 %v2834
  %v2883 = vunpack.c.l.b16 %v2835
  %v2884 = vunpack.c.l.b16 %v2836
  %v2885 = vunpack.c.l.b16 %v2837
  %v2886 = vpack.c.b16 %v2863, %v2862
  %v2887 = vpack.c.b16 %v2865, %v2864
  %v2888 = vpack.c.b16 %v2867, %v2866
  %v2889 = vpack.c.b16 %v2869, %v2868
  %v2890 = vpack.c.b16 %v2871, %v2870
  %v2891 = vpack.c.b16 %v2873, %v2872
  %v2892 = vpack.c.b16 %v2875, %v2874
  %v2893 = vpack.c.b16 %v2877, %v2876
  %v2894 = vpack.c.b16 %v2879, %v2878
  %v2895 = vpack.c.b16 %v2881, %v2880
  %v2896 = vpack.c.b16 %v2883, %v2882
  %v2897 = vpack.c.b16 %v2885, %v2884
  %2910 = vmatprep.subr.bf16.mxu0 0
  %2911 = vmatpush1.bf16.msra.mxu0 %v2886
  %2912 = vmatprep.subr.bf16.mxu0 0
  %2913 = vmatpush1.bf16.msra.mxu0 %v2887
  %2914 = vmatprep.subr.bf16.mxu0 0
  %2915 = vmatpush1.bf16.msra.mxu0 %v2888
  %2916 = vmatprep.subr.bf16.mxu0 0
  %2917 = vmatpush1.bf16.msra.mxu0 %v2889
  %2918 = vmatprep.subr.bf16.mxu0 0
  %2919 = vmatpush1.bf16.msra.mxu0 %v2890
  %2920 = vmatprep.subr.bf16.mxu0 0
  %2921 = vmatpush1.bf16.msra.mxu0 %v2891
  %2922 = vmatprep.subr.bf16.mxu0 0
  %2923 = vmatpush1.bf16.msra.mxu0 %v2892
  %2924 = vmatprep.subr.bf16.mxu0 0
  %2925 = vmatpush1.bf16.msra.mxu0 %v2893
  %2926 = vmatprep.subr.bf16.mxu0 0
  %2927 = vmatpush1.bf16.msra.mxu0 %v2894
  %2928 = vmatprep.subr.bf16.mxu0 0
  %2929 = vmatpush1.bf16.msra.mxu0 %v2895
  %2930 = vmatprep.subr.bf16.mxu0 0
  %2931 = vmatpush1.bf16.msra.mxu0 %v2896
  %2932 = vmatprep.subr.bf16.mxu0 0
  %2933 = vmatpush1.bf16.msra.mxu0 %v2897
  %2934 = vmatprep.subr.bf16.mxu0 0
  %2935 = vmatpush1.bf16.msra.mxu0 0
  %2936 = vmatprep.subr.bf16.mxu0 0
  %2937 = vmatpush1.bf16.msra.mxu0 0
  %2938 = vmatprep.subr.bf16.mxu0 0
  %2939 = vmatpush1.bf16.msra.mxu0 0
  %2940 = vmatprep.subr.bf16.mxu0 0
  %2941 = vmatpush1.bf16.msra.mxu0 0
  %2942 = vmatprep.mubr.bf16.mxu0 %v263
  %2943 = vmatmul.mubr.bf16.gmra.mrb[0].mxu0 %v171
  %v2944 = vpop.f32.mrb[0].mxu0
  %v2945 = vadd.f32 %v78, %v2944
  %v2946 = vpop.f32.mrb[0].mxu0
  %v2947 = vpop.f32.mrb[0].mxu0
  %v2948 = vadd.f32 %v83, %v2947
  %v2949 = vpop.f32.mrb[0].mxu0
  %2950 = vmatprep.mubr.bf16.mxu0 %v266
  %2951 = vmatmul.mubr.bf16.gmra.mrb[0].mxu0 %v173
  %v2952 = vpop.f32.mrb[0].mxu0
  %v2953 = vadd.f32 %v88, %v2952
  %v2954 = vpop.f32.mrb[0].mxu0
  %v2955 = vpop.f32.mrb[0].mxu0
  %v2956 = vadd.f32 %v93, %v2955
  %v2957 = vpop.f32.mrb[0].mxu0
  %2958 = vmatprep.mubr.bf16.mxu0 %v269
  %2959 = vmatmul.mubr.bf16.gmra.mrb[0].mxu0 %v175
  %v2960 = vpop.f32.mrb[0].mxu0
  %v2961 = vadd.f32 %v98, %v2960
  %v2962 = vpop.f32.mrb[0].mxu0
  %v2963 = vpop.f32.mrb[0].mxu0
  %v2964 = vadd.f32 %v103, %v2963
  %v2965 = vpop.f32.mrb[0].mxu0
  %2966 = vmatprep.mubr.bf16.mxu0 %v272
  %2967 = vmatmul.mubr.bf16.gmra.mrb[0].mxu0 %v177
  %v2968 = vpop.f32.mrb[0].mxu0
  %v2969 = vadd.f32 %v108, %v2968
  %v2970 = vpop.f32.mrb[0].mxu0
  %v2971 = vpop.f32.mrb[0].mxu0
  %v2972 = vadd.f32 %v113, %v2971
  %v2973 = vpop.f32.mrb[0].mxu0
  %2974 = vmatprep.mubr.bf16.mxu0 %v275
  %2975 = vmatmul.mubr.bf16.gmra.mrb[0].mxu0 %v179
  %v2976 = vpop.f32.mrb[0].mxu0
  %v2977 = vadd.f32 %v118, %v2976
  %v2978 = vpop.f32.mrb[0].mxu0
  %v2979 = vpop.f32.mrb[0].mxu0
  %v2980 = vadd.f32 %v123, %v2979
  %v2981 = vpop.f32.mrb[0].mxu0
  %2982 = vmatprep.mubr.bf16.mxu0 %v278
  %2983 = vmatmul.mubr.bf16.gmra.mrb[0].mxu0 %v181
  %v2984 = vpop.f32.mrb[0].mxu0
  %v2985 = vadd.f32 %v128, %v2984
  %v2986 = vpop.f32.mrb[0].mxu0
  %v2987 = vpop.f32.mrb[0].mxu0
  %v2988 = vadd.f32 %v133, %v2987
  %v2989 = vpop.f32.mrb[0].mxu0
  %2990 = vdwg.mxu0
  %v2991 = vxor.u32 %v2945, 2147483648
  %v2992 = vxor.u32 %v2948, 2147483648
  %v2993 = vxor.u32 %v2953, 2147483648
  %v2994 = vxor.u32 %v2956, 2147483648
  %v2995 = vxor.u32 %v2961, 2147483648
  %v2996 = vxor.u32 %v2964, 2147483648
  %v2997 = vxor.u32 %v2969, 2147483648
  %v2998 = vxor.u32 %v2972, 2147483648
  %v2999 = vxor.u32 %v2977, 2147483648
  %v3000 = vxor.u32 %v2980, 2147483648
  %v3001 = vxor.u32 %v2985, 2147483648
  %v3002 = vxor.u32 %v2988, 2147483648
  %v3003 = vmul.f32 %v2991, 1.442695
  %v3004 = vpow.pop %v3003
  %v3005 = vmul.f32 %v2992, 1.442695
  %v3006 = vpow.pop %v3005
  %v3007 = vmul.f32 %v2993, 1.442695
  %v3008 = vpow.pop %v3007
  %v3009 = vmul.f32 %v2994, 1.442695
  %v3010 = vpow.pop %v3009
  %v3011 = vmul.f32 %v2995, 1.442695
  %v3012 = vpow.pop %v3011
  %v3013 = vmul.f32 %v2996, 1.442695
  %v3014 = vpow.pop %v3013
  %v3015 = vmul.f32 %v2997, 1.442695
  %v3016 = vpow.pop %v3015
  %v3017 = vmul.f32 %v2998, 1.442695
  %v3018 = vpow.pop %v3017
  %v3019 = vmul.f32 %v2999, 1.442695
  %v3020 = vpow.pop %v3019
  %v3021 = vmul.f32 %v3000, 1.442695
  %v3022 = vpow.pop %v3021
  %v3023 = vmul.f32 %v3001, 1.442695
  %v3024 = vpow.pop %v3023
  %v3025 = vmul.f32 %v3002, 1.442695
  %v3026 = vpow.pop %v3025
  %v3027 = vadd.f32 %v3004, 1.0
  %v3028 = vadd.f32 %v3006, 1.0
  %v3029 = vadd.f32 %v3008, 1.0
  %v3030 = vadd.f32 %v3010, 1.0
  %v3031 = vadd.f32 %v3012, 1.0
  %v3032 = vadd.f32 %v3014, 1.0
  %v3033 = vadd.f32 %v3016, 1.0
  %v3034 = vadd.f32 %v3018, 1.0
  %v3035 = vadd.f32 %v3020, 1.0
  %v3036 = vadd.f32 %v3022, 1.0
  %v3037 = vadd.f32 %v3024, 1.0
  %v3038 = vadd.f32 %v3026, 1.0
  %v3039 = vrcp.pop %v3027
  %v3040 = vmul.f32 1.0, %v3039
  %v3041 = vrcp.pop %v3028
  %v3042 = vmul.f32 1.0, %v3041
  %v3043 = vrcp.pop %v3029
  %v3044 = vmul.f32 1.0, %v3043
  %v3045 = vrcp.pop %v3030
  %v3046 = vmul.f32 1.0, %v3045
  %v3047 = vrcp.pop %v3031
  %v3048 = vmul.f32 1.0, %v3047
  %v3049 = vrcp.pop %v3032
  %v3050 = vmul.f32 1.0, %v3049
  %v3051 = vrcp.pop %v3033
  %v3052 = vmul.f32 1.0, %v3051
  %v3053 = vrcp.pop %v3034
  %v3054 = vmul.f32 1.0, %v3053
  %v3055 = vrcp.pop %v3035
  %v3056 = vmul.f32 1.0, %v3055
  %v3057 = vrcp.pop %v3036
  %v3058 = vmul.f32 1.0, %v3057
  %v3059 = vrcp.pop %v3037
  %v3060 = vmul.f32 1.0, %v3059
  %v3061 = vrcp.pop %v3038
  %v3062 = vmul.f32 1.0, %v3061
  %v3063 = vpack.c.bf16 %v3042, %v3040
  %v3064 = vpack.c.bf16 %v3046, %v3044
  %v3065 = vpack.c.bf16 %v3050, %v3048
  %v3066 = vpack.c.bf16 %v3054, %v3052
  %v3067 = vpack.c.bf16 %v3058, %v3056
  %v3068 = vpack.c.bf16 %v3062, %v3060
  %s3069 = scalar_lea.vmem [#allocation2], 480
  %3070 = vst.msk [vmem:[%s3069] sm:$0xff] %vm439, %v3063
  %3071 = vst.msk [vmem:[%s3069 + $0x8] sm:$0xff] %vm439, %v3064
  %3072 = vst.msk [vmem:[%s3069 + $0x10] sm:$0xff] %vm439, %v3065
  %3073 = vst.msk [vmem:[%s3069 + $0x18] sm:$0xff] %vm439, %v3066
  %3074 = vst.msk [vmem:[%s3069 + $0x20] sm:$0xff] %vm439, %v3067
  %3075 = vst.msk [vmem:[%s3069 + $0x28] sm:$0xff] %vm439, %v3068
  %s3076 = scalar_lea.vmem %s0, 352
  %v3077 = vld [vmem:[%s3076] sm:$0xf]
  %v3078 = vld [vmem:[%s3076 + $0x4] sm:$0xf]
  %v3079 = vld [vmem:[%s3076 + $0x8] sm:$0xf]
  %v3080 = vld [vmem:[%s3076 + $0xc] sm:$0xf]
  %v3081 = vld [vmem:[%s3076 + $0x10] sm:$0xf]
  %v3082 = vld [vmem:[%s3076 + $0x14] sm:$0xf]
  %v3083 = vld [vmem:[%s3076 + $0x18] sm:$0xf]
  %v3084 = vld [vmem:[%s3076 + $0x1c] sm:$0xf]
  %v3085 = vld [vmem:[%s3076 + $0x20] sm:$0xf]
  %v3086 = vld [vmem:[%s3076 + $0x24] sm:$0xf]
  %v3087 = vld [vmem:[%s3076 + $0x28] sm:$0xf]
  %v3088 = vld [vmem:[%s3076 + $0x2c] sm:$0xf]
  %v3089 = vld [vmem:[%s3076 + $0x30] sm:$0xf]
  %v3090 = vld [vmem:[%s3076 + $0x34] sm:$0xf]
  %v3091 = vld [vmem:[%s3076 + $0x38] sm:$0xf]
  %v3092 = vld [vmem:[%s3076 + $0x3c] sm:$0xf]
  %v3093 = vld [vmem:[%s3076 + $0x40] sm:$0xf]
  %v3094 = vld [vmem:[%s3076 + $0x44] sm:$0xf]
  %v3095 = vld [vmem:[%s3076 + $0x48] sm:$0xf]
  %v3096 = vld [vmem:[%s3076 + $0x4c] sm:$0xf]
  %v3097 = vld [vmem:[%s3076 + $0x50] sm:$0xf]
  %v3098 = vld [vmem:[%s3076 + $0x54] sm:$0xf]
  %v3099 = vld [vmem:[%s3076 + $0x58] sm:$0xf]
  %v3100 = vld [vmem:[%s3076 + $0x5c] sm:$0xf]
  %v3125 = vunpack.c.l.b16 %v3077
  %v3126 = vunpack.c.l.b16 %v3078
  %v3127 = vunpack.c.l.b16 %v3079
  %v3128 = vunpack.c.l.b16 %v3080
  %v3129 = vunpack.c.l.b16 %v3081
  %v3130 = vunpack.c.l.b16 %v3082
  %v3131 = vunpack.c.l.b16 %v3083
  %v3132 = vunpack.c.l.b16 %v3084
  %v3133 = vunpack.c.l.b16 %v3085
  %v3134 = vunpack.c.l.b16 %v3086
  %v3135 = vunpack.c.l.b16 %v3087
  %v3136 = vunpack.c.l.b16 %v3088
  %v3137 = vunpack.c.l.b16 %v3089
  %v3138 = vunpack.c.l.b16 %v3090
  %v3139 = vunpack.c.l.b16 %v3091
  %v3140 = vunpack.c.l.b16 %v3092
  %v3141 = vunpack.c.l.b16 %v3093
  %v3142 = vunpack.c.l.b16 %v3094
  %v3143 = vunpack.c.l.b16 %v3095
  %v3144 = vunpack.c.l.b16 %v3096
  %v3145 = vunpack.c.l.b16 %v3097
  %v3146 = vunpack.c.l.b16 %v3098
  %v3147 = vunpack.c.l.b16 %v3099
  %v3148 = vunpack.c.l.b16 %v3100
  %v3149 = vpack.c.b16 %v3126, %v3125
  %v3150 = vpack.c.b16 %v3128, %v3127
  %v3151 = vpack.c.b16 %v3130, %v3129
  %v3152 = vpack.c.b16 %v3132, %v3131
  %v3153 = vpack.c.b16 %v3134, %v3133
  %v3154 = vpack.c.b16 %v3136, %v3135
  %v3155 = vpack.c.b16 %v3138, %v3137
  %v3156 = vpack.c.b16 %v3140, %v3139
  %v3157 = vpack.c.b16 %v3142, %v3141
  %v3158 = vpack.c.b16 %v3144, %v3143
  %v3159 = vpack.c.b16 %v3146, %v3145
  %v3160 = vpack.c.b16 %v3148, %v3147
  %3173 = vmatprep.subr.bf16.mxu0 0
  %3174 = vmatpush1.bf16.msra.mxu0 %v3149
  %3175 = vmatprep.subr.bf16.mxu0 0
  %3176 = vmatpush1.bf16.msra.mxu0 %v3150
  %3177 = vmatprep.subr.bf16.mxu0 0
  %3178 = vmatpush1.bf16.msra.mxu0 %v3151
  %3179 = vmatprep.subr.bf16.mxu0 0
  %3180 = vmatpush1.bf16.msra.mxu0 %v3152
  %3181 = vmatprep.subr.bf16.mxu0 0
  %3182 = vmatpush1.bf16.msra.mxu0 %v3153
  %3183 = vmatprep.subr.bf16.mxu0 0
  %3184 = vmatpush1.bf16.msra.mxu0 %v3154
  %3185 = vmatprep.subr.bf16.mxu0 0
  %3186 = vmatpush1.bf16.msra.mxu0 %v3155
  %3187 = vmatprep.subr.bf16.mxu0 0
  %3188 = vmatpush1.bf16.msra.mxu0 %v3156
  %3189 = vmatprep.subr.bf16.mxu0 0
  %3190 = vmatpush1.bf16.msra.mxu0 %v3157
  %3191 = vmatprep.subr.bf16.mxu0 0
  %3192 = vmatpush1.bf16.msra.mxu0 %v3158
  %3193 = vmatprep.subr.bf16.mxu0 0
  %3194 = vmatpush1.bf16.msra.mxu0 %v3159
  %3195 = vmatprep.subr.bf16.mxu0 0
  %3196 = vmatpush1.bf16.msra.mxu0 %v3160
  %3197 = vmatprep.subr.bf16.mxu0 0
  %3198 = vmatpush1.bf16.msra.mxu0 0
  %3199 = vmatprep.subr.bf16.mxu0 0
  %3200 = vmatpush1.bf16.msra.mxu0 0
  %3201 = vmatprep.subr.bf16.mxu0 0
  %3202 = vmatpush1.bf16.msra.mxu0 0
  %3203 = vmatprep.subr.bf16.mxu0 0
  %3204 = vmatpush1.bf16.msra.mxu0 0
  %3205 = vmatprep.mubr.bf16.mxu0 %v263
  %3206 = vmatmul.mubr.bf16.gmra.mrb[0].mxu0 %v171
  %v3207 = vpop.f32.mrb[0].mxu0
  %v3208 = vadd.f32 %v78, %v3207
  %v3209 = vpop.f32.mrb[0].mxu0
  %v3210 = vpop.f32.mrb[0].mxu0
  %v3211 = vadd.f32 %v83, %v3210
  %v3212 = vpop.f32.mrb[0].mxu0
  %3213 = vmatprep.mubr.bf16.mxu0 %v266
  %3214 = vmatmul.mubr.bf16.gmra.mrb[0].mxu0 %v173
  %v3215 = vpop.f32.mrb[0].mxu0
  %v3216 = vadd.f32 %v88, %v3215
  %v3217 = vpop.f32.mrb[0].mxu0
  %v3218 = vpop.f32.mrb[0].mxu0
  %v3219 = vadd.f32 %v93, %v3218
  %v3220 = vpop.f32.mrb[0].mxu0
  %3221 = vmatprep.mubr.bf16.mxu0 %v269
  %3222 = vmatmul.mubr.bf16.gmra.mrb[0].mxu0 %v175
  %v3223 = vpop.f32.mrb[0].mxu0
  %v3224 = vadd.f32 %v98, %v3223
  %v3225 = vpop.f32.mrb[0].mxu0
  %v3226 = vpop.f32.mrb[0].mxu0
  %v3227 = vadd.f32 %v103, %v3226
  %v3228 = vpop.f32.mrb[0].mxu0
  %3229 = vmatprep.mubr.bf16.mxu0 %v272
  %3230 = vmatmul.mubr.bf16.gmra.mrb[0].mxu0 %v177
  %v3231 = vpop.f32.mrb[0].mxu0
  %v3232 = vadd.f32 %v108, %v3231
  %v3233 = vpop.f32.mrb[0].mxu0
  %v3234 = vpop.f32.mrb[0].mxu0
  %v3235 = vadd.f32 %v113, %v3234
  %v3236 = vpop.f32.mrb[0].mxu0
  %3237 = vmatprep.mubr.bf16.mxu0 %v275
  %3238 = vmatmul.mubr.bf16.gmra.mrb[0].mxu0 %v179
  %v3239 = vpop.f32.mrb[0].mxu0
  %v3240 = vadd.f32 %v118, %v3239
  %v3241 = vpop.f32.mrb[0].mxu0
  %v3242 = vpop.f32.mrb[0].mxu0
  %v3243 = vadd.f32 %v123, %v3242
  %v3244 = vpop.f32.mrb[0].mxu0
  %3245 = vmatprep.mubr.bf16.mxu0 %v278
  %3246 = vmatmul.mubr.bf16.gmra.mrb[0].mxu0 %v181
  %v3247 = vpop.f32.mrb[0].mxu0
  %v3248 = vadd.f32 %v128, %v3247
  %v3249 = vpop.f32.mrb[0].mxu0
  %v3250 = vpop.f32.mrb[0].mxu0
  %v3251 = vadd.f32 %v133, %v3250
  %v3252 = vpop.f32.mrb[0].mxu0
  %3253 = vdwg.mxu0
  %v3254 = vxor.u32 %v3208, 2147483648
  %v3255 = vxor.u32 %v3211, 2147483648
  %v3256 = vxor.u32 %v3216, 2147483648
  %v3257 = vxor.u32 %v3219, 2147483648
  %v3258 = vxor.u32 %v3224, 2147483648
  %v3259 = vxor.u32 %v3227, 2147483648
  %v3260 = vxor.u32 %v3232, 2147483648
  %v3261 = vxor.u32 %v3235, 2147483648
  %v3262 = vxor.u32 %v3240, 2147483648
  %v3263 = vxor.u32 %v3243, 2147483648
  %v3264 = vxor.u32 %v3248, 2147483648
  %v3265 = vxor.u32 %v3251, 2147483648
  %v3266 = vmul.f32 %v3254, 1.442695
  %v3267 = vpow.pop %v3266
  %v3268 = vmul.f32 %v3255, 1.442695
  %v3269 = vpow.pop %v3268
  %v3270 = vmul.f32 %v3256, 1.442695
  %v3271 = vpow.pop %v3270
  %v3272 = vmul.f32 %v3257, 1.442695
  %v3273 = vpow.pop %v3272
  %v3274 = vmul.f32 %v3258, 1.442695
  %v3275 = vpow.pop %v3274
  %v3276 = vmul.f32 %v3259, 1.442695
  %v3277 = vpow.pop %v3276
  %v3278 = vmul.f32 %v3260, 1.442695
  %v3279 = vpow.pop %v3278
  %v3280 = vmul.f32 %v3261, 1.442695
  %v3281 = vpow.pop %v3280
  %v3282 = vmul.f32 %v3262, 1.442695
  %v3283 = vpow.pop %v3282
  %v3284 = vmul.f32 %v3263, 1.442695
  %v3285 = vpow.pop %v3284
  %v3286 = vmul.f32 %v3264, 1.442695
  %v3287 = vpow.pop %v3286
  %v3288 = vmul.f32 %v3265, 1.442695
  %v3289 = vpow.pop %v3288
  %v3290 = vadd.f32 %v3267, 1.0
  %v3291 = vadd.f32 %v3269, 1.0
  %v3292 = vadd.f32 %v3271, 1.0
  %v3293 = vadd.f32 %v3273, 1.0
  %v3294 = vadd.f32 %v3275, 1.0
  %v3295 = vadd.f32 %v3277, 1.0
  %v3296 = vadd.f32 %v3279, 1.0
  %v3297 = vadd.f32 %v3281, 1.0
  %v3298 = vadd.f32 %v3283, 1.0
  %v3299 = vadd.f32 %v3285, 1.0
  %v3300 = vadd.f32 %v3287, 1.0
  %v3301 = vadd.f32 %v3289, 1.0
  %v3302 = vrcp.pop %v3290
  %v3303 = vmul.f32 1.0, %v3302
  %v3304 = vrcp.pop %v3291
  %v3305 = vmul.f32 1.0, %v3304
  %v3306 = vrcp.pop %v3292
  %v3307 = vmul.f32 1.0, %v3306
  %v3308 = vrcp.pop %v3293
  %v3309 = vmul.f32 1.0, %v3308
  %v3310 = vrcp.pop %v3294
  %v3311 = vmul.f32 1.0, %v3310
  %v3312 = vrcp.pop %v3295
  %v3313 = vmul.f32 1.0, %v3312
  %v3314 = vrcp.pop %v3296
  %v3315 = vmul.f32 1.0, %v3314
  %v3316 = vrcp.pop %v3297
  %v3317 = vmul.f32 1.0, %v3316
  %v3318 = vrcp.pop %v3298
  %v3319 = vmul.f32 1.0, %v3318
  %v3320 = vrcp.pop %v3299
  %v3321 = vmul.f32 1.0, %v3320
  %v3322 = vrcp.pop %v3300
  %v3323 = vmul.f32 1.0, %v3322
  %v3324 = vrcp.pop %v3301
  %v3325 = vmul.f32 1.0, %v3324
  %v3326 = vpack.c.bf16 %v3305, %v3303
  %v3327 = vpack.c.bf16 %v3309, %v3307
  %v3328 = vpack.c.bf16 %v3313, %v3311
  %v3329 = vpack.c.bf16 %v3317, %v3315
  %v3330 = vpack.c.bf16 %v3321, %v3319
  %v3331 = vpack.c.bf16 %v3325, %v3323
  %s3332 = scalar_lea.vmem [#allocation2], 528
  %3333 = vst.msk [vmem:[%s3332] sm:$0xff] %vm439, %v3326
  %3334 = vst.msk [vmem:[%s3332 + $0x8] sm:$0xff] %vm439, %v3327
  %3335 = vst.msk [vmem:[%s3332 + $0x10] sm:$0xff] %vm439, %v3328
  %3336 = vst.msk [vmem:[%s3332 + $0x18] sm:$0xff] %vm439, %v3329
  %3337 = vst.msk [vmem:[%s3332 + $0x20] sm:$0xff] %vm439, %v3330
  %3338 = vst.msk [vmem:[%s3332 + $0x28] sm:$0xff] %vm439, %v3331
  %v3339 = vld [vmem:[%s3] sm:$0xff]
  %v3340 = vld [vmem:[%s3 + $0x8] sm:$0xff]
  %v3341 = vld [vmem:[%s3 + $0x10] sm:$0xf]
  %v3342 = vld [vmem:[%s3 + $0x14] sm:$0xff]
  %v3343 = vld [vmem:[%s3 + $0x1c] sm:$0xff]
  %v3344 = vld [vmem:[%s3 + $0x24] sm:$0xf]
  %v3345 = vld [vmem:[%s3 + $0x28] sm:$0xff]
  %v3346 = vld [vmem:[%s3 + $0x30] sm:$0xff]
  %v3347 = vld [vmem:[%s3 + $0x38] sm:$0xf]
  %v3348 = vld [vmem:[%s3 + $0x3c] sm:$0xff]
  %v3349 = vld [vmem:[%s3 + $0x44] sm:$0xff]
  %v3350 = vld [vmem:[%s3 + $0x4c] sm:$0xf]
  %v3351 = vld [vmem:[%s3 + $0x50] sm:$0xff]
  %v3352 = vld [vmem:[%s3 + $0x58] sm:$0xff]
  %v3353 = vld [vmem:[%s3 + $0x60] sm:$0xf]
  %v3354 = vld [vmem:[%s3 + $0x64] sm:$0xff]
  %v3355 = vld [vmem:[%s3 + $0x6c] sm:$0xff]
  %v3356 = vld [vmem:[%s3 + $0x74] sm:$0xf]
  %v3357 = vld [vmem:[%s3 + $0x78] sm:$0xff]
  %v3358 = vld [vmem:[%s3 + $0x80] sm:$0xff]
  %v3359 = vld [vmem:[%s3 + $0x88] sm:$0xf]
  %v3360 = vld [vmem:[%s3 + $0x8c] sm:$0xff]
  %v3361 = vld [vmem:[%s3 + $0x94] sm:$0xff]
  %v3362 = vld [vmem:[%s3 + $0x9c] sm:$0xf]
  %v3363 = vld [vmem:[#allocation2] sm:$0xff]
  %v3364 = vld [vmem:[#allocation2 + $0x8] sm:$0xff]
  %v3365 = vld [vmem:[#allocation2 + $0x10] sm:$0xff]
  %v3366 = vld [vmem:[#allocation2 + $0x18] sm:$0xff]
  %v3367 = vld [vmem:[#allocation2 + $0x20] sm:$0xff]
  %v3368 = vld [vmem:[#allocation2 + $0x28] sm:$0xff]
  %v3369 = vld [vmem:[#allocation2 + $0x30] sm:$0xff]
  %v3370 = vld [vmem:[#allocation2 + $0x38] sm:$0xff]
  %v3371 = vld [vmem:[#allocation2 + $0x40] sm:$0xff]
  %v3372 = vld [vmem:[#allocation2 + $0x48] sm:$0xff]
  %v3373 = vld [vmem:[#allocation2 + $0x50] sm:$0xff]
  %v3374 = vld [vmem:[#allocation2 + $0x58] sm:$0xff]
  %v3375 = vld [vmem:[#allocation2 + $0x60] sm:$0xff]
  %v3376 = vld [vmem:[#allocation2 + $0x68] sm:$0xff]
  %v3377 = vld [vmem:[#allocation2 + $0x70] sm:$0xff]
  %v3378 = vld [vmem:[#allocation2 + $0x78] sm:$0xff]
  %v3379 = vld [vmem:[#allocation2 + $0x80] sm:$0xff]
  %v3380 = vld [vmem:[#allocation2 + $0x88] sm:$0xff]
  %v3381 = vld [vmem:[#allocation2 + $0x90] sm:$0xff]
  %v3382 = vld [vmem:[#allocation2 + $0x98] sm:$0xff]
  %v3383 = vld [vmem:[#allocation2 + $0xa0] sm:$0xff]
  %v3384 = vld [vmem:[#allocation2 + $0xa8] sm:$0xff]
  %v3385 = vld [vmem:[#allocation2 + $0xb0] sm:$0xff]
  %v3386 = vld [vmem:[#allocation2 + $0xb8] sm:$0xff]
  %v3387 = vld [vmem:[#allocation2 + $0xc0] sm:$0xff]
  %v3388 = vld [vmem:[#allocation2 + $0xc8] sm:$0xff]
  %v3389 = vld [vmem:[#allocation2 + $0xd0] sm:$0xff]
  %v3390 = vld [vmem:[#allocation2 + $0xd8] sm:$0xff]
  %v3391 = vld [vmem:[#allocation2 + $0xe0] sm:$0xff]
  %v3392 = vld [vmem:[#allocation2 + $0xe8] sm:$0xff]
  %v3393 = vld [vmem:[#allocation2 + $0xf0] sm:$0xff]
  %v3394 = vld [vmem:[#allocation2 + $0xf8] sm:$0xff]
  %v3395 = vld [vmem:[#allocation2 + $0x100] sm:$0xff]
  %v3396 = vld [vmem:[#allocation2 + $0x108] sm:$0xff]
  %v3397 = vld [vmem:[#allocation2 + $0x110] sm:$0xff]
  %v3398 = vld [vmem:[#allocation2 + $0x118] sm:$0xff]
  %v3423 = vunpack.c.l.b16 %v3339
  %v3424 = vunpack.c.h.b16 %v3339
  %v3425 = vunpack.c.l.b16 %v3340
  %v3426 = vunpack.c.h.b16 %v3340
  %v3427 = vunpack.c.l.b16 %v3341
  %v3428 = vunpack.c.l.b16 %v3342
  %v3429 = vunpack.c.h.b16 %v3342
  %v3430 = vunpack.c.l.b16 %v3343
  %v3431 = vunpack.c.h.b16 %v3343
  %v3432 = vunpack.c.l.b16 %v3344
  %v3433 = vunpack.c.l.b16 %v3345
  %v3434 = vunpack.c.h.b16 %v3345
  %v3435 = vunpack.c.l.b16 %v3346
  %v3436 = vunpack.c.h.b16 %v3346
  %v3437 = vunpack.c.l.b16 %v3347
  %v3438 = vunpack.c.l.b16 %v3348
  %v3439 = vunpack.c.h.b16 %v3348
  %v3440 = vunpack.c.l.b16 %v3349
  %v3441 = vunpack.c.h.b16 %v3349
  %v3442 = vunpack.c.l.b16 %v3350
  %v3443 = vunpack.c.l.b16 %v3351
  %v3444 = vunpack.c.h.b16 %v3351
  %v3445 = vunpack.c.l.b16 %v3352
  %v3446 = vunpack.c.h.b16 %v3352
  %v3447 = vunpack.c.l.b16 %v3353
  %v3448 = vunpack.c.l.b16 %v3354
  %v3449 = vunpack.c.h.b16 %v3354
  %v3450 = vunpack.c.l.b16 %v3355
  %v3451 = vunpack.c.h.b16 %v3355
  %v3452 = vunpack.c.l.b16 %v3356
  %v3453 = vunpack.c.l.b16 %v3357
  %v3454 = vunpack.c.h.b16 %v3357
  %v3455 = vunpack.c.l.b16 %v3358
  %v3456 = vunpack.c.h.b16 %v3358
  %v3457 = vunpack.c.l.b16 %v3359
  %v3458 = vunpack.c.l.b16 %v3360
  %v3459 = vunpack.c.h.b16 %v3360
  %v3460 = vunpack.c.l.b16 %v3361
  %v3461 = vunpack.c.h.b16 %v3361
  %v3462 = vunpack.c.l.b16 %v3362
  %v3463 = vpack.c.b16 %v3428, %v3423
  %v3464 = vpack.c.b16 %v3429, %v3424
  %v3465 = vpack.c.b16 %v3430, %v3425
  %v3466 = vpack.c.b16 %v3431, %v3426
  %v3467 = vpack.c.b16 %v3432, %v3427
  %v3468 = vpack.c.b16 %v3438, %v3433
  %v3469 = vpack.c.b16 %v3439, %v3434
  %v3470 = vpack.c.b16 %v3440, %v3435
  %v3471 = vpack.c.b16 %v3441, %v3436
  %v3472 = vpack.c.b16 %v3442, %v3437
  %v3473 = vpack.c.b16 %v3448, %v3443
  %v3474 = vpack.c.b16 %v3449, %v3444
  %v3475 = vpack.c.b16 %v3450, %v3445
  %v3476 = vpack.c.b16 %v3451, %v3446
  %v3477 = vpack.c.b16 %v3452, %v3447
  %v3478 = vpack.c.b16 %v3458, %v3453
  %v3479 = vpack.c.b16 %v3459, %v3454
  %v3480 = vpack.c.b16 %v3460, %v3455
  %v3481 = vpack.c.b16 %v3461, %v3456
  %v3482 = vpack.c.b16 %v3462, %v3457
  %v3500 = vsel %vm261, %v3467, 0
  %v3503 = vsel %vm261, %v3472, 0
  %v3506 = vsel %vm261, %v3477, 0
  %v3509 = vsel %vm261, %v3482, 0
  %3511 = vmatprep.subr.bf16.mxu0 0
  %3512 = vmatpush1.bf16.msra.mxu0 %v3363
  %3513 = vmatprep.subr.bf16.mxu0 0
  %3514 = vmatpush1.bf16.msra.mxu0 %v3364
  %3515 = vmatprep.subr.bf16.mxu0 0
  %3516 = vmatpush1.bf16.msra.mxu0 %v3365
  %3517 = vmatprep.subr.bf16.mxu0 0
  %3518 = vmatpush1.bf16.msra.mxu0 %v3366
  %3519 = vmatprep.subr.bf16.mxu0 0
  %3520 = vmatpush1.bf16.msra.mxu0 %v3367
  %3521 = vmatprep.subr.bf16.mxu0 0
  %3522 = vmatpush1.bf16.msra.mxu0 %v3368
  %3523 = vmatprep.subr.bf16.mxu0 0
  %3524 = vmatpush1.bf16.msra.mxu0 %v3369
  %3525 = vmatprep.subr.bf16.mxu0 0
  %3526 = vmatpush1.bf16.msra.mxu0 %v3370
  %3527 = vmatprep.subr.bf16.mxu0 0
  %3528 = vmatpush1.bf16.msra.mxu0 %v3371
  %3529 = vmatprep.subr.bf16.mxu0 0
  %3530 = vmatpush1.bf16.msra.mxu0 %v3372
  %3531 = vmatprep.subr.bf16.mxu0 0
  %3532 = vmatpush1.bf16.msra.mxu0 %v3373
  %3533 = vmatprep.subr.bf16.mxu0 0
  %3534 = vmatpush1.bf16.msra.mxu0 %v3374
  %3535 = vmatprep.subr.bf16.mxu0 0
  %3536 = vmatpush1.bf16.msra.mxu0 %v3375
  %3537 = vmatprep.subr.bf16.mxu0 0
  %3538 = vmatpush1.bf16.msra.mxu0 %v3376
  %3539 = vmatprep.subr.bf16.mxu0 0
  %3540 = vmatpush1.bf16.msra.mxu0 %v3377
  %3541 = vmatprep.subr.bf16.mxu0 0
  %3542 = vmatpush1.bf16.msra.mxu0 %v3378
  %3543 = vmatprep.mubr.bf16.mxu0 %v3464
  %3544 = vmatmul.mubr.bf16.gmra.mrb[0].mxu0 %v3463
  %v3545 = vpop.f32.mrb[0].mxu0
  %v3546 = vadd.f32 0.0, %v3545
  %v3547 = vpop.f32.mrb[0].mxu0
  %v3548 = vpop.f32.mrb[0].mxu0
  %v3549 = vadd.f32 0.0, %v3548
  %v3550 = vpop.f32.mrb[0].mxu0
  %3551 = vmatprep.mubr.bf16.mxu0 %v3469
  %3552 = vmatmul.mubr.bf16.gmra.mrb[0].mxu0 %v3468
  %v3553 = vpop.f32.mrb[0].mxu0
  %v3554 = vadd.f32 0.0, %v3553
  %v3555 = vpop.f32.mrb[0].mxu0
  %v3556 = vpop.f32.mrb[0].mxu0
  %v3557 = vadd.f32 0.0, %v3556
  %v3558 = vpop.f32.mrb[0].mxu0
  %3559 = vmatprep.mubr.bf16.mxu0 %v3474
  %3560 = vmatmul.mubr.bf16.gmra.mrb[0].mxu0 %v3473
  %v3561 = vpop.f32.mrb[0].mxu0
  %v3562 = vadd.f32 0.0, %v3561
  %v3563 = vpop.f32.mrb[0].mxu0
  %v3564 = vpop.f32.mrb[0].mxu0
  %v3565 = vadd.f32 0.0, %v3564
  %v3566 = vpop.f32.mrb[0].mxu0
  %3567 = vmatprep.mubr.bf16.mxu0 %v3479
  %3568 = vmatmul.mubr.bf16.gmra.mrb[0].mxu0 %v3478
  %v3569 = vpop.f32.mrb[0].mxu0
  %v3570 = vadd.f32 0.0, %v3569
  %v3571 = vpop.f32.mrb[0].mxu0
  %v3572 = vpop.f32.mrb[0].mxu0
  %v3573 = vadd.f32 0.0, %v3572
  %v3574 = vpop.f32.mrb[0].mxu0
  %3575 = vdwg.mxu0
  %3576 = vmatprep.subr.bf16.mxu0 0
  %3577 = vmatpush1.bf16.msra.mxu0 %v3379
  %3578 = vmatprep.subr.bf16.mxu0 0
  %3579 = vmatpush1.bf16.msra.mxu0 %v3380
  %3580 = vmatprep.subr.bf16.mxu0 0
  %3581 = vmatpush1.bf16.msra.mxu0 %v3381
  %3582 = vmatprep.subr.bf16.mxu0 0
  %3583 = vmatpush1.bf16.msra.mxu0 %v3382
  %3584 = vmatprep.subr.bf16.mxu0 0
  %3585 = vmatpush1.bf16.msra.mxu0 %v3383
  %3586 = vmatprep.subr.bf16.mxu0 0
  %3587 = vmatpush1.bf16.msra.mxu0 %v3384
  %3588 = vmatprep.subr.bf16.mxu0 0
  %3589 = vmatpush1.bf16.msra.mxu0 %v3385
  %3590 = vmatprep.subr.bf16.mxu0 0
  %3591 = vmatpush1.bf16.msra.mxu0 %v3386
  %3592 = vmatprep.subr.bf16.mxu0 0
  %3593 = vmatpush1.bf16.msra.mxu0 %v3387
  %3594 = vmatprep.subr.bf16.mxu0 0
  %3595 = vmatpush1.bf16.msra.mxu0 %v3388
  %3596 = vmatprep.subr.bf16.mxu0 0
  %3597 = vmatpush1.bf16.msra.mxu0 %v3389
  %3598 = vmatprep.subr.bf16.mxu0 0
  %3599 = vmatpush1.bf16.msra.mxu0 %v3390
  %3600 = vmatprep.subr.bf16.mxu0 0
  %3601 = vmatpush1.bf16.msra.mxu0 %v3391
  %3602 = vmatprep.subr.bf16.mxu0 0
  %3603 = vmatpush1.bf16.msra.mxu0 %v3392
  %3604 = vmatprep.subr.bf16.mxu0 0
  %3605 = vmatpush1.bf16.msra.mxu0 %v3393
  %3606 = vmatprep.subr.bf16.mxu0 0
  %3607 = vmatpush1.bf16.msra.mxu0 %v3394
  %3608 = vmatprep.mubr.bf16.mxu0 %v3466
  %3609 = vmatmul.mubr.bf16.gmra.mrb[0].mxu0 %v3465
  %v3610 = vpop.f32.mrb[0].mxu0
  %v3611 = vadd.f32 %v3546, %v3610
  %v3612 = vpop.f32.mrb[0].mxu0
  %v3613 = vpop.f32.mrb[0].mxu0
  %v3614 = vadd.f32 %v3549, %v3613
  %v3615 = vpop.f32.mrb[0].mxu0
  %3616 = vmatprep.mubr.bf16.mxu0 %v3471
  %3617 = vmatmul.mubr.bf16.gmra.mrb[0].mxu0 %v3470
  %v3618 = vpop.f32.mrb[0].mxu0
  %v3619 = vadd.f32 %v3554, %v3618
  %v3620 = vpop.f32.mrb[0].mxu0
  %v3621 = vpop.f32.mrb[0].mxu0
  %v3622 = vadd.f32 %v3557, %v3621
  %v3623 = vpop.f32.mrb[0].mxu0
  %3624 = vmatprep.mubr.bf16.mxu0 %v3476
  %3625 = vmatmul.mubr.bf16.gmra.mrb[0].mxu0 %v3475
  %v3626 = vpop.f32.mrb[0].mxu0
  %v3627 = vadd.f32 %v3562, %v3626
  %v3628 = vpop.f32.mrb[0].mxu0
  %v3629 = vpop.f32.mrb[0].mxu0
  %v3630 = vadd.f32 %v3565, %v3629
  %v3631 = vpop.f32.mrb[0].mxu0
  %3632 = vmatprep.mubr.bf16.mxu0 %v3481
  %3633 = vmatmul.mubr.bf16.gmra.mrb[0].mxu0 %v3480
  %v3634 = vpop.f32.mrb[0].mxu0
  %v3635 = vadd.f32 %v3570, %v3634
  %v3636 = vpop.f32.mrb[0].mxu0
  %v3637 = vpop.f32.mrb[0].mxu0
  %v3638 = vadd.f32 %v3573, %v3637
  %v3639 = vpop.f32.mrb[0].mxu0
  %3640 = vdwg.mxu0
  %3641 = vmatprep.subr.bf16.mxu0 0
  %3642 = vmatpush1.bf16.msra.mxu0 %v3395
  %3643 = vmatprep.subr.bf16.mxu0 0
  %3644 = vmatpush1.bf16.msra.mxu0 %v3396
  %3645 = vmatprep.subr.bf16.mxu0 0
  %3646 = vmatpush1.bf16.msra.mxu0 %v3397
  %3647 = vmatprep.subr.bf16.mxu0 0
  %3648 = vmatpush1.bf16.msra.mxu0 %v3398
  %3649 = vmatprep.subr.bf16.mxu0 0
  %3650 = vmatpush1.bf16.msra.mxu0 0
  %3651 = vmatprep.subr.bf16.mxu0 0
  %3652 = vmatpush1.bf16.msra.mxu0 0
  %3653 = vmatprep.subr.bf16.mxu0 0
  %3654 = vmatpush1.bf16.msra.mxu0 0
  %3655 = vmatprep.subr.bf16.mxu0 0
  %3656 = vmatpush1.bf16.msra.mxu0 0
  %3657 = vmatprep.subr.bf16.mxu0 0
  %3658 = vmatpush1.bf16.msra.mxu0 0
  %3659 = vmatprep.subr.bf16.mxu0 0
  %3660 = vmatpush1.bf16.msra.mxu0 0
  %3661 = vmatprep.subr.bf16.mxu0 0
  %3662 = vmatpush1.bf16.msra.mxu0 0
  %3663 = vmatprep.subr.bf16.mxu0 0
  %3664 = vmatpush1.bf16.msra.mxu0 0
  %3665 = vmatprep.subr.bf16.mxu0 0
  %3666 = vmatpush1.bf16.msra.mxu0 0
  %3667 = vmatprep.subr.bf16.mxu0 0
  %3668 = vmatpush1.bf16.msra.mxu0 0
  %3669 = vmatprep.subr.bf16.mxu0 0
  %3670 = vmatpush1.bf16.msra.mxu0 0
  %3671 = vmatprep.subr.bf16.mxu0 0
  %3672 = vmatpush1.bf16.msra.mxu0 0
  %3673 = vmatprep.mubr.bf16.mxu0 0
  %3674 = vmatmul.mubr.bf16.gmra.mrb[0].mxu0 %v3500
  %v3675 = vpop.f32.mrb[0].mxu0
  %v3676 = vadd.f32 %v3611, %v3675
  %v3677 = vpop.f32.mrb[0].mxu0
  %v3678 = vpop.f32.mrb[0].mxu0
  %v3679 = vadd.f32 %v3614, %v3678
  %v3680 = vpop.f32.mrb[0].mxu0
  %3681 = vmatprep.mubr.bf16.mxu0 0
  %3682 = vmatmul.mubr.bf16.gmra.mrb[0].mxu0 %v3503
  %v3683 = vpop.f32.mrb[0].mxu0
  %v3684 = vadd.f32 %v3619, %v3683
  %v3685 = vpop.f32.mrb[0].mxu0
  %v3686 = vpop.f32.mrb[0].mxu0
  %v3687 = vadd.f32 %v3622, %v3686
  %v3688 = vpop.f32.mrb[0].mxu0
  %3689 = vmatprep.mubr.bf16.mxu0 0
  %3690 = vmatmul.mubr.bf16.gmra.mrb[0].mxu0 %v3506
  %v3691 = vpop.f32.mrb[0].mxu0
  %v3692 = vadd.f32 %v3627, %v3691
  %v3693 = vpop.f32.mrb[0].mxu0
  %v3694 = vpop.f32.mrb[0].mxu0
  %v3695 = vadd.f32 %v3630, %v3694
  %v3696 = vpop.f32.mrb[0].mxu0
  %3697 = vmatprep.mubr.bf16.mxu0 0
  %3698 = vmatmul.mubr.bf16.gmra.mrb[0].mxu0 %v3509
  %v3699 = vpop.f32.mrb[0].mxu0
  %v3700 = vadd.f32 %v3635, %v3699
  %v3701 = vpop.f32.mrb[0].mxu0
  %v3702 = vpop.f32.mrb[0].mxu0
  %v3703 = vadd.f32 %v3638, %v3702
  %v3704 = vpop.f32.mrb[0].mxu0
  %3705 = vdwg.mxu0
  %v3706 = vld [vmem:[%s965] sm:$0xff]
  %v3707 = vld [vmem:[%s965 + $0x8] sm:$0xff]
  %v3708 = vld [vmem:[%s965 + $0x10] sm:$0xff]
  %v3709 = vld [vmem:[%s965 + $0x18] sm:$0xff]
  %v3710 = vld [vmem:[%s965 + $0x20] sm:$0xff]
  %v3711 = vld [vmem:[%s965 + $0x28] sm:$0xff]
  %v3712 = vld [vmem:[%s965 + $0x30] sm:$0xff]
  %v3713 = vld [vmem:[%s965 + $0x38] sm:$0xff]
  %v3714 = vld [vmem:[%s965 + $0x40] sm:$0xff]
  %v3715 = vld [vmem:[%s965 + $0x48] sm:$0xff]
  %v3716 = vld [vmem:[%s965 + $0x50] sm:$0xff]
  %v3717 = vld [vmem:[%s965 + $0x58] sm:$0xff]
  %v3718 = vld [vmem:[%s965 + $0x60] sm:$0xff]
  %v3719 = vld [vmem:[%s965 + $0x68] sm:$0xff]
  %v3720 = vld [vmem:[%s965 + $0x70] sm:$0xff]
  %v3721 = vld [vmem:[%s965 + $0x78] sm:$0xff]
  %v3722 = vld [vmem:[%s965 + $0x80] sm:$0xff]
  %v3723 = vld [vmem:[%s965 + $0x88] sm:$0xff]
  %v3724 = vld [vmem:[%s965 + $0x90] sm:$0xff]
  %v3725 = vld [vmem:[%s965 + $0x98] sm:$0xff]
  %v3726 = vld [vmem:[%s965 + $0xa0] sm:$0xff]
  %v3727 = vld [vmem:[%s965 + $0xa8] sm:$0xff]
  %v3728 = vld [vmem:[%s965 + $0xb0] sm:$0xff]
  %v3729 = vld [vmem:[%s965 + $0xb8] sm:$0xff]
  %v3730 = vld [vmem:[%s965 + $0xc0] sm:$0xff]
  %v3731 = vld [vmem:[%s965 + $0xc8] sm:$0xff]
  %v3732 = vld [vmem:[%s965 + $0xd0] sm:$0xff]
  %v3733 = vld [vmem:[%s965 + $0xd8] sm:$0xff]
  %v3734 = vld [vmem:[%s965 + $0xe0] sm:$0xff]
  %v3735 = vld [vmem:[%s965 + $0xe8] sm:$0xff]
  %v3736 = vld [vmem:[%s965 + $0xf0] sm:$0xff]
  %v3737 = vld [vmem:[%s965 + $0xf8] sm:$0xff]
  %v3738 = vld [vmem:[%s965 + $0x100] sm:$0xff]
  %v3739 = vld [vmem:[%s965 + $0x108] sm:$0xff]
  %v3740 = vld [vmem:[%s965 + $0x110] sm:$0xff]
  %v3741 = vld [vmem:[%s965 + $0x118] sm:$0xff]
  %3742 = vmatprep.subr.bf16.mxu0 0
  %3743 = vmatpush1.bf16.msra.mxu0 %v3706
  %3744 = vmatprep.subr.bf16.mxu0 0
  %3745 = vmatpush1.bf16.msra.mxu0 %v3707
  %3746 = vmatprep.subr.bf16.mxu0 0
  %3747 = vmatpush1.bf16.msra.mxu0 %v3708
  %3748 = vmatprep.subr.bf16.mxu0 0
  %3749 = vmatpush1.bf16.msra.mxu0 %v3709
  %3750 = vmatprep.subr.bf16.mxu0 0
  %3751 = vmatpush1.bf16.msra.mxu0 %v3710
  %3752 = vmatprep.subr.bf16.mxu0 0
  %3753 = vmatpush1.bf16.msra.mxu0 %v3711
  %3754 = vmatprep.subr.bf16.mxu0 0
  %3755 = vmatpush1.bf16.msra.mxu0 %v3712
  %3756 = vmatprep.subr.bf16.mxu0 0
  %3757 = vmatpush1.bf16.msra.mxu0 %v3713
  %3758 = vmatprep.subr.bf16.mxu0 0
  %3759 = vmatpush1.bf16.msra.mxu0 %v3714
  %3760 = vmatprep.subr.bf16.mxu0 0
  %3761 = vmatpush1.bf16.msra.mxu0 %v3715
  %3762 = vmatprep.subr.bf16.mxu0 0
  %3763 = vmatpush1.bf16.msra.mxu0 %v3716
  %3764 = vmatprep.subr.bf16.mxu0 0
  %3765 = vmatpush1.bf16.msra.mxu0 %v3717
  %3766 = vmatprep.subr.bf16.mxu0 0
  %3767 = vmatpush1.bf16.msra.mxu0 %v3718
  %3768 = vmatprep.subr.bf16.mxu0 0
  %3769 = vmatpush1.bf16.msra.mxu0 %v3719
  %3770 = vmatprep.subr.bf16.mxu0 0
  %3771 = vmatpush1.bf16.msra.mxu0 %v3720
  %3772 = vmatprep.subr.bf16.mxu0 0
  %3773 = vmatpush1.bf16.msra.mxu0 %v3721
  %3774 = vmatprep.mubr.bf16.mxu0 %v3464
  %3775 = vmatmul.mubr.bf16.gmra.mrb[0].mxu0 %v3463
  %v3776 = vpop.f32.mrb[0].mxu0
  %v3777 = vadd.f32 0.0, %v3776
  %v3778 = vpop.f32.mrb[0].mxu0
  %v3779 = vpop.f32.mrb[0].mxu0
  %v3780 = vadd.f32 0.0, %v3779
  %v3781 = vpop.f32.mrb[0].mxu0
  %3782 = vmatprep.mubr.bf16.mxu0 %v3469
  %3783 = vmatmul.mubr.bf16.gmra.mrb[0].mxu0 %v3468
  %v3784 = vpop.f32.mrb[0].mxu0
  %v3785 = vadd.f32 0.0, %v3784
  %v3786 = vpop.f32.mrb[0].mxu0
  %v3787 = vpop.f32.mrb[0].mxu0
  %v3788 = vadd.f32 0.0, %v3787
  %v3789 = vpop.f32.mrb[0].mxu0
  %3790 = vmatprep.mubr.bf16.mxu0 %v3474
  %3791 = vmatmul.mubr.bf16.gmra.mrb[0].mxu0 %v3473
  %v3792 = vpop.f32.mrb[0].mxu0
  %v3793 = vadd.f32 0.0, %v3792
  %v3794 = vpop.f32.mrb[0].mxu0
  %v3795 = vpop.f32.mrb[0].mxu0
  %v3796 = vadd.f32 0.0, %v3795
  %v3797 = vpop.f32.mrb[0].mxu0
  %3798 = vmatprep.mubr.bf16.mxu0 %v3479
  %3799 = vmatmul.mubr.bf16.gmra.mrb[0].mxu0 %v3478
  %v3800 = vpop.f32.mrb[0].mxu0
  %v3801 = vadd.f32 0.0, %v3800
  %v3802 = vpop.f32.mrb[0].mxu0
  %v3803 = vpop.f32.mrb[0].mxu0
  %v3804 = vadd.f32 0.0, %v3803
  %v3805 = vpop.f32.mrb[0].mxu0
  %3806 = vdwg.mxu0
  %3807 = vmatprep.subr.bf16.mxu0 0
  %3808 = vmatpush1.bf16.msra.mxu0 %v3722
  %3809 = vmatprep.subr.bf16.mxu0 0
  %3810 = vmatpush1.bf16.msra.mxu0 %v3723
  %3811 = vmatprep.subr.bf16.mxu0 0
  %3812 = vmatpush1.bf16.msra.mxu0 %v3724
  %3813 = vmatprep.subr.bf16.mxu0 0
  %3814 = vmatpush1.bf16.msra.mxu0 %v3725
  %3815 = vmatprep.subr.bf16.mxu0 0
  %3816 = vmatpush1.bf16.msra.mxu0 %v3726
  %3817 = vmatprep.subr.bf16.mxu0 0
  %3818 = vmatpush1.bf16.msra.mxu0 %v3727
  %3819 = vmatprep.subr.bf16.mxu0 0
  %3820 = vmatpush1.bf16.msra.mxu0 %v3728
  %3821 = vmatprep.subr.bf16.mxu0 0
  %3822 = vmatpush1.bf16.msra.mxu0 %v3729
  %3823 = vmatprep.subr.bf16.mxu0 0
  %3824 = vmatpush1.bf16.msra.mxu0 %v3730
  %3825 = vmatprep.subr.bf16.mxu0 0
  %3826 = vmatpush1.bf16.msra.mxu0 %v3731
  %3827 = vmatprep.subr.bf16.mxu0 0
  %3828 = vmatpush1.bf16.msra.mxu0 %v3732
  %3829 = vmatprep.subr.bf16.mxu0 0
  %3830 = vmatpush1.bf16.msra.mxu0 %v3733
  %3831 = vmatprep.subr.bf16.mxu0 0
  %3832 = vmatpush1.bf16.msra.mxu0 %v3734
  %3833 = vmatprep.subr.bf16.mxu0 0
  %3834 = vmatpush1.bf16.msra.mxu0 %v3735
  %3835 = vmatprep.subr.bf16.mxu0 0
  %3836 = vmatpush1.bf16.msra.mxu0 %v3736
  %3837 = vmatprep.subr.bf16.mxu0 0
  %3838 = vmatpush1.bf16.msra.mxu0 %v3737
  %3839 = vmatprep.mubr.bf16.mxu0 %v3466
  %3840 = vmatmul.mubr.bf16.gmra.mrb[0].mxu0 %v3465
  %v3841 = vpop.f32.mrb[0].mxu0
  %v3842 = vadd.f32 %v3777, %v3841
  %v3843 = vpop.f32.mrb[0].mxu0
  %v3844 = vpop.f32.mrb[0].mxu0
  %v3845 = vadd.f32 %v3780, %v3844
  %v3846 = vpop.f32.mrb[0].mxu0
  %3847 = vmatprep.mubr.bf16.mxu0 %v3471
  %3848 = vmatmul.mubr.bf16.gmra.mrb[0].mxu0 %v3470
  %v3849 = vpop.f32.mrb[0].mxu0
  %v3850 = vadd.f32 %v3785, %v3849
  %v3851 = vpop.f32.mrb[0].mxu0
  %v3852 = vpop.f32.mrb[0].mxu0
  %v3853 = vadd.f32 %v3788, %v3852
  %v3854 = vpop.f32.mrb[0].mxu0
  %3855 = vmatprep.mubr.bf16.mxu0 %v3476
  %3856 = vmatmul.mubr.bf16.gmra.mrb[0].mxu0 %v3475
  %v3857 = vpop.f32.mrb[0].mxu0
  %v3858 = vadd.f32 %v3793, %v3857
  %v3859 = vpop.f32.mrb[0].mxu0
  %v3860 = vpop.f32.mrb[0].mxu0
  %v3861 = vadd.f32 %v3796, %v3860
  %v3862 = vpop.f32.mrb[0].mxu0
  %3863 = vmatprep.mubr.bf16.mxu0 %v3481
  %3864 = vmatmul.mubr.bf16.gmra.mrb[0].mxu0 %v3480
  %v3865 = vpop.f32.mrb[0].mxu0
  %v3866 = vadd.f32 %v3801, %v3865
  %v3867 = vpop.f32.mrb[0].mxu0
  %v3868 = vpop.f32.mrb[0].mxu0
  %v3869 = vadd.f32 %v3804, %v3868
  %v3870 = vpop.f32.mrb[0].mxu0
  %3871 = vdwg.mxu0
  %3872 = vmatprep.subr.bf16.mxu0 0
  %3873 = vmatpush1.bf16.msra.mxu0 %v3738
  %3874 = vmatprep.subr.bf16.mxu0 0
  %3875 = vmatpush1.bf16.msra.mxu0 %v3739
  %3876 = vmatprep.subr.bf16.mxu0 0
  %3877 = vmatpush1.bf16.msra.mxu0 %v3740
  %3878 = vmatprep.subr.bf16.mxu0 0
  %3879 = vmatpush1.bf16.msra.mxu0 %v3741
  %3880 = vmatprep.subr.bf16.mxu0 0
  %3881 = vmatpush1.bf16.msra.mxu0 0
  %3882 = vmatprep.subr.bf16.mxu0 0
  %3883 = vmatpush1.bf16.msra.mxu0 0
  %3884 = vmatprep.subr.bf16.mxu0 0
  %3885 = vmatpush1.bf16.msra.mxu0 0
  %3886 = vmatprep.subr.bf16.mxu0 0
  %3887 = vmatpush1.bf16.msra.mxu0 0
  %3888 = vmatprep.subr.bf16.mxu0 0
  %3889 = vmatpush1.bf16.msra.mxu0 0
  %3890 = vmatprep.subr.bf16.mxu0 0
  %3891 = vmatpush1.bf16.msra.mxu0 0
  %3892 = vmatprep.subr.bf16.mxu0 0
  %3893 = vmatpush1.bf16.msra.mxu0 0
  %3894 = vmatprep.subr.bf16.mxu0 0
  %3895 = vmatpush1.bf16.msra.mxu0 0
  %3896 = vmatprep.subr.bf16.mxu0 0
  %3897 = vmatpush1.bf16.msra.mxu0 0
  %3898 = vmatprep.subr.bf16.mxu0 0
  %3899 = vmatpush1.bf16.msra.mxu0 0
  %3900 = vmatprep.subr.bf16.mxu0 0
  %3901 = vmatpush1.bf16.msra.mxu0 0
  %3902 = vmatprep.subr.bf16.mxu0 0
  %3903 = vmatpush1.bf16.msra.mxu0 0
  %3904 = vmatprep.mubr.bf16.mxu0 0
  %3905 = vmatmul.mubr.bf16.gmra.mrb[0].mxu0 %v3500
  %v3906 = vpop.f32.mrb[0].mxu0
  %v3907 = vadd.f32 %v3842, %v3906
  %v3908 = vpop.f32.mrb[0].mxu0
  %v3909 = vpop.f32.mrb[0].mxu0
  %v3910 = vadd.f32 %v3845, %v3909
  %v3911 = vpop.f32.mrb[0].mxu0
  %3912 = vmatprep.mubr.bf16.mxu0 0
  %3913 = vmatmul.mubr.bf16.gmra.mrb[0].mxu0 %v3503
  %v3914 = vpop.f32.mrb[0].mxu0
  %v3915 = vadd.f32 %v3850, %v3914
  %v3916 = vpop.f32.mrb[0].mxu0
  %v3917 = vpop.f32.mrb[0].mxu0
  %v3918 = vadd.f32 %v3853, %v3917
  %v3919 = vpop.f32.mrb[0].mxu0
  %3920 = vmatprep.mubr.bf16.mxu0 0
  %3921 = vmatmul.mubr.bf16.gmra.mrb[0].mxu0 %v3506
  %v3922 = vpop.f32.mrb[0].mxu0
  %v3923 = vadd.f32 %v3858, %v3922
  %v3924 = vpop.f32.mrb[0].mxu0
  %v3925 = vpop.f32.mrb[0].mxu0
  %v3926 = vadd.f32 %v3861, %v3925
  %v3927 = vpop.f32.mrb[0].mxu0
  %3928 = vmatprep.mubr.bf16.mxu0 0
  %3929 = vmatmul.mubr.bf16.gmra.mrb[0].mxu0 %v3509
  %v3930 = vpop.f32.mrb[0].mxu0
  %v3931 = vadd.f32 %v3866, %v3930
  %v3932 = vpop.f32.mrb[0].mxu0
  %v3933 = vpop.f32.mrb[0].mxu0
  %v3934 = vadd.f32 %v3869, %v3933
  %v3935 = vpop.f32.mrb[0].mxu0
  %3936 = vdwg.mxu0
  %v3937 = vld [vmem:[%s1491] sm:$0xff]
  %v3938 = vld [vmem:[%s1491 + $0x8] sm:$0xff]
  %v3939 = vld [vmem:[%s1491 + $0x10] sm:$0xff]
  %v3940 = vld [vmem:[%s1491 + $0x18] sm:$0xff]
  %v3941 = vld [vmem:[%s1491 + $0x20] sm:$0xff]
  %v3942 = vld [vmem:[%s1491 + $0x28] sm:$0xff]
  %v3943 = vld [vmem:[%s1491 + $0x30] sm:$0xff]
  %v3944 = vld [vmem:[%s1491 + $0x38] sm:$0xff]
  %v3945 = vld [vmem:[%s1491 + $0x40] sm:$0xff]
  %v3946 = vld [vmem:[%s1491 + $0x48] sm:$0xff]
  %v3947 = vld [vmem:[%s1491 + $0x50] sm:$0xff]
  %v3948 = vld [vmem:[%s1491 + $0x58] sm:$0xff]
  %v3949 = vld [vmem:[%s1491 + $0x60] sm:$0xff]
  %v3950 = vld [vmem:[%s1491 + $0x68] sm:$0xff]
  %v3951 = vld [vmem:[%s1491 + $0x70] sm:$0xff]
  %v3952 = vld [vmem:[%s1491 + $0x78] sm:$0xff]
  %v3953 = vld [vmem:[%s1491 + $0x80] sm:$0xff]
  %v3954 = vld [vmem:[%s1491 + $0x88] sm:$0xff]
  %v3955 = vld [vmem:[%s1491 + $0x90] sm:$0xff]
  %v3956 = vld [vmem:[%s1491 + $0x98] sm:$0xff]
  %v3957 = vld [vmem:[%s1491 + $0xa0] sm:$0xff]
  %v3958 = vld [vmem:[%s1491 + $0xa8] sm:$0xff]
  %v3959 = vld [vmem:[%s1491 + $0xb0] sm:$0xff]
  %v3960 = vld [vmem:[%s1491 + $0xb8] sm:$0xff]
  %v3961 = vld [vmem:[%s1491 + $0xc0] sm:$0xff]
  %v3962 = vld [vmem:[%s1491 + $0xc8] sm:$0xff]
  %v3963 = vld [vmem:[%s1491 + $0xd0] sm:$0xff]
  %v3964 = vld [vmem:[%s1491 + $0xd8] sm:$0xff]
  %v3965 = vld [vmem:[%s1491 + $0xe0] sm:$0xff]
  %v3966 = vld [vmem:[%s1491 + $0xe8] sm:$0xff]
  %v3967 = vld [vmem:[%s1491 + $0xf0] sm:$0xff]
  %v3968 = vld [vmem:[%s1491 + $0xf8] sm:$0xff]
  %v3969 = vld [vmem:[%s1491 + $0x100] sm:$0xff]
  %v3970 = vld [vmem:[%s1491 + $0x108] sm:$0xff]
  %v3971 = vld [vmem:[%s1491 + $0x110] sm:$0xff]
  %v3972 = vld [vmem:[%s1491 + $0x118] sm:$0xff]
  %3973 = vmatprep.subr.bf16.mxu0 0
  %3974 = vmatpush1.bf16.msra.mxu0 %v3937
  %3975 = vmatprep.subr.bf16.mxu0 0
  %3976 = vmatpush1.bf16.msra.mxu0 %v3938
  %3977 = vmatprep.subr.bf16.mxu0 0
  %3978 = vmatpush1.bf16.msra.mxu0 %v3939
  %3979 = vmatprep.subr.bf16.mxu0 0
  %3980 = vmatpush1.bf16.msra.mxu0 %v3940
  %3981 = vmatprep.subr.bf16.mxu0 0
  %3982 = vmatpush1.bf16.msra.mxu0 %v3941
  %3983 = vmatprep.subr.bf16.mxu0 0
  %3984 = vmatpush1.bf16.msra.mxu0 %v3942
  %3985 = vmatprep.subr.bf16.mxu0 0
  %3986 = vmatpush1.bf16.msra.mxu0 %v3943
  %3987 = vmatprep.subr.bf16.mxu0 0
  %3988 = vmatpush1.bf16.msra.mxu0 %v3944
  %3989 = vmatprep.subr.bf16.mxu0 0
  %3990 = vmatpush1.bf16.msra.mxu0 %v3945
  %3991 = vmatprep.subr.bf16.mxu0 0
  %3992 = vmatpush1.bf16.msra.mxu0 %v3946
  %3993 = vmatprep.subr.bf16.mxu0 0
  %3994 = vmatpush1.bf16.msra.mxu0 %v3947
  %3995 = vmatprep.subr.bf16.mxu0 0
  %3996 = vmatpush1.bf16.msra.mxu0 %v3948
  %3997 = vmatprep.subr.bf16.mxu0 0
  %3998 = vmatpush1.bf16.msra.mxu0 %v3949
  %3999 = vmatprep.subr.bf16.mxu0 0
  %4000 = vmatpush1.bf16.msra.mxu0 %v3950
  %4001 = vmatprep.subr.bf16.mxu0 0
  %4002 = vmatpush1.bf16.msra.mxu0 %v3951
  %4003 = vmatprep.subr.bf16.mxu0 0
  %4004 = vmatpush1.bf16.msra.mxu0 %v3952
  %4005 = vmatprep.mubr.bf16.mxu0 %v3464
  %4006 = vmatmul.mubr.bf16.gmra.mrb[0].mxu0 %v3463
  %v4007 = vpop.f32.mrb[0].mxu0
  %v4008 = vadd.f32 0.0, %v4007
  %v4009 = vpop.f32.mrb[0].mxu0
  %v4010 = vpop.f32.mrb[0].mxu0
  %v4011 = vadd.f32 0.0, %v4010
  %v4012 = vpop.f32.mrb[0].mxu0
  %4013 = vmatprep.mubr.bf16.mxu0 %v3469
  %4014 = vmatmul.mubr.bf16.gmra.mrb[0].mxu0 %v3468
  %v4015 = vpop.f32.mrb[0].mxu0
  %v4016 = vadd.f32 0.0, %v4015
  %v4017 = vpop.f32.mrb[0].mxu0
  %v4018 = vpop.f32.mrb[0].mxu0
  %v4019 = vadd.f32 0.0, %v4018
  %v4020 = vpop.f32.mrb[0].mxu0
  %4021 = vmatprep.mubr.bf16.mxu0 %v3474
  %4022 = vmatmul.mubr.bf16.gmra.mrb[0].mxu0 %v3473
  %v4023 = vpop.f32.mrb[0].mxu0
  %v4024 = vadd.f32 0.0, %v4023
  %v4025 = vpop.f32.mrb[0].mxu0
  %v4026 = vpop.f32.mrb[0].mxu0
  %v4027 = vadd.f32 0.0, %v4026
  %v4028 = vpop.f32.mrb[0].mxu0
  %4029 = vmatprep.mubr.bf16.mxu0 %v3479
  %4030 = vmatmul.mubr.bf16.gmra.mrb[0].mxu0 %v3478
  %v4031 = vpop.f32.mrb[0].mxu0
  %v4032 = vadd.f32 0.0, %v4031
  %v4033 = vpop.f32.mrb[0].mxu0
  %v4034 = vpop.f32.mrb[0].mxu0
  %v4035 = vadd.f32 0.0, %v4034
  %v4036 = vpop.f32.mrb[0].mxu0
  %4037 = vdwg.mxu0
  %4038 = vmatprep.subr.bf16.mxu0 0
  %4039 = vmatpush1.bf16.msra.mxu0 %v3953
  %4040 = vmatprep.subr.bf16.mxu0 0
  %4041 = vmatpush1.bf16.msra.mxu0 %v3954
  %4042 = vmatprep.subr.bf16.mxu0 0
  %4043 = vmatpush1.bf16.msra.mxu0 %v3955
  %4044 = vmatprep.subr.bf16.mxu0 0
  %4045 = vmatpush1.bf16.msra.mxu0 %v3956
  %4046 = vmatprep.subr.bf16.mxu0 0
  %4047 = vmatpush1.bf16.msra.mxu0 %v3957
  %4048 = vmatprep.subr.bf16.mxu0 0
  %4049 = vmatpush1.bf16.msra.mxu0 %v3958
  %4050 = vmatprep.subr.bf16.mxu0 0
  %4051 = vmatpush1.bf16.msra.mxu0 %v3959
  %4052 = vmatprep.subr.bf16.mxu0 0
  %4053 = vmatpush1.bf16.msra.mxu0 %v3960
  %4054 = vmatprep.subr.bf16.mxu0 0
  %4055 = vmatpush1.bf16.msra.mxu0 %v3961
  %4056 = vmatprep.subr.bf16.mxu0 0
  %4057 = vmatpush1.bf16.msra.mxu0 %v3962
  %4058 = vmatprep.subr.bf16.mxu0 0
  %4059 = vmatpush1.bf16.msra.mxu0 %v3963
  %4060 = vmatprep.subr.bf16.mxu0 0
  %4061 = vmatpush1.bf16.msra.mxu0 %v3964
  %4062 = vmatprep.subr.bf16.mxu0 0
  %4063 = vmatpush1.bf16.msra.mxu0 %v3965
  %4064 = vmatprep.subr.bf16.mxu0 0
  %4065 = vmatpush1.bf16.msra.mxu0 %v3966
  %4066 = vmatprep.subr.bf16.mxu0 0
  %4067 = vmatpush1.bf16.msra.mxu0 %v3967
  %4068 = vmatprep.subr.bf16.mxu0 0
  %4069 = vmatpush1.bf16.msra.mxu0 %v3968
  %4070 = vmatprep.mubr.bf16.mxu0 %v3466
  %4071 = vmatmul.mubr.bf16.gmra.mrb[0].mxu0 %v3465
  %v4072 = vpop.f32.mrb[0].mxu0
  %v4073 = vadd.f32 %v4008, %v4072
  %v4074 = vpop.f32.mrb[0].mxu0
  %v4075 = vpop.f32.mrb[0].mxu0
  %v4076 = vadd.f32 %v4011, %v4075
  %v4077 = vpop.f32.mrb[0].mxu0
  %4078 = vmatprep.mubr.bf16.mxu0 %v3471
  %4079 = vmatmul.mubr.bf16.gmra.mrb[0].mxu0 %v3470
  %v4080 = vpop.f32.mrb[0].mxu0
  %v4081 = vadd.f32 %v4016, %v4080
  %v4082 = vpop.f32.mrb[0].mxu0
  %v4083 = vpop.f32.mrb[0].mxu0
  %v4084 = vadd.f32 %v4019, %v4083
  %v4085 = vpop.f32.mrb[0].mxu0
  %4086 = vmatprep.mubr.bf16.mxu0 %v3476
  %4087 = vmatmul.mubr.bf16.gmra.mrb[0].mxu0 %v3475
  %v4088 = vpop.f32.mrb[0].mxu0
  %v4089 = vadd.f32 %v4024, %v4088
  %v4090 = vpop.f32.mrb[0].mxu0
  %v4091 = vpop.f32.mrb[0].mxu0
  %v4092 = vadd.f32 %v4027, %v4091
  %v4093 = vpop.f32.mrb[0].mxu0
  %4094 = vmatprep.mubr.bf16.mxu0 %v3481
  %4095 = vmatmul.mubr.bf16.gmra.mrb[0].mxu0 %v3480
  %v4096 = vpop.f32.mrb[0].mxu0
  %v4097 = vadd.f32 %v4032, %v4096
  %v4098 = vpop.f32.mrb[0].mxu0
  %v4099 = vpop.f32.mrb[0].mxu0
  %v4100 = vadd.f32 %v4035, %v4099
  %v4101 = vpop.f32.mrb[0].mxu0
  %4102 = vdwg.mxu0
  %4103 = vmatprep.subr.bf16.mxu0 0
  %4104 = vmatpush1.bf16.msra.mxu0 %v3969
  %4105 = vmatprep.subr.bf16.mxu0 0
  %4106 = vmatpush1.bf16.msra.mxu0 %v3970
  %4107 = vmatprep.subr.bf16.mxu0 0
  %4108 = vmatpush1.bf16.msra.mxu0 %v3971
  %4109 = vmatprep.subr.bf16.mxu0 0
  %4110 = vmatpush1.bf16.msra.mxu0 %v3972
  %4111 = vmatprep.subr.bf16.mxu0 0
  %4112 = vmatpush1.bf16.msra.mxu0 0
  %4113 = vmatprep.subr.bf16.mxu0 0
  %4114 = vmatpush1.bf16.msra.mxu0 0
  %4115 = vmatprep.subr.bf16.mxu0 0
  %4116 = vmatpush1.bf16.msra.mxu0 0
  %4117 = vmatprep.subr.bf16.mxu0 0
  %4118 = vmatpush1.bf16.msra.mxu0 0
  %4119 = vmatprep.subr.bf16.mxu0 0
  %4120 = vmatpush1.bf16.msra.mxu0 0
  %4121 = vmatprep.subr.bf16.mxu0 0
  %4122 = vmatpush1.bf16.msra.mxu0 0
  %4123 = vmatprep.subr.bf16.mxu0 0
  %4124 = vmatpush1.bf16.msra.mxu0 0
  %4125 = vmatprep.subr.bf16.mxu0 0
  %4126 = vmatpush1.bf16.msra.mxu0 0
  %4127 = vmatprep.subr.bf16.mxu0 0
  %4128 = vmatpush1.bf16.msra.mxu0 0
  %4129 = vmatprep.subr.bf16.mxu0 0
  %4130 = vmatpush1.bf16.msra.mxu0 0
  %4131 = vmatprep.subr.bf16.mxu0 0
  %4132 = vmatpush1.bf16.msra.mxu0 0
  %4133 = vmatprep.subr.bf16.mxu0 0
  %4134 = vmatpush1.bf16.msra.mxu0 0
  %4135 = vmatprep.mubr.bf16.mxu0 0
  %4136 = vmatmul.mubr.bf16.gmra.mrb[0].mxu0 %v3500
  %v4137 = vpop.f32.mrb[0].mxu0
  %v4138 = vadd.f32 %v4073, %v4137
  %v4139 = vpop.f32.mrb[0].mxu0
  %v4140 = vpop.f32.mrb[0].mxu0
  %v4141 = vadd.f32 %v4076, %v4140
  %v4142 = vpop.f32.mrb[0].mxu0
  %4143 = vmatprep.mubr.bf16.mxu0 0
  %4144 = vmatmul.mubr.bf16.gmra.mrb[0].mxu0 %v3503
  %v4145 = vpop.f32.mrb[0].mxu0
  %v4146 = vadd.f32 %v4081, %v4145
  %v4147 = vpop.f32.mrb[0].mxu0
  %v4148 = vpop.f32.mrb[0].mxu0
  %v4149 = vadd.f32 %v4084, %v4148
  %v4150 = vpop.f32.mrb[0].mxu0
  %4151 = vmatprep.mubr.bf16.mxu0 0
  %4152 = vmatmul.mubr.bf16.gmra.mrb[0].mxu0 %v3506
  %v4153 = vpop.f32.mrb[0].mxu0
  %v4154 = vadd.f32 %v4089, %v4153
  %v4155 = vpop.f32.mrb[0].mxu0
  %v4156 = vpop.f32.mrb[0].mxu0
  %v4157 = vadd.f32 %v4092, %v4156
  %v4158 = vpop.f32.mrb[0].mxu0
  %4159 = vmatprep.mubr.bf16.mxu0 0
  %4160 = vmatmul.mubr.bf16.gmra.mrb[0].mxu0 %v3509
  %v4161 = vpop.f32.mrb[0].mxu0
  %v4162 = vadd.f32 %v4097, %v4161
  %v4163 = vpop.f32.mrb[0].mxu0
  %v4164 = vpop.f32.mrb[0].mxu0
  %v4165 = vadd.f32 %v4100, %v4164
  %v4166 = vpop.f32.mrb[0].mxu0
  %4167 = vdwg.mxu0
  %v4168 = vld [vmem:[%s2017] sm:$0xff]
  %v4169 = vld [vmem:[%s2017 + $0x8] sm:$0xff]
  %v4170 = vld [vmem:[%s2017 + $0x10] sm:$0xff]
  %v4171 = vld [vmem:[%s2017 + $0x18] sm:$0xff]
  %v4172 = vld [vmem:[%s2017 + $0x20] sm:$0xff]
  %v4173 = vld [vmem:[%s2017 + $0x28] sm:$0xff]
  %v4174 = vld [vmem:[%s2017 + $0x30] sm:$0xff]
  %v4175 = vld [vmem:[%s2017 + $0x38] sm:$0xff]
  %v4176 = vld [vmem:[%s2017 + $0x40] sm:$0xff]
  %v4177 = vld [vmem:[%s2017 + $0x48] sm:$0xff]
  %v4178 = vld [vmem:[%s2017 + $0x50] sm:$0xff]
  %v4179 = vld [vmem:[%s2017 + $0x58] sm:$0xff]
  %v4180 = vld [vmem:[%s2017 + $0x60] sm:$0xff]
  %v4181 = vld [vmem:[%s2017 + $0x68] sm:$0xff]
  %v4182 = vld [vmem:[%s2017 + $0x70] sm:$0xff]
  %v4183 = vld [vmem:[%s2017 + $0x78] sm:$0xff]
  %v4184 = vld [vmem:[%s2017 + $0x80] sm:$0xff]
  %v4185 = vld [vmem:[%s2017 + $0x88] sm:$0xff]
  %v4186 = vld [vmem:[%s2017 + $0x90] sm:$0xff]
  %v4187 = vld [vmem:[%s2017 + $0x98] sm:$0xff]
  %v4188 = vld [vmem:[%s2017 + $0xa0] sm:$0xff]
  %v4189 = vld [vmem:[%s2017 + $0xa8] sm:$0xff]
  %v4190 = vld [vmem:[%s2017 + $0xb0] sm:$0xff]
  %v4191 = vld [vmem:[%s2017 + $0xb8] sm:$0xff]
  %v4192 = vld [vmem:[%s2017 + $0xc0] sm:$0xff]
  %v4193 = vld [vmem:[%s2017 + $0xc8] sm:$0xff]
  %v4194 = vld [vmem:[%s2017 + $0xd0] sm:$0xff]
  %v4195 = vld [vmem:[%s2017 + $0xd8] sm:$0xff]
  %v4196 = vld [vmem:[%s2017 + $0xe0] sm:$0xff]
  %v4197 = vld [vmem:[%s2017 + $0xe8] sm:$0xff]
  %v4198 = vld [vmem:[%s2017 + $0xf0] sm:$0xff]
  %v4199 = vld [vmem:[%s2017 + $0xf8] sm:$0xff]
  %v4200 = vld [vmem:[%s2017 + $0x100] sm:$0xff]
  %v4201 = vld [vmem:[%s2017 + $0x108] sm:$0xff]
  %v4202 = vld [vmem:[%s2017 + $0x110] sm:$0xff]
  %v4203 = vld [vmem:[%s2017 + $0x118] sm:$0xff]
  %4204 = vmatprep.subr.bf16.mxu0 0
  %4205 = vmatpush1.bf16.msra.mxu0 %v4168
  %4206 = vmatprep.subr.bf16.mxu0 0
  %4207 = vmatpush1.bf16.msra.mxu0 %v4169
  %4208 = vmatprep.subr.bf16.mxu0 0
  %4209 = vmatpush1.bf16.msra.mxu0 %v4170
  %4210 = vmatprep.subr.bf16.mxu0 0
  %4211 = vmatpush1.bf16.msra.mxu0 %v4171
  %4212 = vmatprep.subr.bf16.mxu0 0
  %4213 = vmatpush1.bf16.msra.mxu0 %v4172
  %4214 = vmatprep.subr.bf16.mxu0 0
  %4215 = vmatpush1.bf16.msra.mxu0 %v4173
  %4216 = vmatprep.subr.bf16.mxu0 0
  %4217 = vmatpush1.bf16.msra.mxu0 %v4174
  %4218 = vmatprep.subr.bf16.mxu0 0
  %4219 = vmatpush1.bf16.msra.mxu0 %v4175
  %4220 = vmatprep.subr.bf16.mxu0 0
  %4221 = vmatpush1.bf16.msra.mxu0 %v4176
  %4222 = vmatprep.subr.bf16.mxu0 0
  %4223 = vmatpush1.bf16.msra.mxu0 %v4177
  %4224 = vmatprep.subr.bf16.mxu0 0
  %4225 = vmatpush1.bf16.msra.mxu0 %v4178
  %4226 = vmatprep.subr.bf16.mxu0 0
  %4227 = vmatpush1.bf16.msra.mxu0 %v4179
  %4228 = vmatprep.subr.bf16.mxu0 0
  %4229 = vmatpush1.bf16.msra.mxu0 %v4180
  %4230 = vmatprep.subr.bf16.mxu0 0
  %4231 = vmatpush1.bf16.msra.mxu0 %v4181
  %4232 = vmatprep.subr.bf16.mxu0 0
  %4233 = vmatpush1.bf16.msra.mxu0 %v4182
  %4234 = vmatprep.subr.bf16.mxu0 0
  %4235 = vmatpush1.bf16.msra.mxu0 %v4183
  %4236 = vmatprep.mubr.bf16.mxu0 %v3464
  %4237 = vmatmul.mubr.bf16.gmra.mrb[0].mxu0 %v3463
  %v4238 = vpop.f32.mrb[0].mxu0
  %v4239 = vadd.f32 0.0, %v4238
  %v4240 = vpop.f32.mrb[0].mxu0
  %v4241 = vpop.f32.mrb[0].mxu0
  %v4242 = vadd.f32 0.0, %v4241
  %v4243 = vpop.f32.mrb[0].mxu0
  %4244 = vmatprep.mubr.bf16.mxu0 %v3469
  %4245 = vmatmul.mubr.bf16.gmra.mrb[0].mxu0 %v3468
  %v4246 = vpop.f32.mrb[0].mxu0
  %v4247 = vadd.f32 0.0, %v4246
  %v4248 = vpop.f32.mrb[0].mxu0
  %v4249 = vpop.f32.mrb[0].mxu0
  %v4250 = vadd.f32 0.0, %v4249
  %v4251 = vpop.f32.mrb[0].mxu0
  %4252 = vmatprep.mubr.bf16.mxu0 %v3474
  %4253 = vmatmul.mubr.bf16.gmra.mrb[0].mxu0 %v3473
  %v4254 = vpop.f32.mrb[0].mxu0
  %v4255 = vadd.f32 0.0, %v4254
  %v4256 = vpop.f32.mrb[0].mxu0
  %v4257 = vpop.f32.mrb[0].mxu0
  %v4258 = vadd.f32 0.0, %v4257
  %v4259 = vpop.f32.mrb[0].mxu0
  %4260 = vmatprep.mubr.bf16.mxu0 %v3479
  %4261 = vmatmul.mubr.bf16.gmra.mrb[0].mxu0 %v3478
  %v4262 = vpop.f32.mrb[0].mxu0
  %v4263 = vadd.f32 0.0, %v4262
  %v4264 = vpop.f32.mrb[0].mxu0
  %v4265 = vpop.f32.mrb[0].mxu0
  %v4266 = vadd.f32 0.0, %v4265
  %v4267 = vpop.f32.mrb[0].mxu0
  %4268 = vdwg.mxu0
  %4269 = vmatprep.subr.bf16.mxu0 0
  %4270 = vmatpush1.bf16.msra.mxu0 %v4184
  %4271 = vmatprep.subr.bf16.mxu0 0
  %4272 = vmatpush1.bf16.msra.mxu0 %v4185
  %4273 = vmatprep.subr.bf16.mxu0 0
  %4274 = vmatpush1.bf16.msra.mxu0 %v4186
  %4275 = vmatprep.subr.bf16.mxu0 0
  %4276 = vmatpush1.bf16.msra.mxu0 %v4187
  %4277 = vmatprep.subr.bf16.mxu0 0
  %4278 = vmatpush1.bf16.msra.mxu0 %v4188
  %4279 = vmatprep.subr.bf16.mxu0 0
  %4280 = vmatpush1.bf16.msra.mxu0 %v4189
  %4281 = vmatprep.subr.bf16.mxu0 0
  %4282 = vmatpush1.bf16.msra.mxu0 %v4190
  %4283 = vmatprep.subr.bf16.mxu0 0
  %4284 = vmatpush1.bf16.msra.mxu0 %v4191
  %4285 = vmatprep.subr.bf16.mxu0 0
  %4286 = vmatpush1.bf16.msra.mxu0 %v4192
  %4287 = vmatprep.subr.bf16.mxu0 0
  %4288 = vmatpush1.bf16.msra.mxu0 %v4193
  %4289 = vmatprep.subr.bf16.mxu0 0
  %4290 = vmatpush1.bf16.msra.mxu0 %v4194
  %4291 = vmatprep.subr.bf16.mxu0 0
  %4292 = vmatpush1.bf16.msra.mxu0 %v4195
  %4293 = vmatprep.subr.bf16.mxu0 0
  %4294 = vmatpush1.bf16.msra.mxu0 %v4196
  %4295 = vmatprep.subr.bf16.mxu0 0
  %4296 = vmatpush1.bf16.msra.mxu0 %v4197
  %4297 = vmatprep.subr.bf16.mxu0 0
  %4298 = vmatpush1.bf16.msra.mxu0 %v4198
  %4299 = vmatprep.subr.bf16.mxu0 0
  %4300 = vmatpush1.bf16.msra.mxu0 %v4199
  %4301 = vmatprep.mubr.bf16.mxu0 %v3466
  %4302 = vmatmul.mubr.bf16.gmra.mrb[0].mxu0 %v3465
  %v4303 = vpop.f32.mrb[0].mxu0
  %v4304 = vadd.f32 %v4239, %v4303
  %v4305 = vpop.f32.mrb[0].mxu0
  %v4306 = vpop.f32.mrb[0].mxu0
  %v4307 = vadd.f32 %v4242, %v4306
  %v4308 = vpop.f32.mrb[0].mxu0
  %4309 = vmatprep.mubr.bf16.mxu0 %v3471
  %4310 = vmatmul.mubr.bf16.gmra.mrb[0].mxu0 %v3470
  %v4311 = vpop.f32.mrb[0].mxu0
  %v4312 = vadd.f32 %v4247, %v4311
  %v4313 = vpop.f32.mrb[0].mxu0
  %v4314 = vpop.f32.mrb[0].mxu0
  %v4315 = vadd.f32 %v4250, %v4314
  %v4316 = vpop.f32.mrb[0].mxu0
  %4317 = vmatprep.mubr.bf16.mxu0 %v3476
  %4318 = vmatmul.mubr.bf16.gmra.mrb[0].mxu0 %v3475
  %v4319 = vpop.f32.mrb[0].mxu0
  %v4320 = vadd.f32 %v4255, %v4319
  %v4321 = vpop.f32.mrb[0].mxu0
  %v4322 = vpop.f32.mrb[0].mxu0
  %v4323 = vadd.f32 %v4258, %v4322
  %v4324 = vpop.f32.mrb[0].mxu0
  %4325 = vmatprep.mubr.bf16.mxu0 %v3481
  %4326 = vmatmul.mubr.bf16.gmra.mrb[0].mxu0 %v3480
  %v4327 = vpop.f32.mrb[0].mxu0
  %v4328 = vadd.f32 %v4263, %v4327
  %v4329 = vpop.f32.mrb[0].mxu0
  %v4330 = vpop.f32.mrb[0].mxu0
  %v4331 = vadd.f32 %v4266, %v4330
  %v4332 = vpop.f32.mrb[0].mxu0
  %4333 = vdwg.mxu0
  %4334 = vmatprep.subr.bf16.mxu0 0
  %4335 = vmatpush1.bf16.msra.mxu0 %v4200
  %4336 = vmatprep.subr.bf16.mxu0 0
  %4337 = vmatpush1.bf16.msra.mxu0 %v4201
  %4338 = vmatprep.subr.bf16.mxu0 0
  %4339 = vmatpush1.bf16.msra.mxu0 %v4202
  %4340 = vmatprep.subr.bf16.mxu0 0
  %4341 = vmatpush1.bf16.msra.mxu0 %v4203
  %4342 = vmatprep.subr.bf16.mxu0 0
  %4343 = vmatpush1.bf16.msra.mxu0 0
  %4344 = vmatprep.subr.bf16.mxu0 0
  %4345 = vmatpush1.bf16.msra.mxu0 0
  %4346 = vmatprep.subr.bf16.mxu0 0
  %4347 = vmatpush1.bf16.msra.mxu0 0
  %4348 = vmatprep.subr.bf16.mxu0 0
  %4349 = vmatpush1.bf16.msra.mxu0 0
  %4350 = vmatprep.subr.bf16.mxu0 0
  %4351 = vmatpush1.bf16.msra.mxu0 0
  %4352 = vmatprep.subr.bf16.mxu0 0
  %4353 = vmatpush1.bf16.msra.mxu0 0
  %4354 = vmatprep.subr.bf16.mxu0 0
  %4355 = vmatpush1.bf16.msra.mxu0 0
  %4356 = vmatprep.subr.bf16.mxu0 0
  %4357 = vmatpush1.bf16.msra.mxu0 0
  %4358 = vmatprep.subr.bf16.mxu0 0
  %4359 = vmatpush1.bf16.msra.mxu0 0
  %4360 = vmatprep.subr.bf16.mxu0 0
  %4361 = vmatpush1.bf16.msra.mxu0 0
  %4362 = vmatprep.subr.bf16.mxu0 0
  %4363 = vmatpush1.bf16.msra.mxu0 0
  %4364 = vmatprep.subr.bf16.mxu0 0
  %4365 = vmatpush1.bf16.msra.mxu0 0
  %4366 = vmatprep.mubr.bf16.mxu0 0
  %4367 = vmatmul.mubr.bf16.gmra.mrb[0].mxu0 %v3500
  %v4368 = vpop.f32.mrb[0].mxu0
  %v4369 = vadd.f32 %v4304, %v4368
  %v4370 = vpop.f32.mrb[0].mxu0
  %v4371 = vpop.f32.mrb[0].mxu0
  %v4372 = vadd.f32 %v4307, %v4371
  %v4373 = vpop.f32.mrb[0].mxu0
  %4374 = vmatprep.mubr.bf16.mxu0 0
  %4375 = vmatmul.mubr.bf16.gmra.mrb[0].mxu0 %v3503
  %v4376 = vpop.f32.mrb[0].mxu0
  %v4377 = vadd.f32 %v4312, %v4376
  %v4378 = vpop.f32.mrb[0].mxu0
  %v4379 = vpop.f32.mrb[0].mxu0
  %v4380 = vadd.f32 %v4315, %v4379
  %v4381 = vpop.f32.mrb[0].mxu0
  %4382 = vmatprep.mubr.bf16.mxu0 0
  %4383 = vmatmul.mubr.bf16.gmra.mrb[0].mxu0 %v3506
  %v4384 = vpop.f32.mrb[0].mxu0
  %v4385 = vadd.f32 %v4320, %v4384
  %v4386 = vpop.f32.mrb[0].mxu0
  %v4387 = vpop.f32.mrb[0].mxu0
  %v4388 = vadd.f32 %v4323, %v4387
  %v4389 = vpop.f32.mrb[0].mxu0
  %4390 = vmatprep.mubr.bf16.mxu0 0
  %4391 = vmatmul.mubr.bf16.gmra.mrb[0].mxu0 %v3509
  %v4392 = vpop.f32.mrb[0].mxu0
  %v4393 = vadd.f32 %v4328, %v4392
  %v4394 = vpop.f32.mrb[0].mxu0
  %v4395 = vpop.f32.mrb[0].mxu0
  %v4396 = vadd.f32 %v4331, %v4395
  %v4397 = vpop.f32.mrb[0].mxu0
  %4398 = vdwg.mxu0
  %v4399 = vld [vmem:[%s4] sm:$0xff]
  %v4400 = vld [vmem:[%s4 + $0x8] sm:$0xff]
  %v4401 = vld [vmem:[%s4 + $0x10] sm:$0xff]
  %v4402 = vld [vmem:[%s4 + $0x18] sm:$0xff]
  %v4403 = vld [vmem:[%s4 + $0x20] sm:$0xff]
  %v4404 = vld [vmem:[%s4 + $0x28] sm:$0xff]
  %v4405 = vld [vmem:[%s4 + $0x30] sm:$0xff]
  %v4406 = vld [vmem:[%s4 + $0x38] sm:$0xff]
  %v4407 = vld [vmem:[%s4 + $0x40] sm:$0xff]
  %v4408 = vld [vmem:[%s4 + $0x48] sm:$0xff]
  %v4409 = vld [vmem:[%s4 + $0x50] sm:$0xff]
  %v4410 = vld [vmem:[%s4 + $0x58] sm:$0xff]
  %v4411 = vld [vmem:[%s4 + $0x60] sm:$0xff]
  %v4412 = vld [vmem:[%s4 + $0x68] sm:$0xff]
  %v4413 = vld [vmem:[%s4 + $0x70] sm:$0xff]
  %v4414 = vld [vmem:[%s4 + $0x78] sm:$0xff]
  %v4415 = vld [vmem:[%s4 + $0x80] sm:$0xff]
  %v4416 = vld [vmem:[%s4 + $0x88] sm:$0xff]
  %v4417 = vld [vmem:[%s4 + $0x90] sm:$0xff]
  %v4418 = vld [vmem:[%s4 + $0x98] sm:$0xff]
  %v4419 = vld [vmem:[%s4 + $0xa0] sm:$0xff]
  %v4420 = vld [vmem:[%s4 + $0xa8] sm:$0xff]
  %v4421 = vld [vmem:[%s4 + $0xb0] sm:$0xff]
  %v4422 = vld [vmem:[%s4 + $0xb8] sm:$0xff]
  %v4423 = vld [vmem:[%s4 + $0xc0] sm:$0xff]
  %v4424 = vld [vmem:[%s4 + $0xc8] sm:$0xff]
  %v4425 = vld [vmem:[%s4 + $0xd0] sm:$0xff]
  %v4426 = vld [vmem:[%s4 + $0xd8] sm:$0xff]
  %v4427 = vld [vmem:[%s4 + $0xe0] sm:$0xff]
  %v4428 = vld [vmem:[%s4 + $0xe8] sm:$0xff]
  %v4429 = vld [vmem:[%s4 + $0xf0] sm:$0xff]
  %v4430 = vld [vmem:[%s4 + $0xf8] sm:$0xff]
  %4432 = vset.pattern.permute.xlu0 0
  %4433 = vperm.xlu0 %4432, %v4399
  %v4434 = vpop.permute.xlu0 %4433
  %4437 = vset.pattern.permute.xlu0 0
  %4438 = vperm.xlu0 %4437, %v4400
  %v4439 = vpop.permute.xlu0 %4438
  %4442 = vset.pattern.permute.xlu0 0
  %4443 = vperm.xlu0 %4442, %v4401
  %v4444 = vpop.permute.xlu0 %4443
  %4447 = vset.pattern.permute.xlu0 0
  %4448 = vperm.xlu0 %4447, %v4402
  %v4449 = vpop.permute.xlu0 %4448
  %4452 = vset.pattern.permute.xlu0 0
  %4453 = vperm.xlu0 %4452, %v4403
  %v4454 = vpop.permute.xlu0 %4453
  %4457 = vset.pattern.permute.xlu0 0
  %4458 = vperm.xlu0 %4457, %v4404
  %v4459 = vpop.permute.xlu0 %4458
  %4462 = vset.pattern.permute.xlu0 0
  %4463 = vperm.xlu0 %4462, %v4405
  %v4464 = vpop.permute.xlu0 %4463
  %4467 = vset.pattern.permute.xlu0 0
  %4468 = vperm.xlu0 %4467, %v4406
  %v4469 = vpop.permute.xlu0 %4468
  %4472 = vset.pattern.permute.xlu0 0
  %4473 = vperm.xlu0 %4472, %v4407
  %v4474 = vpop.permute.xlu0 %4473
  %4477 = vset.pattern.permute.xlu0 0
  %4478 = vperm.xlu0 %4477, %v4408
  %v4479 = vpop.permute.xlu0 %4478
  %4482 = vset.pattern.permute.xlu0 0
  %4483 = vperm.xlu0 %4482, %v4409
  %v4484 = vpop.permute.xlu0 %4483
  %4487 = vset.pattern.permute.xlu0 0
  %4488 = vperm.xlu0 %4487, %v4410
  %v4489 = vpop.permute.xlu0 %4488
  %4492 = vset.pattern.permute.xlu0 0
  %4493 = vperm.xlu0 %4492, %v4411
  %v4494 = vpop.permute.xlu0 %4493
  %4497 = vset.pattern.permute.xlu0 0
  %4498 = vperm.xlu0 %4497, %v4412
  %v4499 = vpop.permute.xlu0 %4498
  %4502 = vset.pattern.permute.xlu0 0
  %4503 = vperm.xlu0 %4502, %v4413
  %v4504 = vpop.permute.xlu0 %4503
  %4507 = vset.pattern.permute.xlu0 0
  %4508 = vperm.xlu0 %4507, %v4414
  %v4509 = vpop.permute.xlu0 %4508
  %4512 = vset.pattern.permute.xlu0 0
  %4513 = vperm.xlu0 %4512, %v4415
  %v4514 = vpop.permute.xlu0 %4513
  %4517 = vset.pattern.permute.xlu0 0
  %4518 = vperm.xlu0 %4517, %v4416
  %v4519 = vpop.permute.xlu0 %4518
  %4522 = vset.pattern.permute.xlu0 0
  %4523 = vperm.xlu0 %4522, %v4417
  %v4524 = vpop.permute.xlu0 %4523
  %4527 = vset.pattern.permute.xlu0 0
  %4528 = vperm.xlu0 %4527, %v4418
  %v4529 = vpop.permute.xlu0 %4528
  %4532 = vset.pattern.permute.xlu0 0
  %4533 = vperm.xlu0 %4532, %v4419
  %v4534 = vpop.permute.xlu0 %4533
  %4537 = vset.pattern.permute.xlu0 0
  %4538 = vperm.xlu0 %4537, %v4420
  %v4539 = vpop.permute.xlu0 %4538
  %4542 = vset.pattern.permute.xlu0 0
  %4543 = vperm.xlu0 %4542, %v4421
  %v4544 = vpop.permute.xlu0 %4543
  %4547 = vset.pattern.permute.xlu0 0
  %4548 = vperm.xlu0 %4547, %v4422
  %v4549 = vpop.permute.xlu0 %4548
  %4552 = vset.pattern.permute.xlu0 0
  %4553 = vperm.xlu0 %4552, %v4423
  %v4554 = vpop.permute.xlu0 %4553
  %4557 = vset.pattern.permute.xlu0 0
  %4558 = vperm.xlu0 %4557, %v4424
  %v4559 = vpop.permute.xlu0 %4558
  %4562 = vset.pattern.permute.xlu0 0
  %4563 = vperm.xlu0 %4562, %v4425
  %v4564 = vpop.permute.xlu0 %4563
  %4567 = vset.pattern.permute.xlu0 0
  %4568 = vperm.xlu0 %4567, %v4426
  %v4569 = vpop.permute.xlu0 %4568
  %4572 = vset.pattern.permute.xlu0 0
  %4573 = vperm.xlu0 %4572, %v4427
  %v4574 = vpop.permute.xlu0 %4573
  %4577 = vset.pattern.permute.xlu0 0
  %4578 = vperm.xlu0 %4577, %v4428
  %v4579 = vpop.permute.xlu0 %4578
  %4582 = vset.pattern.permute.xlu0 0
  %4583 = vperm.xlu0 %4582, %v4429
  %v4584 = vpop.permute.xlu0 %4583
  %4587 = vset.pattern.permute.xlu0 0
  %4588 = vperm.xlu0 %4587, %v4430
  %v4589 = vpop.permute.xlu0 %4588
  %v4591 = vadd.f32 %v3676, %v4434
  %v4592 = vadd.f32 %v3679, %v4439
  %v4593 = vadd.f32 %v3684, %v4444
  %v4594 = vadd.f32 %v3687, %v4449
  %v4595 = vadd.f32 %v3692, %v4454
  %v4596 = vadd.f32 %v3695, %v4459
  %v4597 = vadd.f32 %v3700, %v4464
  %v4598 = vadd.f32 %v3703, %v4469
  %v4599 = vadd.f32 %v3907, %v4474
  %v4600 = vadd.f32 %v3910, %v4479
  %v4601 = vadd.f32 %v3915, %v4484
  %v4602 = vadd.f32 %v3918, %v4489
  %v4603 = vadd.f32 %v3923, %v4494
  %v4604 = vadd.f32 %v3926, %v4499
  %v4605 = vadd.f32 %v3931, %v4504
  %v4606 = vadd.f32 %v3934, %v4509
  %v4607 = vadd.f32 %v4138, %v4514
  %v4608 = vadd.f32 %v4141, %v4519
  %v4609 = vadd.f32 %v4146, %v4524
  %v4610 = vadd.f32 %v4149, %v4529
  %v4611 = vadd.f32 %v4154, %v4534
  %v4612 = vadd.f32 %v4157, %v4539
  %v4613 = vadd.f32 %v4162, %v4544
  %v4614 = vadd.f32 %v4165, %v4549
  %v4615 = vadd.f32 %v4369, %v4554
  %v4616 = vadd.f32 %v4372, %v4559
  %v4617 = vadd.f32 %v4377, %v4564
  %v4618 = vadd.f32 %v4380, %v4569
  %v4619 = vadd.f32 %v4385, %v4574
  %v4620 = vadd.f32 %v4388, %v4579
  %v4621 = vadd.f32 %v4393, %v4584
  %v4622 = vadd.f32 %v4396, %v4589
  %v4623 = vxor.u32 %v4591, 2147483648
  %v4624 = vxor.u32 %v4592, 2147483648
  %v4625 = vxor.u32 %v4593, 2147483648
  %v4626 = vxor.u32 %v4594, 2147483648
  %v4627 = vxor.u32 %v4595, 2147483648
  %v4628 = vxor.u32 %v4596, 2147483648
  %v4629 = vxor.u32 %v4597, 2147483648
  %v4630 = vxor.u32 %v4598, 2147483648
  %v4631 = vxor.u32 %v4599, 2147483648
  %v4632 = vxor.u32 %v4600, 2147483648
  %v4633 = vxor.u32 %v4601, 2147483648
  %v4634 = vxor.u32 %v4602, 2147483648
  %v4635 = vxor.u32 %v4603, 2147483648
  %v4636 = vxor.u32 %v4604, 2147483648
  %v4637 = vxor.u32 %v4605, 2147483648
  %v4638 = vxor.u32 %v4606, 2147483648
  %v4639 = vxor.u32 %v4607, 2147483648
  %v4640 = vxor.u32 %v4608, 2147483648
  %v4641 = vxor.u32 %v4609, 2147483648
  %v4642 = vxor.u32 %v4610, 2147483648
  %v4643 = vxor.u32 %v4611, 2147483648
  %v4644 = vxor.u32 %v4612, 2147483648
  %v4645 = vxor.u32 %v4613, 2147483648
  %v4646 = vxor.u32 %v4614, 2147483648
  %v4647 = vxor.u32 %v4615, 2147483648
  %v4648 = vxor.u32 %v4616, 2147483648
  %v4649 = vxor.u32 %v4617, 2147483648
  %v4650 = vxor.u32 %v4618, 2147483648
  %v4651 = vxor.u32 %v4619, 2147483648
  %v4652 = vxor.u32 %v4620, 2147483648
  %v4653 = vxor.u32 %v4621, 2147483648
  %v4654 = vxor.u32 %v4622, 2147483648
  %v4655 = vmul.f32 %v4623, 1.442695
  %v4656 = vpow.pop %v4655
  %v4657 = vmul.f32 %v4624, 1.442695
  %v4658 = vpow.pop %v4657
  %v4659 = vmul.f32 %v4625, 1.442695
  %v4660 = vpow.pop %v4659
  %v4661 = vmul.f32 %v4626, 1.442695
  %v4662 = vpow.pop %v4661
  %v4663 = vmul.f32 %v4627, 1.442695
  %v4664 = vpow.pop %v4663
  %v4665 = vmul.f32 %v4628, 1.442695
  %v4666 = vpow.pop %v4665
  %v4667 = vmul.f32 %v4629, 1.442695
  %v4668 = vpow.pop %v4667
  %v4669 = vmul.f32 %v4630, 1.442695
  %v4670 = vpow.pop %v4669
  %v4671 = vmul.f32 %v4631, 1.442695
  %v4672 = vpow.pop %v4671
  %v4673 = vmul.f32 %v4632, 1.442695
  %v4674 = vpow.pop %v4673
  %v4675 = vmul.f32 %v4633, 1.442695
  %v4676 = vpow.pop %v4675
  %v4677 = vmul.f32 %v4634, 1.442695
  %v4678 = vpow.pop %v4677
  %v4679 = vmul.f32 %v4635, 1.442695
  %v4680 = vpow.pop %v4679
  %v4681 = vmul.f32 %v4636, 1.442695
  %v4682 = vpow.pop %v4681
  %v4683 = vmul.f32 %v4637, 1.442695
  %v4684 = vpow.pop %v4683
  %v4685 = vmul.f32 %v4638, 1.442695
  %v4686 = vpow.pop %v4685
  %v4687 = vmul.f32 %v4639, 1.442695
  %v4688 = vpow.pop %v4687
  %v4689 = vmul.f32 %v4640, 1.442695
  %v4690 = vpow.pop %v4689
  %v4691 = vmul.f32 %v4641, 1.442695
  %v4692 = vpow.pop %v4691
  %v4693 = vmul.f32 %v4642, 1.442695
  %v4694 = vpow.pop %v4693
  %v4695 = vmul.f32 %v4643, 1.442695
  %v4696 = vpow.pop %v4695
  %v4697 = vmul.f32 %v4644, 1.442695
  %v4698 = vpow.pop %v4697
  %v4699 = vmul.f32 %v4645, 1.442695
  %v4700 = vpow.pop %v4699
  %v4701 = vmul.f32 %v4646, 1.442695
  %v4702 = vpow.pop %v4701
  %v4703 = vmul.f32 %v4647, 1.442695
  %v4704 = vpow.pop %v4703
  %v4705 = vmul.f32 %v4648, 1.442695
  %v4706 = vpow.pop %v4705
  %v4707 = vmul.f32 %v4649, 1.442695
  %v4708 = vpow.pop %v4707
  %v4709 = vmul.f32 %v4650, 1.442695
  %v4710 = vpow.pop %v4709
  %v4711 = vmul.f32 %v4651, 1.442695
  %v4712 = vpow.pop %v4711
  %v4713 = vmul.f32 %v4652, 1.442695
  %v4714 = vpow.pop %v4713
  %v4715 = vmul.f32 %v4653, 1.442695
  %v4716 = vpow.pop %v4715
  %v4717 = vmul.f32 %v4654, 1.442695
  %v4718 = vpow.pop %v4717
  %v4719 = vadd.f32 %v4656, 1.0
  %v4720 = vadd.f32 %v4658, 1.0
  %v4721 = vadd.f32 %v4660, 1.0
  %v4722 = vadd.f32 %v4662, 1.0
  %v4723 = vadd.f32 %v4664, 1.0
  %v4724 = vadd.f32 %v4666, 1.0
  %v4725 = vadd.f32 %v4668, 1.0
  %v4726 = vadd.f32 %v4670, 1.0
  %v4727 = vadd.f32 %v4672, 1.0
  %v4728 = vadd.f32 %v4674, 1.0
  %v4729 = vadd.f32 %v4676, 1.0
  %v4730 = vadd.f32 %v4678, 1.0
  %v4731 = vadd.f32 %v4680, 1.0
  %v4732 = vadd.f32 %v4682, 1.0
  %v4733 = vadd.f32 %v4684, 1.0
  %v4734 = vadd.f32 %v4686, 1.0
  %v4735 = vadd.f32 %v4688, 1.0
  %v4736 = vadd.f32 %v4690, 1.0
  %v4737 = vadd.f32 %v4692, 1.0
  %v4738 = vadd.f32 %v4694, 1.0
  %v4739 = vadd.f32 %v4696, 1.0
  %v4740 = vadd.f32 %v4698, 1.0
  %v4741 = vadd.f32 %v4700, 1.0
  %v4742 = vadd.f32 %v4702, 1.0
  %v4743 = vadd.f32 %v4704, 1.0
  %v4744 = vadd.f32 %v4706, 1.0
  %v4745 = vadd.f32 %v4708, 1.0
  %v4746 = vadd.f32 %v4710, 1.0
  %v4747 = vadd.f32 %v4712, 1.0
  %v4748 = vadd.f32 %v4714, 1.0
  %v4749 = vadd.f32 %v4716, 1.0
  %v4750 = vadd.f32 %v4718, 1.0
  %v4751 = vrcp.pop %v4719
  %v4752 = vmul.f32 1.0, %v4751
  %v4753 = vrcp.pop %v4720
  %v4754 = vmul.f32 1.0, %v4753
  %v4755 = vrcp.pop %v4721
  %v4756 = vmul.f32 1.0, %v4755
  %v4757 = vrcp.pop %v4722
  %v4758 = vmul.f32 1.0, %v4757
  %v4759 = vrcp.pop %v4723
  %v4760 = vmul.f32 1.0, %v4759
  %v4761 = vrcp.pop %v4724
  %v4762 = vmul.f32 1.0, %v4761
  %v4763 = vrcp.pop %v4725
  %v4764 = vmul.f32 1.0, %v4763
  %v4765 = vrcp.pop %v4726
  %v4766 = vmul.f32 1.0, %v4765
  %v4767 = vrcp.pop %v4727
  %v4768 = vmul.f32 1.0, %v4767
  %v4769 = vrcp.pop %v4728
  %v4770 = vmul.f32 1.0, %v4769
  %v4771 = vrcp.pop %v4729
  %v4772 = vmul.f32 1.0, %v4771
  %v4773 = vrcp.pop %v4730
  %v4774 = vmul.f32 1.0, %v4773
  %v4775 = vrcp.pop %v4731
  %v4776 = vmul.f32 1.0, %v4775
  %v4777 = vrcp.pop %v4732
  %v4778 = vmul.f32 1.0, %v4777
  %v4779 = vrcp.pop %v4733
  %v4780 = vmul.f32 1.0, %v4779
  %v4781 = vrcp.pop %v4734
  %v4782 = vmul.f32 1.0, %v4781
  %v4783 = vrcp.pop %v4735
  %v4784 = vmul.f32 1.0, %v4783
  %v4785 = vrcp.pop %v4736
  %v4786 = vmul.f32 1.0, %v4785
  %v4787 = vrcp.pop %v4737
  %v4788 = vmul.f32 1.0, %v4787
  %v4789 = vrcp.pop %v4738
  %v4790 = vmul.f32 1.0, %v4789
  %v4791 = vrcp.pop %v4739
  %v4792 = vmul.f32 1.0, %v4791
  %v4793 = vrcp.pop %v4740
  %v4794 = vmul.f32 1.0, %v4793
  %v4795 = vrcp.pop %v4741
  %v4796 = vmul.f32 1.0, %v4795
  %v4797 = vrcp.pop %v4742
  %v4798 = vmul.f32 1.0, %v4797
  %v4799 = vrcp.pop %v4743
  %v4800 = vmul.f32 1.0, %v4799
  %v4801 = vrcp.pop %v4744
  %v4802 = vmul.f32 1.0, %v4801
  %v4803 = vrcp.pop %v4745
  %v4804 = vmul.f32 1.0, %v4803
  %v4805 = vrcp.pop %v4746
  %v4806 = vmul.f32 1.0, %v4805
  %v4807 = vrcp.pop %v4747
  %v4808 = vmul.f32 1.0, %v4807
  %v4809 = vrcp.pop %v4748
  %v4810 = vmul.f32 1.0, %v4809
  %v4811 = vrcp.pop %v4749
  %v4812 = vmul.f32 1.0, %v4811
  %v4813 = vrcp.pop %v4750
  %v4814 = vmul.f32 1.0, %v4813
  %v4815 = vld [vmem:[%s5] sm:$0xff]
  %v4816 = vld [vmem:[%s5 + $0x8] sm:$0xff]
  %v4817 = vpack.c.bf16 %v4754, %v4752
  %v4818 = vpack.c.bf16 %v4758, %v4756
  %v4819 = vpack.c.bf16 %v4762, %v4760
  %v4820 = vpack.c.bf16 %v4766, %v4764
  %v4821 = vpack.c.bf16 %v4770, %v4768
  %v4822 = vpack.c.bf16 %v4774, %v4772
  %v4823 = vpack.c.bf16 %v4778, %v4776
  %v4824 = vpack.c.bf16 %v4782, %v4780
  %v4825 = vpack.c.bf16 %v4786, %v4784
  %v4826 = vpack.c.bf16 %v4790, %v4788
  %v4827 = vpack.c.bf16 %v4794, %v4792
  %v4828 = vpack.c.bf16 %v4798, %v4796
  %v4829 = vpack.c.bf16 %v4802, %v4800
  %v4830 = vpack.c.bf16 %v4806, %v4804
  %v4831 = vpack.c.bf16 %v4810, %v4808
  %v4832 = vpack.c.bf16 %v4814, %v4812
  %v4833 = vld [vmem:[%s6] sm:$0xff]
  %v4834 = vld [vmem:[%s6 + $0x8] sm:$0xff]
  %4836 = vset.pattern.permute.xlu0 0
  %4837 = vperm.xlu0 %4836, %v4833
  %v4838 = vpop.permute.xlu0 %4837
  %4841 = vset.pattern.permute.xlu0 0
  %4842 = vperm.xlu0 %4841, %v4834
  %v4843 = vpop.permute.xlu0 %4842
  %v4847 = vunpack.c.l.b16 %v4815
  %v4848 = vunpack.c.h.b16 %v4815
  %v4849 = vunpack.c.l.b16 %v4816
  %v4850 = vunpack.c.h.b16 %v4816
  %v4851 = vpack.c.b16 %v4849, %v4847
  %v4852 = vpack.c.b16 %v4850, %v4848
  %4855 = vmatprep.subr.bf16.mxu0 0
  %4856 = vmatpush1.bf16.msra.mxu0 %v4817
  %4857 = vmatprep.subr.bf16.mxu0 0
  %4858 = vmatpush1.bf16.msra.mxu0 %v4818
  %4859 = vmatprep.subr.bf16.mxu0 0
  %4860 = vmatpush1.bf16.msra.mxu0 %v4819
  %4861 = vmatprep.subr.bf16.mxu0 0
  %4862 = vmatpush1.bf16.msra.mxu0 %v4820
  %4863 = vmatprep.subr.bf16.mxu0 0
  %4864 = vmatpush1.bf16.msra.mxu0 %v4821
  %4865 = vmatprep.subr.bf16.mxu0 0
  %4866 = vmatpush1.bf16.msra.mxu0 %v4822
  %4867 = vmatprep.subr.bf16.mxu0 0
  %4868 = vmatpush1.bf16.msra.mxu0 %v4823
  %4869 = vmatprep.subr.bf16.mxu0 0
  %4870 = vmatpush1.bf16.msra.mxu0 %v4824
  %4871 = vmatprep.subr.bf16.mxu0 0
  %4872 = vmatpush1.bf16.msra.mxu0 %v4825
  %4873 = vmatprep.subr.bf16.mxu0 0
  %4874 = vmatpush1.bf16.msra.mxu0 %v4826
  %4875 = vmatprep.subr.bf16.mxu0 0
  %4876 = vmatpush1.bf16.msra.mxu0 %v4827
  %4877 = vmatprep.subr.bf16.mxu0 0
  %4878 = vmatpush1.bf16.msra.mxu0 %v4828
  %4879 = vmatprep.subr.bf16.mxu0 0
  %4880 = vmatpush1.bf16.msra.mxu0 %v4829
  %4881 = vmatprep.subr.bf16.mxu0 0
  %4882 = vmatpush1.bf16.msra.mxu0 %v4830
  %4883 = vmatprep.subr.bf16.mxu0 0
  %4884 = vmatpush1.bf16.msra.mxu0 %v4831
  %4885 = vmatprep.subr.bf16.mxu0 0
  %4886 = vmatpush1.bf16.msra.mxu0 %v4832
  %4887 = vmatprep.mubr.bf16.mxu0 %v4852
  %4888 = vmatmul.mubr.bf16.gmra.mrb[0].mxu0 %v4851
  %v4889 = vpop.f32.mrb[0].mxu0
  %v4890 = vadd.f32 %v4838, %v4889
  %v4891 = vpop.f32.mrb[0].mxu0
  %v4892 = vpop.f32.mrb[0].mxu0
  %v4893 = vadd.f32 %v4843, %v4892
  %v4894 = vpop.f32.mrb[0].mxu0
  %4895 = vdwg.mxu0
  %4896 = vst.msk [vmem:[%s7] sm:$0xff] %vm439, %v4890
  %4897 = vst.msk [vmem:[%s7 + $0x8] sm:$0xff] %vm439, %v4893
  // Predicated region
  $region30: #{lenet_forward.1} parent=0 // pred_check
    _
  $region31: #{lenet_forward.1} parent=0 // pred_check_branch
    %4899 = sbr.rel (0) target = $region33
  $region32: #{lenet_forward.1} parent=0 // pred_region
    _
  $region33: #{lenet_forward.1} parent=0 // pred_fallthru
    _
  // Predicated region
  $region34: #{lenet_forward.1} parent=0 // pred_check
    _
  $region35: #{lenet_forward.1} parent=0 // pred_check_branch
    %4901 = sbr.rel (0) target = $region37
  $region36: #{lenet_forward.1} parent=0 // pred_region
    _
  $region37: #{lenet_forward.1} parent=0 // pred_fallthru
    _

</llo_original>
